<compile_context>
chip_gen: v5e
topology: v5e:2x2
jax: 0.10.0
libtpu: 0.0.40
codegen_flags: <defaults>
</compile_context>

<pallas_src>
import functools

import jax
import jax.numpy as jnp
from jax.experimental import pallas as pl
from jax.experimental.pallas import tpu as pltpu


_MIB = 1024 * 1024


def _round_up(v, m):
    return (v + m - 1) // m * m


def _vmem_capacity_bytes():
    """Per-core VMEM capacity; conservative fallback if the query fails."""
    try:
        info = pltpu.get_tpu_info()
        for attr in ("vmem_capacity_bytes", "vmem_size_bytes", "vmem_bytes"):
            cap = getattr(info, attr, None)
            if cap:
                return int(cap)
    except Exception:
        pass
    return 64 * _MIB  # v7x per-core size -- smallest current generation


def _block_footprint_bytes(sublanes, lanes, dtype):
    """VMEM footprint of a (sublanes, lanes) tile after sublane/lane padding."""
    itemsize = jnp.dtype(dtype).itemsize
    sub = 8 * max(1, 4 // itemsize)  # packed sublane granularity for <32-bit
    return (_round_up(max(int(sublanes), 1), sub)
            * _round_up(max(int(lanes), 1), 128) * itemsize)


def _pick_channel_tile(c, hw, dtype, budget_bytes):
    """Largest channel tile whose lane-dense (tc, H*W) block fits the budget.

    Returns (tc, tail_mask).  Prefers tc == C (single reduction step) or an
    8-aligned divisor of C; otherwise uses the full 8-aligned budget and masks
    the partial tail block inside the kernel (no tc=1 cliff for awkward C).
    """
    per_channel = _round_up(hw, 128) * jnp.dtype(dtype).itemsize
    max_tc = max(1, int(budget_bytes // per_channel))
    if max_tc >= c:
        return c, False                       # whole channel axis, one step
    tc_cap = max(8, (max_tc // 8) * 8)        # keep sublane dim 8-aligned
    if tc_cap >= c:
        return c, False
    divisors = [t for t in range(8, tc_cap + 1, 8) if c % t == 0]
    if divisors and 2 * divisors[-1] >= tc_cap:
        return divisors[-1], False            # even split, no tail mask needed
    return tc_cap, (c % tc_cap != 0)


def _spatial_attention_kernel(x_ref, w_ref, o_ref, sum_ref, max_ref, feat_ref,
                              *, c_total, tc, k, pad, h, w, tail_mask):
    # x_ref:    (1, tc, H*W)         lane-dense channel block of the input
    # w_ref:    (2*k*k,)  SMEM       conv weights: [avg taps..., max taps...]
    # o_ref:    (1, 1, H, W)         sigmoid(conv) output (written on last step)
    # sum_ref:  (1, H*W)   f32       running channel sum (lane-dense)
    # max_ref:  (1, H*W)   f32       running channel max (lane-dense)
    # feat_ref: (2, H+2p, W+2p) f32  zero-padded [sum, max] conv input
    ci = pl.program_id(1)
    nc = pl.num_programs(1)

    x = x_ref[0]                               # (tc, H*W), input dtype
    if tail_mask:
        valid = c_total - ci * tc              # valid channels in this block
        ch_idx = jax.lax.broadcasted_iota(jnp.int32, (tc, 1), 0)
        keep = ch_idx < valid
        x_sum = jnp.where(keep, x, jnp.zeros_like(x))
        x_max = jnp.where(keep, x, jnp.full_like(x, -jnp.inf))
    else:
        x_sum = x
        x_max = x

    # Sum accumulates in f32; max reduces in the input dtype (bf16 VALU on
    # v6e/v7x) and only the (1, H*W) partial result is widened.
    part_sum = jnp.sum(x_sum, axis=0, keepdims=True, dtype=jnp.float32)
    part_max = jnp.max(x_max, axis=0, keepdims=True).astype(jnp.float32)

    @pl.when(ci == 0)
    def _init():
        sum_ref[...] = part_sum
        max_ref[...] = part_max

    @pl.when(ci > 0)
    def _accumulate():
        sum_ref[...] += part_sum
        max_ref[...] = jnp.maximum(max_ref[...], part_max)

    @pl.when(ci == nc - 1)
    def _finalize():
        hp = h + 2 * pad
        wp = w + 2 * pad

        # Zero only the pad border strips; the interior is fully overwritten
        # below, so no full-buffer memset is needed.
        if pad > 0:
            row_zeros = jnp.zeros((pad, wp), jnp.float32)
            col_zeros = jnp.zeros((hp, pad), jnp.float32)
            for chn in range(2):
                feat_ref[chn, pl.ds(0, pad), :] = row_zeros
                feat_ref[chn, pl.ds(pad + h, pad), :] = row_zeros
                feat_ref[chn, :, pl.ds(0, pad)] = col_zeros
                feat_ref[chn, :, pl.ds(pad + w, pad)] = col_zeros

        # Un-flatten the lane-dense (1, H*W) maps row by row into the padded
        # 2-D conv input (static slices only; avoids an in-kernel relayout
        # reshape that Mosaic may not lower).  Finalize-only cost.
        for r in range(h):
            feat_ref[0, pl.ds(pad + r, 1), pl.ds(pad, w)] = (
                sum_ref[:, pl.ds(r * w, w)])
            feat_ref[1, pl.ds(pad + r, 1), pl.ds(pad, w)] = (
                max_ref[:, pl.ds(r * w, w)])

        inv_c = 1.0 / c_total                  # fold mean (= sum / C) into taps
        acc0 = jnp.zeros((h, w), jnp.float32)  # two independent FMA chains to
        acc1 = jnp.zeros((h, w), jnp.float32)  # keep the VALU pipes fed
        for t in range(k * k):                 # fully unrolled k*k taps
            dy, dx = divmod(t, k)
            w_avg = w_ref[t] * inv_c
            w_max = w_ref[k * k + t]
            a = feat_ref[0, pl.ds(dy, h), pl.ds(dx, w)]
            m = feat_ref[1, pl.ds(dy, h), pl.ds(dx, w)]
            contrib = a * w_avg + m * w_max
            if t % 2 == 0:
                acc0 = acc0 + contrib
            else:
                acc1 = acc1 + contrib
        o_ref[0, 0] = jax.nn.sigmoid(acc0 + acc1)


def spatial_attention(x, weight):
    """Pallas forward pass of SpatialAttention.

    x:      (B, C, H, W) float array
    weight: (1, 2, k, k) conv weight, k in (3, 7), no bias
    returns (B, 1, H, W) float32 attention map (sigmoid output)
    """
    b, c, h, w = x.shape
    assert weight.shape[:2] == (1, 2), "conv weight must have shape (1, 2, k, k)"
    k = int(weight.shape[2])
    assert weight.shape[3] == k and k in (3, 7), "kernel size must be 3 or 7"
    pad = (k - 1) // 2
    hw = h * w

    w_flat = weight.reshape(-1).astype(jnp.float32)   # (2*k*k,) -> SMEM
    x3 = x.reshape(b, c, hw)                          # free metadata reshape

    # Generation-aware channel-block budget: ~1/8 of per-core VMEM, capped at
    # 16 MiB (=> ~16 MiB on v5e/v6e, ~8 MiB on v7x), never below 2 MiB.
    vmem_cap = _vmem_capacity_bytes()
    budget = int(min(16 * _MIB, max(2 * _MIB, vmem_cap // 8)))
    tc, tail_mask = _pick_channel_tile(c, hw, x.dtype, budget)
    n_c = pl.cdiv(c, tc)

    # Explicit VMEM limit: double-buffered input/output blocks + f32 scratch,
    # padded to the physical (sublane, lane) layout, plus headroom.
    in_block = _block_footprint_bytes(tc, hw, x.dtype)
    out_block = _block_footprint_bytes(h, w, jnp.float32)
    scratch_bytes = (2 * _block_footprint_bytes(1, hw, jnp.float32)
                     + 2 * _block_footprint_bytes(h + 2 * pad, w + 2 * pad,
                                                  jnp.float32))
    vmem_limit = 2 * in_block + 2 * out_block + scratch_bytes + 4 * _MIB
    vmem_limit = int(min(max(vmem_limit, 32 * _MIB), vmem_cap))

    kernel = functools.partial(
        _spatial_attention_kernel,
        c_total=int(c), tc=int(tc), k=k, pad=pad, h=h, w=w,
        tail_mask=bool(tail_mask))

    # TODO(synk): on v7x with B == 1 the channel reduction could be split
    # across the two TensorCores (per-core partial sum/max + tiny combine) so
    # both cores stream HBM; with B >= 2 the "parallel" batch axis shards.
    return pl.pallas_call(
        kernel,
        out_shape=jax.ShapeDtypeStruct((b, 1, h, w), jnp.float32),
        grid=(b, n_c),
        in_specs=[
            pl.BlockSpec((1, tc, hw), lambda bi, ci: (bi, ci, 0)),
            pl.BlockSpec(memory_space=pltpu.MemorySpace.SMEM),
        ],
        out_specs=pl.BlockSpec((1, 1, h, w), lambda bi, ci: (bi, 0, 0, 0)),
        scratch_shapes=[
            pltpu.VMEM((1, hw), jnp.float32),                        # channel sum
            pltpu.VMEM((1, hw), jnp.float32),                        # channel max
            pltpu.VMEM((2, h + 2 * pad, w + 2 * pad), jnp.float32),  # padded feat
        ],
        compiler_params=pltpu.CompilerParams(
            dimension_semantics=("parallel", "arbitrary"),
            vmem_limit_bytes=vmem_limit),
    )(x3, w_flat)


if __name__ == "__main__":
    key = jax.random.PRNGKey(0)
    kx, kw = jax.random.split(key)

    B, C, H, W = 2, 4, 16, 16
    ksize = 7
    x = jax.random.normal(kx, (B, C, H, W), dtype=jnp.float32)
    weight = jax.random.normal(kw, (1, 2, ksize, ksize), dtype=jnp.float32)
    weight = weight / jnp.sqrt(2.0 * ksize * ksize)

    out = spatial_attention(x, weight)
    out = jax.block_until_ready(out)

    # pure-JAX reference of the torch module
    avg = jnp.mean(x, axis=1, keepdims=True)
    mx = jnp.max(x, axis=1, keepdims=True)
    feat = jnp.concatenate([avg, mx], axis=1)
    conv = jax.lax.conv_general_dilated(
        feat, weight, window_strides=(1, 1),
        padding=((ksize // 2, ksize // 2), (ksize // 2, ksize // 2)),
        dimension_numbers=("NCHW", "OIHW", "NCHW"),
        precision=jax.lax.Precision.HIGHEST)
    ref = jax.nn.sigmoid(conv)

    assert out.shape == (B, 1, H, W) and out.dtype == jnp.float32
    assert not bool(jnp.any(jnp.isnan(out)))
    assert bool(jnp.allclose(out, ref, atol=1e-4, rtol=1e-4))
    print("KERNEL_OK")
</pallas_src>

<mosaic_0001>
module attributes {stable_mosaic.version = 11 : i64} {
  func.func @_spatial_attention_kernel(%arg0: i32, %arg1: i32, %arg2: memref<1x4x256xf32, #tpu.memory_space<vmem>>, %arg3: memref<98xf32, #tpu.memory_space<smem>>, %arg4: memref<1x1x16x16xf32, #tpu.memory_space<vmem>>, %arg5: memref<1x256xf32, #tpu.memory_space<vmem>>, %arg6: memref<1x256xf32, #tpu.memory_space<vmem>>, %arg7: memref<2x22x22xf32, #tpu.memory_space<vmem>>) attributes {dimension_semantics = [#tpu.dimension_semantics<parallel>, #tpu.dimension_semantics<arbitrary>], iteration_bounds = array<i64: 2, 1>, scalar_prefetch = 0 : i64, scratch_operands = 3 : i64, tpu.core_type = #tpu.core_type<tc>, window_params = [{transform_indices = @transform_0, window_bounds = array<i64: 1, 4, 256>}, {transform_indices = @transform_1, window_bounds = array<i64: 98>}, {transform_indices = @transform_2, window_bounds = array<i64: 1, 1, 16, 16>}]} {
    %c0 = arith.constant 0 : index
    %c0_0 = arith.constant 0 : index
    %c0_1 = arith.constant 0 : index
    %0 = vector.load %arg2[%c0, %c0_0, %c0_1] : memref<1x4x256xf32, #tpu.memory_space<vmem>>, vector<1x4x256xf32>
    %1 = vector.shape_cast %0 : vector<1x4x256xf32> to vector<4x256xf32>
    %cst = arith.constant dense<0.000000e+00> : vector<256xf32>
    %2 = vector.multi_reduction <add>, %1, %cst [0] : vector<4x256xf32> to vector<256xf32>
    %3 = vector.shape_cast %2 : vector<256xf32> to vector<1x256xf32>
    %cst_2 = arith.constant dense<0xFF800000> : vector<256xf32>
    %4 = vector.multi_reduction <maximumf>, %1, %cst_2 [0] : vector<4x256xf32> to vector<256xf32>
    %5 = vector.shape_cast %4 : vector<256xf32> to vector<1x256xf32>
    %c0_i32 = arith.constant 0 : i32
    %6 = arith.cmpi eq, %arg1, %c0_i32 : i32
    %7 = arith.extui %6 : i1 to i32
    %c0_i32_3 = arith.constant 0 : i32
    %8 = arith.cmpi ne, %7, %c0_i32_3 : i32
    scf.if %8 {
      %c0_8 = arith.constant 0 : index
      %c0_9 = arith.constant 0 : index
      %15 = vector.load %arg5[%c0_8, %c0_9] : memref<1x256xf32, #tpu.memory_space<vmem>>, vector<1x256xf32>
      tpu.vector_store %arg5[%c0_8, %c0_9], %3 {strides = array<i32>} : memref<1x256xf32, #tpu.memory_space<vmem>>, vector<1x256xf32>,
      %c0_10 = arith.constant 0 : index
      %c0_11 = arith.constant 0 : index
      %16 = vector.load %arg6[%c0_10, %c0_11] : memref<1x256xf32, #tpu.memory_space<vmem>>, vector<1x256xf32>
      tpu.vector_store %arg6[%c0_10, %c0_11], %5 {strides = array<i32>} : memref<1x256xf32, #tpu.memory_space<vmem>>, vector<1x256xf32>,
    } else {
    }
    %c0_i32_4 = arith.constant 0 : i32
    %9 = arith.cmpi sgt, %arg1, %c0_i32_4 : i32
    %10 = arith.extui %9 : i1 to i32
    %c0_i32_5 = arith.constant 0 : i32
    %11 = arith.cmpi ne, %10, %c0_i32_5 : i32
    scf.if %11 {
      %c0_8 = arith.constant 0 : index
      %c0_9 = arith.constant 0 : index
      %15 = vector.load %arg5[%c0_8, %c0_9] : memref<1x256xf32, #tpu.memory_space<vmem>>, vector<1x256xf32>
      %16 = arith.addf %15, %3 : vector<1x256xf32>
      %c0_10 = arith.constant 0 : index
      %c0_11 = arith.constant 0 : index
      %17 = vector.load %arg5[%c0_10, %c0_11] : memref<1x256xf32, #tpu.memory_space<vmem>>, vector<1x256xf32>
      tpu.vector_store %arg5[%c0_10, %c0_11], %16 {strides = array<i32>} : memref<1x256xf32, #tpu.memory_space<vmem>>, vector<1x256xf32>,
      %c0_12 = arith.constant 0 : index
      %c0_13 = arith.constant 0 : index
      %18 = vector.load %arg6[%c0_12, %c0_13] : memref<1x256xf32, #tpu.memory_space<vmem>>, vector<1x256xf32>
      %19 = arith.maximumf %18, %5 : vector<1x256xf32>
      %c0_14 = arith.constant 0 : index
      %c0_15 = arith.constant 0 : index
      %20 = vector.load %arg6[%c0_14, %c0_15] : memref<1x256xf32, #tpu.memory_space<vmem>>, vector<1x256xf32>
      tpu.vector_store %arg6[%c0_14, %c0_15], %19 {strides = array<i32>} : memref<1x256xf32, #tpu.memory_space<vmem>>, vector<1x256xf32>,
    } else {
    }
    %c0_i32_6 = arith.constant 0 : i32
    %12 = arith.cmpi eq, %arg1, %c0_i32_6 : i32
    %13 = arith.extui %12 : i1 to i32
    %c0_i32_7 = arith.constant 0 : i32
    %14 = arith.cmpi ne, %13, %c0_i32_7 : i32
    scf.if %14 {
      %cst_8 = arith.constant 0.000000e+00 : f32
      %15 = vector.broadcast %cst_8 : f32 to vector<3x22xf32>
      %cst_9 = arith.constant 0.000000e+00 : f32
      %16 = vector.broadcast %cst_9 : f32 to vector<22x3xf32>
      %c0_10 = arith.constant 0 : index
      %c0_11 = arith.constant 0 : index
      %c0_12 = arith.constant 0 : index
      %17 = vector.load %arg7[%c0_10, %c0_11, %c0_12] : memref<2x22x22xf32, #tpu.memory_space<vmem>>, vector<1x3x22xf32>
      %18 = vector.shape_cast %17 : vector<1x3x22xf32> to vector<3x22xf32>
      %19 = vector.shape_cast %15 : vector<3x22xf32> to vector<1x3x22xf32>
      tpu.vector_store %arg7[%c0_10, %c0_11, %c0_12], %19 {strides = array<i32>} : memref<2x22x22xf32, #tpu.memory_space<vmem>>, vector<1x3x22xf32>,
      %c0_13 = arith.constant 0 : index
      %c19 = arith.constant 19 : index
      %c0_14 = arith.constant 0 : index
      %20 = vector.load %arg7[%c0_13, %c19, %c0_14] : memref<2x22x22xf32, #tpu.memory_space<vmem>>, vector<1x3x22xf32>
      %21 = vector.shape_cast %20 : vector<1x3x22xf32> to vector<3x22xf32>
      %22 = vector.shape_cast %15 : vector<3x22xf32> to vector<1x3x22xf32>
      tpu.vector_store %arg7[%c0_13, %c19, %c0_14], %22 {strides = array<i32>} : memref<2x22x22xf32, #tpu.memory_space<vmem>>, vector<1x3x22xf32>,
      %c0_15 = arith.constant 0 : index
      %c0_16 = arith.constant 0 : index
      %c0_17 = arith.constant 0 : index
      %23 = vector.load %arg7[%c0_15, %c0_16, %c0_17] : memref<2x22x22xf32, #tpu.memory_space<vmem>>, vector<1x22x3xf32>
      %24 = vector.shape_cast %23 : vector<1x22x3xf32> to vector<22x3xf32>
      %25 = vector.shape_cast %16 : vector<22x3xf32> to vector<1x22x3xf32>
      tpu.vector_store %arg7[%c0_15, %c0_16, %c0_17], %25 {strides = array<i32>} : memref<2x22x22xf32, #tpu.memory_space<vmem>>, vector<1x22x3xf32>,
      %c0_18 = arith.constant 0 : index
      %c0_19 = arith.constant 0 : index
      %c19_20 = arith.constant 19 : index
      %26 = vector.load %arg7[%c0_18, %c0_19, %c19_20] : memref<2x22x22xf32, #tpu.memory_space<vmem>>, vector<1x22x3xf32>
      %27 = vector.shape_cast %26 : vector<1x22x3xf32> to vector<22x3xf32>
      %28 = vector.shape_cast %16 : vector<22x3xf32> to vector<1x22x3xf32>
      tpu.vector_store %arg7[%c0_18, %c0_19, %c19_20], %28 {strides = array<i32>} : memref<2x22x22xf32, #tpu.memory_space<vmem>>, vector<1x22x3xf32>,
      %c1 = arith.constant 1 : index
      %c0_21 = arith.constant 0 : index
      %c0_22 = arith.constant 0 : index
      %29 = vector.load %arg7[%c1, %c0_21, %c0_22] : memref<2x22x22xf32, #tpu.memory_space<vmem>>, vector<1x3x22xf32>
      %30 = vector.shape_cast %29 : vector<1x3x22xf32> to vector<3x22xf32>
      %31 = vector.shape_cast %15 : vector<3x22xf32> to vector<1x3x22xf32>
      tpu.vector_store %arg7[%c1, %c0_21, %c0_22], %31 {strides = array<i32>} : memref<2x22x22xf32, #tpu.memory_space<vmem>>, vector<1x3x22xf32>,
      %c1_23 = arith.constant 1 : index
      %c19_24 = arith.constant 19 : index
      %c0_25 = arith.constant 0 : index
      %32 = vector.load %arg7[%c1_23, %c19_24, %c0_25] : memref<2x22x22xf32, #tpu.memory_space<vmem>>, vector<1x3x22xf32>
      %33 = vector.shape_cast %32 : vector<1x3x22xf32> to vector<3x22xf32>
      %34 = vector.shape_cast %15 : vector<3x22xf32> to vector<1x3x22xf32>
      tpu.vector_store %arg7[%c1_23, %c19_24, %c0_25], %34 {strides = array<i32>} : memref<2x22x22xf32, #tpu.memory_space<vmem>>, vector<1x3x22xf32>,
      %c1_26 = arith.constant 1 : index
      %c0_27 = arith.constant 0 : index
      %c0_28 = arith.constant 0 : index
      %35 = vector.load %arg7[%c1_26, %c0_27, %c0_28] : memref<2x22x22xf32, #tpu.memory_space<vmem>>, vector<1x22x3xf32>
      %36 = vector.shape_cast %35 : vector<1x22x3xf32> to vector<22x3xf32>
      %37 = vector.shape_cast %16 : vector<22x3xf32> to vector<1x22x3xf32>
      tpu.vector_store %arg7[%c1_26, %c0_27, %c0_28], %37 {strides = array<i32>} : memref<2x22x22xf32, #tpu.memory_space<vmem>>, vector<1x22x3xf32>,
      %c1_29 = arith.constant 1 : index
      %c0_30 = arith.constant 0 : index
      %c19_31 = arith.constant 19 : index
      %38 = vector.load %arg7[%c1_29, %c0_30, %c19_31] : memref<2x22x22xf32, #tpu.memory_space<vmem>>, vector<1x22x3xf32>
      %39 = vector.shape_cast %38 : vector<1x22x3xf32> to vector<22x3xf32>
      %40 = vector.shape_cast %16 : vector<22x3xf32> to vector<1x22x3xf32>
      tpu.vector_store %arg7[%c1_29, %c0_30, %c19_31], %40 {strides = array<i32>} : memref<2x22x22xf32, #tpu.memory_space<vmem>>, vector<1x22x3xf32>,
      %c0_32 = arith.constant 0 : index
      %c0_33 = arith.constant 0 : index
      %41 = vector.load %arg5[%c0_32, %c0_33] : memref<1x256xf32, #tpu.memory_space<vmem>>, vector<1x16xf32>
      %c0_34 = arith.constant 0 : index
      %c3 = arith.constant 3 : index
      %c3_35 = arith.constant 3 : index
      %42 = vector.load %arg7[%c0_34, %c3, %c3_35] : memref<2x22x22xf32, #tpu.memory_space<vmem>>, vector<1x1x16xf32>
      %43 = vector.shape_cast %42 : vector<1x1x16xf32> to vector<1x16xf32>
      %44 = vector.shape_cast %41 : vector<1x16xf32> to vector<1x1x16xf32>
      tpu.vector_store %arg7[%c0_34, %c3, %c3_35], %44 {strides = array<i32>} : memref<2x22x22xf32, #tpu.memory_space<vmem>>, vector<1x1x16xf32>,
      %c0_36 = arith.constant 0 : index
      %c0_37 = arith.constant 0 : index
      %45 = vector.load %arg6[%c0_36, %c0_37] : memref<1x256xf32, #tpu.memory_space<vmem>>, vector<1x16xf32>
      %c1_38 = arith.constant 1 : index
      %c3_39 = arith.constant 3 : index
      %c3_40 = arith.constant 3 : index
      %46 = vector.load %arg7[%c1_38, %c3_39, %c3_40] : memref<2x22x22xf32, #tpu.memory_space<vmem>>, vector<1x1x16xf32>
      %47 = vector.shape_cast %46 : vector<1x1x16xf32> to vector<1x16xf32>
      %48 = vector.shape_cast %45 : vector<1x16xf32> to vector<1x1x16xf32>
      tpu.vector_store %arg7[%c1_38, %c3_39, %c3_40], %48 {strides = array<i32>} : memref<2x22x22xf32, #tpu.memory_space<vmem>>, vector<1x1x16xf32>,
      %c0_41 = arith.constant 0 : index
      %c16 = arith.constant 16 : index
      %49 = vector.load %arg5[%c0_41, %c16] : memref<1x256xf32, #tpu.memory_space<vmem>>, vector<1x16xf32>
      %c0_42 = arith.constant 0 : index
      %c4 = arith.constant 4 : index
      %c3_43 = arith.constant 3 : index
      %50 = vector.load %arg7[%c0_42, %c4, %c3_43] : memref<2x22x22xf32, #tpu.memory_space<vmem>>, vector<1x1x16xf32>
      %51 = vector.shape_cast %50 : vector<1x1x16xf32> to vector<1x16xf32>
      %52 = vector.shape_cast %49 : vector<1x16xf32> to vector<1x1x16xf32>
      tpu.vector_store %arg7[%c0_42, %c4, %c3_43], %52 {strides = array<i32>} : memref<2x22x22xf32, #tpu.memory_space<vmem>>, vector<1x1x16xf32>,
      %c0_44 = arith.constant 0 : index
      %c16_45 = arith.constant 16 : index
      %53 = vector.load %arg6[%c0_44, %c16_45] : memref<1x256xf32, #tpu.memory_space<vmem>>, vector<1x16xf32>
      %c1_46 = arith.constant 1 : index
      %c4_47 = arith.constant 4 : index
      %c3_48 = arith.constant 3 : index
      %54 = vector.load %arg7[%c1_46, %c4_47, %c3_48] : memref<2x22x22xf32, #tpu.memory_space<vmem>>, vector<1x1x16xf32>
      %55 = vector.shape_cast %54 : vector<1x1x16xf32> to vector<1x16xf32>
      %56 = vector.shape_cast %53 : vector<1x16xf32> to vector<1x1x16xf32>
      tpu.vector_store %arg7[%c1_46, %c4_47, %c3_48], %56 {strides = array<i32>} : memref<2x22x22xf32, #tpu.memory_space<vmem>>, vector<1x1x16xf32>,
      %c0_49 = arith.constant 0 : index
      %c32 = arith.constant 32 : index
      %57 = vector.load %arg5[%c0_49, %c32] : memref<1x256xf32, #tpu.memory_space<vmem>>, vector<1x16xf32>
      %c0_50 = arith.constant 0 : index
      %c5 = arith.constant 5 : index
      %c3_51 = arith.constant 3 : index
      %58 = vector.load %arg7[%c0_50, %c5, %c3_51] : memref<2x22x22xf32, #tpu.memory_space<vmem>>, vector<1x1x16xf32>
      %59 = vector.shape_cast %58 : vector<1x1x16xf32> to vector<1x16xf32>
      %60 = vector.shape_cast %57 : vector<1x16xf32> to vector<1x1x16xf32>
      tpu.vector_store %arg7[%c0_50, %c5, %c3_51], %60 {strides = array<i32>} : memref<2x22x22xf32, #tpu.memory_space<vmem>>, vector<1x1x16xf32>,
      %c0_52 = arith.constant 0 : index
      %c32_53 = arith.constant 32 : index
      %61 = vector.load %arg6[%c0_52, %c32_53] : memref<1x256xf32, #tpu.memory_space<vmem>>, vector<1x16xf32>
      %c1_54 = arith.constant 1 : index
      %c5_55 = arith.constant 5 : index
      %c3_56 = arith.constant 3 : index
      %62 = vector.load %arg7[%c1_54, %c5_55, %c3_56] : memref<2x22x22xf32, #tpu.memory_space<vmem>>, vector<1x1x16xf32>
      %63 = vector.shape_cast %62 : vector<1x1x16xf32> to vector<1x16xf32>
      %64 = vector.shape_cast %61 : vector<1x16xf32> to vector<1x1x16xf32>
      tpu.vector_store %arg7[%c1_54, %c5_55, %c3_56], %64 {strides = array<i32>} : memref<2x22x22xf32, #tpu.memory_space<vmem>>, vector<1x1x16xf32>,
      %c0_57 = arith.constant 0 : index
      %c48 = arith.constant 48 : index
      %65 = vector.load %arg5[%c0_57, %c48] : memref<1x256xf32, #tpu.memory_space<vmem>>, vector<1x16xf32>
      %c0_58 = arith.constant 0 : index
      %c6 = arith.constant 6 : index
      %c3_59 = arith.constant 3 : index
      %66 = vector.load %arg7[%c0_58, %c6, %c3_59] : memref<2x22x22xf32, #tpu.memory_space<vmem>>, vector<1x1x16xf32>
      %67 = vector.shape_cast %66 : vector<1x1x16xf32> to vector<1x16xf32>
      %68 = vector.shape_cast %65 : vector<1x16xf32> to vector<1x1x16xf32>
      tpu.vector_store %arg7[%c0_58, %c6, %c3_59], %68 {strides = array<i32>} : memref<2x22x22xf32, #tpu.memory_space<vmem>>, vector<1x1x16xf32>,
      %c0_60 = arith.constant 0 : index
      %c48_61 = arith.constant 48 : index
      %69 = vector.load %arg6[%c0_60, %c48_61] : memref<1x256xf32, #tpu.memory_space<vmem>>, vector<1x16xf32>
      %c1_62 = arith.constant 1 : index
      %c6_63 = arith.constant 6 : index
      %c3_64 = arith.constant 3 : index
      %70 = vector.load %arg7[%c1_62, %c6_63, %c3_64] : memref<2x22x22xf32, #tpu.memory_space<vmem>>, vector<1x1x16xf32>
      %71 = vector.shape_cast %70 : vector<1x1x16xf32> to vector<1x16xf32>
      %72 = vector.shape_cast %69 : vector<1x16xf32> to vector<1x1x16xf32>
      tpu.vector_store %arg7[%c1_62, %c6_63, %c3_64], %72 {strides = array<i32>} : memref<2x22x22xf32, #tpu.memory_space<vmem>>, vector<1x1x16xf32>,
      %c0_65 = arith.constant 0 : index
      %c64 = arith.constant 64 : index
      %73 = vector.load %arg5[%c0_65, %c64] : memref<1x256xf32, #tpu.memory_space<vmem>>, vector<1x16xf32>
      %c0_66 = arith.constant 0 : index
      %c7 = arith.constant 7 : index
      %c3_67 = arith.constant 3 : index
      %74 = vector.load %arg7[%c0_66, %c7, %c3_67] : memref<2x22x22xf32, #tpu.memory_space<vmem>>, vector<1x1x16xf32>
      %75 = vector.shape_cast %74 : vector<1x1x16xf32> to vector<1x16xf32>
      %76 = vector.shape_cast %73 : vector<1x16xf32> to vector<1x1x16xf32>
      tpu.vector_store %arg7[%c0_66, %c7, %c3_67], %76 {strides = array<i32>} : memref<2x22x22xf32, #tpu.memory_space<vmem>>, vector<1x1x16xf32>,
      %c0_68 = arith.constant 0 : index
      %c64_69 = arith.constant 64 : index
      %77 = vector.load %arg6[%c0_68, %c64_69] : memref<1x256xf32, #tpu.memory_space<vmem>>, vector<1x16xf32>
      %c1_70 = arith.constant 1 : index
      %c7_71 = arith.constant 7 : index
      %c3_72 = arith.constant 3 : index
      %78 = vector.load %arg7[%c1_70, %c7_71, %c3_72] : memref<2x22x22xf32, #tpu.memory_space<vmem>>, vector<1x1x16xf32>
      %79 = vector.shape_cast %78 : vector<1x1x16xf32> to vector<1x16xf32>
      %80 = vector.shape_cast %77 : vector<1x16xf32> to vector<1x1x16xf32>
      tpu.vector_store %arg7[%c1_70, %c7_71, %c3_72], %80 {strides = array<i32>} : memref<2x22x22xf32, #tpu.memory_space<vmem>>, vector<1x1x16xf32>,
      %c0_73 = arith.constant 0 : index
      %c80 = arith.constant 80 : index
      %81 = vector.load %arg5[%c0_73, %c80] : memref<1x256xf32, #tpu.memory_space<vmem>>, vector<1x16xf32>
      %c0_74 = arith.constant 0 : index
      %c8 = arith.constant 8 : index
      %c3_75 = arith.constant 3 : index
      %82 = vector.load %arg7[%c0_74, %c8, %c3_75] : memref<2x22x22xf32, #tpu.memory_space<vmem>>, vector<1x1x16xf32>
      %83 = vector.shape_cast %82 : vector<1x1x16xf32> to vector<1x16xf32>
      %84 = vector.shape_cast %81 : vector<1x16xf32> to vector<1x1x16xf32>
      tpu.vector_store %arg7[%c0_74, %c8, %c3_75], %84 {strides = array<i32>} : memref<2x22x22xf32, #tpu.memory_space<vmem>>, vector<1x1x16xf32>,
      %c0_76 = arith.constant 0 : index
      %c80_77 = arith.constant 80 : index
      %85 = vector.load %arg6[%c0_76, %c80_77] : memref<1x256xf32, #tpu.memory_space<vmem>>, vector<1x16xf32>
      %c1_78 = arith.constant 1 : index
      %c8_79 = arith.constant 8 : index
      %c3_80 = arith.constant 3 : index
      %86 = vector.load %arg7[%c1_78, %c8_79, %c3_80] : memref<2x22x22xf32, #tpu.memory_space<vmem>>, vector<1x1x16xf32>
      %87 = vector.shape_cast %86 : vector<1x1x16xf32> to vector<1x16xf32>
      %88 = vector.shape_cast %85 : vector<1x16xf32> to vector<1x1x16xf32>
      tpu.vector_store %arg7[%c1_78, %c8_79, %c3_80], %88 {strides = array<i32>} : memref<2x22x22xf32, #tpu.memory_space<vmem>>, vector<1x1x16xf32>,
      %c0_81 = arith.constant 0 : index
      %c96 = arith.constant 96 : index
      %89 = vector.load %arg5[%c0_81, %c96] : memref<1x256xf32, #tpu.memory_space<vmem>>, vector<1x16xf32>
      %c0_82 = arith.constant 0 : index
      %c9 = arith.constant 9 : index
      %c3_83 = arith.constant 3 : index
      %90 = vector.load %arg7[%c0_82, %c9, %c3_83] : memref<2x22x22xf32, #tpu.memory_space<vmem>>, vector<1x1x16xf32>
      %91 = vector.shape_cast %90 : vector<1x1x16xf32> to vector<1x16xf32>
      %92 = vector.shape_cast %89 : vector<1x16xf32> to vector<1x1x16xf32>
      tpu.vector_store %arg7[%c0_82, %c9, %c3_83], %92 {strides = array<i32>} : memref<2x22x22xf32, #tpu.memory_space<vmem>>, vector<1x1x16xf32>,
      %c0_84 = arith.constant 0 : index
      %c96_85 = arith.constant 96 : index
      %93 = vector.load %arg6[%c0_84, %c96_85] : memref<1x256xf32, #tpu.memory_space<vmem>>, vector<1x16xf32>
      %c1_86 = arith.constant 1 : index
      %c9_87 = arith.constant 9 : index
      %c3_88 = arith.constant 3 : index
      %94 = vector.load %arg7[%c1_86, %c9_87, %c3_88] : memref<2x22x22xf32, #tpu.memory_space<vmem>>, vector<1x1x16xf32>
      %95 = vector.shape_cast %94 : vector<1x1x16xf32> to vector<1x16xf32>
      %96 = vector.shape_cast %93 : vector<1x16xf32> to vector<1x1x16xf32>
      tpu.vector_store %arg7[%c1_86, %c9_87, %c3_88], %96 {strides = array<i32>} : memref<2x22x22xf32, #tpu.memory_space<vmem>>, vector<1x1x16xf32>,
      %c0_89 = arith.constant 0 : index
      %c112 = arith.constant 112 : index
      %97 = vector.load %arg5[%c0_89, %c112] : memref<1x256xf32, #tpu.memory_space<vmem>>, vector<1x16xf32>
      %c0_90 = arith.constant 0 : index
      %c10 = arith.constant 10 : index
      %c3_91 = arith.constant 3 : index
      %98 = vector.load %arg7[%c0_90, %c10, %c3_91] : memref<2x22x22xf32, #tpu.memory_space<vmem>>, vector<1x1x16xf32>
      %99 = vector.shape_cast %98 : vector<1x1x16xf32> to vector<1x16xf32>
      %100 = vector.shape_cast %97 : vector<1x16xf32> to vector<1x1x16xf32>
      tpu.vector_store %arg7[%c0_90, %c10, %c3_91], %100 {strides = array<i32>} : memref<2x22x22xf32, #tpu.memory_space<vmem>>, vector<1x1x16xf32>,
      %c0_92 = arith.constant 0 : index
      %c112_93 = arith.constant 112 : index
      %101 = vector.load %arg6[%c0_92, %c112_93] : memref<1x256xf32, #tpu.memory_space<vmem>>, vector<1x16xf32>
      %c1_94 = arith.constant 1 : index
      %c10_95 = arith.constant 10 : index
      %c3_96 = arith.constant 3 : index
      %102 = vector.load %arg7[%c1_94, %c10_95, %c3_96] : memref<2x22x22xf32, #tpu.memory_space<vmem>>, vector<1x1x16xf32>
      %103 = vector.shape_cast %102 : vector<1x1x16xf32> to vector<1x16xf32>
      %104 = vector.shape_cast %101 : vector<1x16xf32> to vector<1x1x16xf32>
      tpu.vector_store %arg7[%c1_94, %c10_95, %c3_96], %104 {strides = array<i32>} : memref<2x22x22xf32, #tpu.memory_space<vmem>>, vector<1x1x16xf32>,
      %c0_97 = arith.constant 0 : index
      %c128 = arith.constant 128 : index
      %105 = vector.load %arg5[%c0_97, %c128] : memref<1x256xf32, #tpu.memory_space<vmem>>, vector<1x16xf32>
      %c0_98 = arith.constant 0 : index
      %c11 = arith.constant 11 : index
      %c3_99 = arith.constant 3 : index
      %106 = vector.load %arg7[%c0_98, %c11, %c3_99] : memref<2x22x22xf32, #tpu.memory_space<vmem>>, vector<1x1x16xf32>
      %107 = vector.shape_cast %106 : vector<1x1x16xf32> to vector<1x16xf32>
      %108 = vector.shape_cast %105 : vector<1x16xf32> to vector<1x1x16xf32>
      tpu.vector_store %arg7[%c0_98, %c11, %c3_99], %108 {strides = array<i32>} : memref<2x22x22xf32, #tpu.memory_space<vmem>>, vector<1x1x16xf32>,
      %c0_100 = arith.constant 0 : index
      %c128_101 = arith.constant 128 : index
      %109 = vector.load %arg6[%c0_100, %c128_101] : memref<1x256xf32, #tpu.memory_space<vmem>>, vector<1x16xf32>
      %c1_102 = arith.constant 1 : index
      %c11_103 = arith.constant 11 : index
      %c3_104 = arith.constant 3 : index
      %110 = vector.load %arg7[%c1_102, %c11_103, %c3_104] : memref<2x22x22xf32, #tpu.memory_space<vmem>>, vector<1x1x16xf32>
      %111 = vector.shape_cast %110 : vector<1x1x16xf32> to vector<1x16xf32>
      %112 = vector.shape_cast %109 : vector<1x16xf32> to vector<1x1x16xf32>
      tpu.vector_store %arg7[%c1_102, %c11_103, %c3_104], %112 {strides = array<i32>} : memref<2x22x22xf32, #tpu.memory_space<vmem>>, vector<1x1x16xf32>,
      %c0_105 = arith.constant 0 : index
      %c144 = arith.constant 144 : index
      %113 = vector.load %arg5[%c0_105, %c144] : memref<1x256xf32, #tpu.memory_space<vmem>>, vector<1x16xf32>
      %c0_106 = arith.constant 0 : index
      %c12 = arith.constant 12 : index
      %c3_107 = arith.constant 3 : index
      %114 = vector.load %arg7[%c0_106, %c12, %c3_107] : memref<2x22x22xf32, #tpu.memory_space<vmem>>, vector<1x1x16xf32>
      %115 = vector.shape_cast %114 : vector<1x1x16xf32> to vector<1x16xf32>
      %116 = vector.shape_cast %113 : vector<1x16xf32> to vector<1x1x16xf32>
      tpu.vector_store %arg7[%c0_106, %c12, %c3_107], %116 {strides = array<i32>} : memref<2x22x22xf32, #tpu.memory_space<vmem>>, vector<1x1x16xf32>,
      %c0_108 = arith.constant 0 : index
      %c144_109 = arith.constant 144 : index
      %117 = vector.load %arg6[%c0_108, %c144_109] : memref<1x256xf32, #tpu.memory_space<vmem>>, vector<1x16xf32>
      %c1_110 = arith.constant 1 : index
      %c12_111 = arith.constant 12 : index
      %c3_112 = arith.constant 3 : index
      %118 = vector.load %arg7[%c1_110, %c12_111, %c3_112] : memref<2x22x22xf32, #tpu.memory_space<vmem>>, vector<1x1x16xf32>
      %119 = vector.shape_cast %118 : vector<1x1x16xf32> to vector<1x16xf32>
      %120 = vector.shape_cast %117 : vector<1x16xf32> to vector<1x1x16xf32>
      tpu.vector_store %arg7[%c1_110, %c12_111, %c3_112], %120 {strides = array<i32>} : memref<2x22x22xf32, #tpu.memory_space<vmem>>, vector<1x1x16xf32>,
      %c0_113 = arith.constant 0 : index
      %c160 = arith.constant 160 : index
      %121 = vector.load %arg5[%c0_113, %c160] : memref<1x256xf32, #tpu.memory_space<vmem>>, vector<1x16xf32>
      %c0_114 = arith.constant 0 : index
      %c13 = arith.constant 13 : index
      %c3_115 = arith.constant 3 : index
      %122 = vector.load %arg7[%c0_114, %c13, %c3_115] : memref<2x22x22xf32, #tpu.memory_space<vmem>>, vector<1x1x16xf32>
      %123 = vector.shape_cast %122 : vector<1x1x16xf32> to vector<1x16xf32>
      %124 = vector.shape_cast %121 : vector<1x16xf32> to vector<1x1x16xf32>
      tpu.vector_store %arg7[%c0_114, %c13, %c3_115], %124 {strides = array<i32>} : memref<2x22x22xf32, #tpu.memory_space<vmem>>, vector<1x1x16xf32>,
      %c0_116 = arith.constant 0 : index
      %c160_117 = arith.constant 160 : index
      %125 = vector.load %arg6[%c0_116, %c160_117] : memref<1x256xf32, #tpu.memory_space<vmem>>, vector<1x16xf32>
      %c1_118 = arith.constant 1 : index
      %c13_119 = arith.constant 13 : index
      %c3_120 = arith.constant 3 : index
      %126 = vector.load %arg7[%c1_118, %c13_119, %c3_120] : memref<2x22x22xf32, #tpu.memory_space<vmem>>, vector<1x1x16xf32>
      %127 = vector.shape_cast %126 : vector<1x1x16xf32> to vector<1x16xf32>
      %128 = vector.shape_cast %125 : vector<1x16xf32> to vector<1x1x16xf32>
      tpu.vector_store %arg7[%c1_118, %c13_119, %c3_120], %128 {strides = array<i32>} : memref<2x22x22xf32, #tpu.memory_space<vmem>>, vector<1x1x16xf32>,
      %c0_121 = arith.constant 0 : index
      %c176 = arith.constant 176 : index
      %129 = vector.load %arg5[%c0_121, %c176] : memref<1x256xf32, #tpu.memory_space<vmem>>, vector<1x16xf32>
      %c0_122 = arith.constant 0 : index
      %c14 = arith.constant 14 : index
      %c3_123 = arith.constant 3 : index
      %130 = vector.load %arg7[%c0_122, %c14, %c3_123] : memref<2x22x22xf32, #tpu.memory_space<vmem>>, vector<1x1x16xf32>
      %131 = vector.shape_cast %130 : vector<1x1x16xf32> to vector<1x16xf32>
      %132 = vector.shape_cast %129 : vector<1x16xf32> to vector<1x1x16xf32>
      tpu.vector_store %arg7[%c0_122, %c14, %c3_123], %132 {strides = array<i32>} : memref<2x22x22xf32, #tpu.memory_space<vmem>>, vector<1x1x16xf32>,
      %c0_124 = arith.constant 0 : index
      %c176_125 = arith.constant 176 : index
      %133 = vector.load %arg6[%c0_124, %c176_125] : memref<1x256xf32, #tpu.memory_space<vmem>>, vector<1x16xf32>
      %c1_126 = arith.constant 1 : index
      %c14_127 = arith.constant 14 : index
      %c3_128 = arith.constant 3 : index
      %134 = vector.load %arg7[%c1_126, %c14_127, %c3_128] : memref<2x22x22xf32, #tpu.memory_space<vmem>>, vector<1x1x16xf32>
      %135 = vector.shape_cast %134 : vector<1x1x16xf32> to vector<1x16xf32>
      %136 = vector.shape_cast %133 : vector<1x16xf32> to vector<1x1x16xf32>
      tpu.vector_store %arg7[%c1_126, %c14_127, %c3_128], %136 {strides = array<i32>} : memref<2x22x22xf32, #tpu.memory_space<vmem>>, vector<1x1x16xf32>,
      %c0_129 = arith.constant 0 : index
      %c192 = arith.constant 192 : index
      %137 = vector.load %arg5[%c0_129, %c192] : memref<1x256xf32, #tpu.memory_space<vmem>>, vector<1x16xf32>
      %c0_130 = arith.constant 0 : index
      %c15 = arith.constant 15 : index
      %c3_131 = arith.constant 3 : index
      %138 = vector.load %arg7[%c0_130, %c15, %c3_131] : memref<2x22x22xf32, #tpu.memory_space<vmem>>, vector<1x1x16xf32>
      %139 = vector.shape_cast %138 : vector<1x1x16xf32> to vector<1x16xf32>
      %140 = vector.shape_cast %137 : vector<1x16xf32> to vector<1x1x16xf32>
      tpu.vector_store %arg7[%c0_130, %c15, %c3_131], %140 {strides = array<i32>} : memref<2x22x22xf32, #tpu.memory_space<vmem>>, vector<1x1x16xf32>,
      %c0_132 = arith.constant 0 : index
      %c192_133 = arith.constant 192 : index
      %141 = vector.load %arg6[%c0_132, %c192_133] : memref<1x256xf32, #tpu.memory_space<vmem>>, vector<1x16xf32>
      %c1_134 = arith.constant 1 : index
      %c15_135 = arith.constant 15 : index
      %c3_136 = arith.constant 3 : index
      %142 = vector.load %arg7[%c1_134, %c15_135, %c3_136] : memref<2x22x22xf32, #tpu.memory_space<vmem>>, vector<1x1x16xf32>
      %143 = vector.shape_cast %142 : vector<1x1x16xf32> to vector<1x16xf32>
      %144 = vector.shape_cast %141 : vector<1x16xf32> to vector<1x1x16xf32>
      tpu.vector_store %arg7[%c1_134, %c15_135, %c3_136], %144 {strides = array<i32>} : memref<2x22x22xf32, #tpu.memory_space<vmem>>, vector<1x1x16xf32>,
      %c0_137 = arith.constant 0 : index
      %c208 = arith.constant 208 : index
      %145 = vector.load %arg5[%c0_137, %c208] : memref<1x256xf32, #tpu.memory_space<vmem>>, vector<1x16xf32>
      %c0_138 = arith.constant 0 : index
      %c16_139 = arith.constant 16 : index
      %c3_140 = arith.constant 3 : index
      %146 = vector.load %arg7[%c0_138, %c16_139, %c3_140] : memref<2x22x22xf32, #tpu.memory_space<vmem>>, vector<1x1x16xf32>
      %147 = vector.shape_cast %146 : vector<1x1x16xf32> to vector<1x16xf32>
      %148 = vector.shape_cast %145 : vector<1x16xf32> to vector<1x1x16xf32>
      tpu.vector_store %arg7[%c0_138, %c16_139, %c3_140], %148 {strides = array<i32>} : memref<2x22x22xf32, #tpu.memory_space<vmem>>, vector<1x1x16xf32>,
      %c0_141 = arith.constant 0 : index
      %c208_142 = arith.constant 208 : index
      %149 = vector.load %arg6[%c0_141, %c208_142] : memref<1x256xf32, #tpu.memory_space<vmem>>, vector<1x16xf32>
      %c1_143 = arith.constant 1 : index
      %c16_144 = arith.constant 16 : index
      %c3_145 = arith.constant 3 : index
      %150 = vector.load %arg7[%c1_143, %c16_144, %c3_145] : memref<2x22x22xf32, #tpu.memory_space<vmem>>, vector<1x1x16xf32>
      %151 = vector.shape_cast %150 : vector<1x1x16xf32> to vector<1x16xf32>
      %152 = vector.shape_cast %149 : vector<1x16xf32> to vector<1x1x16xf32>
      tpu.vector_store %arg7[%c1_143, %c16_144, %c3_145], %152 {strides = array<i32>} : memref<2x22x22xf32, #tpu.memory_space<vmem>>, vector<1x1x16xf32>,
      %c0_146 = arith.constant 0 : index
      %c224 = arith.constant 224 : index
      %153 = vector.load %arg5[%c0_146, %c224] : memref<1x256xf32, #tpu.memory_space<vmem>>, vector<1x16xf32>
      %c0_147 = arith.constant 0 : index
      %c17 = arith.constant 17 : index
      %c3_148 = arith.constant 3 : index
      %154 = vector.load %arg7[%c0_147, %c17, %c3_148] : memref<2x22x22xf32, #tpu.memory_space<vmem>>, vector<1x1x16xf32>
      %155 = vector.shape_cast %154 : vector<1x1x16xf32> to vector<1x16xf32>
      %156 = vector.shape_cast %153 : vector<1x16xf32> to vector<1x1x16xf32>
      tpu.vector_store %arg7[%c0_147, %c17, %c3_148], %156 {strides = array<i32>} : memref<2x22x22xf32, #tpu.memory_space<vmem>>, vector<1x1x16xf32>,
      %c0_149 = arith.constant 0 : index
      %c224_150 = arith.constant 224 : index
      %157 = vector.load %arg6[%c0_149, %c224_150] : memref<1x256xf32, #tpu.memory_space<vmem>>, vector<1x16xf32>
      %c1_151 = arith.constant 1 : index
      %c17_152 = arith.constant 17 : index
      %c3_153 = arith.constant 3 : index
      %158 = vector.load %arg7[%c1_151, %c17_152, %c3_153] : memref<2x22x22xf32, #tpu.memory_space<vmem>>, vector<1x1x16xf32>
      %159 = vector.shape_cast %158 : vector<1x1x16xf32> to vector<1x16xf32>
      %160 = vector.shape_cast %157 : vector<1x16xf32> to vector<1x1x16xf32>
      tpu.vector_store %arg7[%c1_151, %c17_152, %c3_153], %160 {strides = array<i32>} : memref<2x22x22xf32, #tpu.memory_space<vmem>>, vector<1x1x16xf32>,
      %c0_154 = arith.constant 0 : index
      %c240 = arith.constant 240 : index
      %161 = vector.load %arg5[%c0_154, %c240] : memref<1x256xf32, #tpu.memory_space<vmem>>, vector<1x16xf32>
      %c0_155 = arith.constant 0 : index
      %c18 = arith.constant 18 : index
      %c3_156 = arith.constant 3 : index
      %162 = vector.load %arg7[%c0_155, %c18, %c3_156] : memref<2x22x22xf32, #tpu.memory_space<vmem>>, vector<1x1x16xf32>
      %163 = vector.shape_cast %162 : vector<1x1x16xf32> to vector<1x16xf32>
      %164 = vector.shape_cast %161 : vector<1x16xf32> to vector<1x1x16xf32>
      tpu.vector_store %arg7[%c0_155, %c18, %c3_156], %164 {strides = array<i32>} : memref<2x22x22xf32, #tpu.memory_space<vmem>>, vector<1x1x16xf32>,
      %c0_157 = arith.constant 0 : index
      %c240_158 = arith.constant 240 : index
      %165 = vector.load %arg6[%c0_157, %c240_158] : memref<1x256xf32, #tpu.memory_space<vmem>>, vector<1x16xf32>
      %c1_159 = arith.constant 1 : index
      %c18_160 = arith.constant 18 : index
      %c3_161 = arith.constant 3 : index
      %166 = vector.load %arg7[%c1_159, %c18_160, %c3_161] : memref<2x22x22xf32, #tpu.memory_space<vmem>>, vector<1x1x16xf32>
      %167 = vector.shape_cast %166 : vector<1x1x16xf32> to vector<1x16xf32>
      %168 = vector.shape_cast %165 : vector<1x16xf32> to vector<1x1x16xf32>
      tpu.vector_store %arg7[%c1_159, %c18_160, %c3_161], %168 {strides = array<i32>} : memref<2x22x22xf32, #tpu.memory_space<vmem>>, vector<1x1x16xf32>,
      %cst_162 = arith.constant 0.000000e+00 : f32
      %169 = vector.broadcast %cst_162 : f32 to vector<16x16xf32>
      %cst_163 = arith.constant 0.000000e+00 : f32
      %170 = vector.broadcast %cst_163 : f32 to vector<16x16xf32>
      %c0_164 = arith.constant 0 : index
      %171 = memref.load %arg3[%c0_164] : memref<98xf32, #tpu.memory_space<smem>>
      %cst_165 = arith.constant 2.500000e-01 : f32
      %172 = arith.mulf %171, %cst_165 : f32
      %c49 = arith.constant 49 : index
      %173 = memref.load %arg3[%c49] : memref<98xf32, #tpu.memory_space<smem>>
      %c0_166 = arith.constant 0 : index
      %c0_167 = arith.constant 0 : index
      %c0_168 = arith.constant 0 : index
      %174 = vector.load %arg7[%c0_166, %c0_167, %c0_168] : memref<2x22x22xf32, #tpu.memory_space<vmem>>, vector<1x16x16xf32>
      %175 = vector.shape_cast %174 : vector<1x16x16xf32> to vector<16x16xf32>
      %c1_169 = arith.constant 1 : index
      %c0_170 = arith.constant 0 : index
      %c0_171 = arith.constant 0 : index
      %176 = vector.load %arg7[%c1_169, %c0_170, %c0_171] : memref<2x22x22xf32, #tpu.memory_space<vmem>>, vector<1x16x16xf32>
      %177 = vector.shape_cast %176 : vector<1x16x16xf32> to vector<16x16xf32>
      %178 = vector.broadcast %172 : f32 to vector<16x16xf32>
      %179 = arith.mulf %175, %178 : vector<16x16xf32>
      %180 = vector.broadcast %173 : f32 to vector<16x16xf32>
      %181 = arith.mulf %177, %180 : vector<16x16xf32>
      %182 = arith.addf %179, %181 : vector<16x16xf32>
      %183 = arith.addf %169, %182 : vector<16x16xf32>
      %c1_172 = arith.constant 1 : index
      %184 = memref.load %arg3[%c1_172] : memref<98xf32, #tpu.memory_space<smem>>
      %cst_173 = arith.constant 2.500000e-01 : f32
      %185 = arith.mulf %184, %cst_173 : f32
      %c50 = arith.constant 50 : index
      %186 = memref.load %arg3[%c50] : memref<98xf32, #tpu.memory_space<smem>>
      %c0_174 = arith.constant 0 : index
      %c0_175 = arith.constant 0 : index
      %c1_176 = arith.constant 1 : index
      %187 = vector.load %arg7[%c0_174, %c0_175, %c1_176] : memref<2x22x22xf32, #tpu.memory_space<vmem>>, vector<1x16x16xf32>
      %188 = vector.shape_cast %187 : vector<1x16x16xf32> to vector<16x16xf32>
      %c1_177 = arith.constant 1 : index
      %c0_178 = arith.constant 0 : index
      %c1_179 = arith.constant 1 : index
      %189 = vector.load %arg7[%c1_177, %c0_178, %c1_179] : memref<2x22x22xf32, #tpu.memory_space<vmem>>, vector<1x16x16xf32>
      %190 = vector.shape_cast %189 : vector<1x16x16xf32> to vector<16x16xf32>
      %191 = vector.broadcast %185 : f32 to vector<16x16xf32>
      %192 = arith.mulf %188, %191 : vector<16x16xf32>
      %193 = vector.broadcast %186 : f32 to vector<16x16xf32>
      %194 = arith.mulf %190, %193 : vector<16x16xf32>
      %195 = arith.addf %192, %194 : vector<16x16xf32>
      %196 = arith.addf %170, %195 : vector<16x16xf32>
      %c2 = arith.constant 2 : index
      %197 = memref.load %arg3[%c2] : memref<98xf32, #tpu.memory_space<smem>>
      %cst_180 = arith.constant 2.500000e-01 : f32
      %198 = arith.mulf %197, %cst_180 : f32
      %c51 = arith.constant 51 : index
      %199 = memref.load %arg3[%c51] : memref<98xf32, #tpu.memory_space<smem>>
      %c0_181 = arith.constant 0 : index
      %c0_182 = arith.constant 0 : index
      %c2_183 = arith.constant 2 : index
      %200 = vector.load %arg7[%c0_181, %c0_182, %c2_183] : memref<2x22x22xf32, #tpu.memory_space<vmem>>, vector<1x16x16xf32>
      %201 = vector.shape_cast %200 : vector<1x16x16xf32> to vector<16x16xf32>
      %c1_184 = arith.constant 1 : index
      %c0_185 = arith.constant 0 : index
      %c2_186 = arith.constant 2 : index
      %202 = vector.load %arg7[%c1_184, %c0_185, %c2_186] : memref<2x22x22xf32, #tpu.memory_space<vmem>>, vector<1x16x16xf32>
      %203 = vector.shape_cast %202 : vector<1x16x16xf32> to vector<16x16xf32>
      %204 = vector.broadcast %198 : f32 to vector<16x16xf32>
      %205 = arith.mulf %201, %204 : vector<16x16xf32>
      %206 = vector.broadcast %199 : f32 to vector<16x16xf32>
      %207 = arith.mulf %203, %206 : vector<16x16xf32>
      %208 = arith.addf %205, %207 : vector<16x16xf32>
      %209 = arith.addf %183, %208 : vector<16x16xf32>
      %c3_187 = arith.constant 3 : index
      %210 = memref.load %arg3[%c3_187] : memref<98xf32, #tpu.memory_space<smem>>
      %cst_188 = arith.constant 2.500000e-01 : f32
      %211 = arith.mulf %210, %cst_188 : f32
      %c52 = arith.constant 52 : index
      %212 = memref.load %arg3[%c52] : memref<98xf32, #tpu.memory_space<smem>>
      %c0_189 = arith.constant 0 : index
      %c0_190 = arith.constant 0 : index
      %c3_191 = arith.constant 3 : index
      %213 = vector.load %arg7[%c0_189, %c0_190, %c3_191] : memref<2x22x22xf32, #tpu.memory_space<vmem>>, vector<1x16x16xf32>
      %214 = vector.shape_cast %213 : vector<1x16x16xf32> to vector<16x16xf32>
      %c1_192 = arith.constant 1 : index
      %c0_193 = arith.constant 0 : index
      %c3_194 = arith.constant 3 : index
      %215 = vector.load %arg7[%c1_192, %c0_193, %c3_194] : memref<2x22x22xf32, #tpu.memory_space<vmem>>, vector<1x16x16xf32>
      %216 = vector.shape_cast %215 : vector<1x16x16xf32> to vector<16x16xf32>
      %217 = vector.broadcast %211 : f32 to vector<16x16xf32>
      %218 = arith.mulf %214, %217 : vector<16x16xf32>
      %219 = vector.broadcast %212 : f32 to vector<16x16xf32>
      %220 = arith.mulf %216, %219 : vector<16x16xf32>
      %221 = arith.addf %218, %220 : vector<16x16xf32>
      %222 = arith.addf %196, %221 : vector<16x16xf32>
      %c4_195 = arith.constant 4 : index
      %223 = memref.load %arg3[%c4_195] : memref<98xf32, #tpu.memory_space<smem>>
      %cst_196 = arith.constant 2.500000e-01 : f32
      %224 = arith.mulf %223, %cst_196 : f32
      %c53 = arith.constant 53 : index
      %225 = memref.load %arg3[%c53] : memref<98xf32, #tpu.memory_space<smem>>
      %c0_197 = arith.constant 0 : index
      %c0_198 = arith.constant 0 : index
      %c4_199 = arith.constant 4 : index
      %226 = vector.load %arg7[%c0_197, %c0_198, %c4_199] : memref<2x22x22xf32, #tpu.memory_space<vmem>>, vector<1x16x16xf32>
      %227 = vector.shape_cast %226 : vector<1x16x16xf32> to vector<16x16xf32>
      %c1_200 = arith.constant 1 : index
      %c0_201 = arith.constant 0 : index
      %c4_202 = arith.constant 4 : index
      %228 = vector.load %arg7[%c1_200, %c0_201, %c4_202] : memref<2x22x22xf32, #tpu.memory_space<vmem>>, vector<1x16x16xf32>
      %229 = vector.shape_cast %228 : vector<1x16x16xf32> to vector<16x16xf32>
      %230 = vector.broadcast %224 : f32 to vector<16x16xf32>
      %231 = arith.mulf %227, %230 : vector<16x16xf32>
      %232 = vector.broadcast %225 : f32 to vector<16x16xf32>
      %233 = arith.mulf %229, %232 : vector<16x16xf32>
      %234 = arith.addf %231, %233 : vector<16x16xf32>
      %235 = arith.addf %209, %234 : vector<16x16xf32>
      %c5_203 = arith.constant 5 : index
      %236 = memref.load %arg3[%c5_203] : memref<98xf32, #tpu.memory_space<smem>>
      %cst_204 = arith.constant 2.500000e-01 : f32
      %237 = arith.mulf %236, %cst_204 : f32
      %c54 = arith.constant 54 : index
      %238 = memref.load %arg3[%c54] : memref<98xf32, #tpu.memory_space<smem>>
      %c0_205 = arith.constant 0 : index
      %c0_206 = arith.constant 0 : index
      %c5_207 = arith.constant 5 : index
      %239 = vector.load %arg7[%c0_205, %c0_206, %c5_207] : memref<2x22x22xf32, #tpu.memory_space<vmem>>, vector<1x16x16xf32>
      %240 = vector.shape_cast %239 : vector<1x16x16xf32> to vector<16x16xf32>
      %c1_208 = arith.constant 1 : index
      %c0_209 = arith.constant 0 : index
      %c5_210 = arith.constant 5 : index
      %241 = vector.load %arg7[%c1_208, %c0_209, %c5_210] : memref<2x22x22xf32, #tpu.memory_space<vmem>>, vector<1x16x16xf32>
      %242 = vector.shape_cast %241 : vector<1x16x16xf32> to vector<16x16xf32>
      %243 = vector.broadcast %237 : f32 to vector<16x16xf32>
      %244 = arith.mulf %240, %243 : vector<16x16xf32>
      %245 = vector.broadcast %238 : f32 to vector<16x16xf32>
      %246 = arith.mulf %242, %245 : vector<16x16xf32>
      %247 = arith.addf %244, %246 : vector<16x16xf32>
      %248 = arith.addf %222, %247 : vector<16x16xf32>
      %c6_211 = arith.constant 6 : index
      %249 = memref.load %arg3[%c6_211] : memref<98xf32, #tpu.memory_space<smem>>
      %cst_212 = arith.constant 2.500000e-01 : f32
      %250 = arith.mulf %249, %cst_212 : f32
      %c55 = arith.constant 55 : index
      %251 = memref.load %arg3[%c55] : memref<98xf32, #tpu.memory_space<smem>>
      %c0_213 = arith.constant 0 : index
      %c0_214 = arith.constant 0 : index
      %c6_215 = arith.constant 6 : index
      %252 = vector.load %arg7[%c0_213, %c0_214, %c6_215] : memref<2x22x22xf32, #tpu.memory_space<vmem>>, vector<1x16x16xf32>
      %253 = vector.shape_cast %252 : vector<1x16x16xf32> to vector<16x16xf32>
      %c1_216 = arith.constant 1 : index
      %c0_217 = arith.constant 0 : index
      %c6_218 = arith.constant 6 : index
      %254 = vector.load %arg7[%c1_216, %c0_217, %c6_218] : memref<2x22x22xf32, #tpu.memory_space<vmem>>, vector<1x16x16xf32>
      %255 = vector.shape_cast %254 : vector<1x16x16xf32> to vector<16x16xf32>
      %256 = vector.broadcast %250 : f32 to vector<16x16xf32>
      %257 = arith.mulf %253, %256 : vector<16x16xf32>
      %258 = vector.broadcast %251 : f32 to vector<16x16xf32>
      %259 = arith.mulf %255, %258 : vector<16x16xf32>
      %260 = arith.addf %257, %259 : vector<16x16xf32>
      %261 = arith.addf %235, %260 : vector<16x16xf32>
      %c7_219 = arith.constant 7 : index
      %262 = memref.load %arg3[%c7_219] : memref<98xf32, #tpu.memory_space<smem>>
      %cst_220 = arith.constant 2.500000e-01 : f32
      %263 = arith.mulf %262, %cst_220 : f32
      %c56 = arith.constant 56 : index
      %264 = memref.load %arg3[%c56] : memref<98xf32, #tpu.memory_space<smem>>
      %c0_221 = arith.constant 0 : index
      %c1_222 = arith.constant 1 : index
      %c0_223 = arith.constant 0 : index
      %265 = vector.load %arg7[%c0_221, %c1_222, %c0_223] : memref<2x22x22xf32, #tpu.memory_space<vmem>>, vector<1x16x16xf32>
      %266 = vector.shape_cast %265 : vector<1x16x16xf32> to vector<16x16xf32>
      %c1_224 = arith.constant 1 : index
      %c1_225 = arith.constant 1 : index
      %c0_226 = arith.constant 0 : index
      %267 = vector.load %arg7[%c1_224, %c1_225, %c0_226] : memref<2x22x22xf32, #tpu.memory_space<vmem>>, vector<1x16x16xf32>
      %268 = vector.shape_cast %267 : vector<1x16x16xf32> to vector<16x16xf32>
      %269 = vector.broadcast %263 : f32 to vector<16x16xf32>
      %270 = arith.mulf %266, %269 : vector<16x16xf32>
      %271 = vector.broadcast %264 : f32 to vector<16x16xf32>
      %272 = arith.mulf %268, %271 : vector<16x16xf32>
      %273 = arith.addf %270, %272 : vector<16x16xf32>
      %274 = arith.addf %248, %273 : vector<16x16xf32>
      %c8_227 = arith.constant 8 : index
      %275 = memref.load %arg3[%c8_227] : memref<98xf32, #tpu.memory_space<smem>>
      %cst_228 = arith.constant 2.500000e-01 : f32
      %276 = arith.mulf %275, %cst_228 : f32
      %c57 = arith.constant 57 : index
      %277 = memref.load %arg3[%c57] : memref<98xf32, #tpu.memory_space<smem>>
      %c0_229 = arith.constant 0 : index
      %c1_230 = arith.constant 1 : index
      %c1_231 = arith.constant 1 : index
      %278 = vector.load %arg7[%c0_229, %c1_230, %c1_231] : memref<2x22x22xf32, #tpu.memory_space<vmem>>, vector<1x16x16xf32>
      %279 = vector.shape_cast %278 : vector<1x16x16xf32> to vector<16x16xf32>
      %c1_232 = arith.constant 1 : index
      %c1_233 = arith.constant 1 : index
      %c1_234 = arith.constant 1 : index
      %280 = vector.load %arg7[%c1_232, %c1_233, %c1_234] : memref<2x22x22xf32, #tpu.memory_space<vmem>>, vector<1x16x16xf32>
      %281 = vector.shape_cast %280 : vector<1x16x16xf32> to vector<16x16xf32>
      %282 = vector.broadcast %276 : f32 to vector<16x16xf32>
      %283 = arith.mulf %279, %282 : vector<16x16xf32>
      %284 = vector.broadcast %277 : f32 to vector<16x16xf32>
      %285 = arith.mulf %281, %284 : vector<16x16xf32>
      %286 = arith.addf %283, %285 : vector<16x16xf32>
      %287 = arith.addf %261, %286 : vector<16x16xf32>
      %c9_235 = arith.constant 9 : index
      %288 = memref.load %arg3[%c9_235] : memref<98xf32, #tpu.memory_space<smem>>
      %cst_236 = arith.constant 2.500000e-01 : f32
      %289 = arith.mulf %288, %cst_236 : f32
      %c58 = arith.constant 58 : index
      %290 = memref.load %arg3[%c58] : memref<98xf32, #tpu.memory_space<smem>>
      %c0_237 = arith.constant 0 : index
      %c1_238 = arith.constant 1 : index
      %c2_239 = arith.constant 2 : index
      %291 = vector.load %arg7[%c0_237, %c1_238, %c2_239] : memref<2x22x22xf32, #tpu.memory_space<vmem>>, vector<1x16x16xf32>
      %292 = vector.shape_cast %291 : vector<1x16x16xf32> to vector<16x16xf32>
      %c1_240 = arith.constant 1 : index
      %c1_241 = arith.constant 1 : index
      %c2_242 = arith.constant 2 : index
      %293 = vector.load %arg7[%c1_240, %c1_241, %c2_242] : memref<2x22x22xf32, #tpu.memory_space<vmem>>, vector<1x16x16xf32>
      %294 = vector.shape_cast %293 : vector<1x16x16xf32> to vector<16x16xf32>
      %295 = vector.broadcast %289 : f32 to vector<16x16xf32>
      %296 = arith.mulf %292, %295 : vector<16x16xf32>
      %297 = vector.broadcast %290 : f32 to vector<16x16xf32>
      %298 = arith.mulf %294, %297 : vector<16x16xf32>
      %299 = arith.addf %296, %298 : vector<16x16xf32>
      %300 = arith.addf %274, %299 : vector<16x16xf32>
      %c10_243 = arith.constant 10 : index
      %301 = memref.load %arg3[%c10_243] : memref<98xf32, #tpu.memory_space<smem>>
      %cst_244 = arith.constant 2.500000e-01 : f32
      %302 = arith.mulf %301, %cst_244 : f32
      %c59 = arith.constant 59 : index
      %303 = memref.load %arg3[%c59] : memref<98xf32, #tpu.memory_space<smem>>
      %c0_245 = arith.constant 0 : index
      %c1_246 = arith.constant 1 : index
      %c3_247 = arith.constant 3 : index
      %304 = vector.load %arg7[%c0_245, %c1_246, %c3_247] : memref<2x22x22xf32, #tpu.memory_space<vmem>>, vector<1x16x16xf32>
      %305 = vector.shape_cast %304 : vector<1x16x16xf32> to vector<16x16xf32>
      %c1_248 = arith.constant 1 : index
      %c1_249 = arith.constant 1 : index
      %c3_250 = arith.constant 3 : index
      %306 = vector.load %arg7[%c1_248, %c1_249, %c3_250] : memref<2x22x22xf32, #tpu.memory_space<vmem>>, vector<1x16x16xf32>
      %307 = vector.shape_cast %306 : vector<1x16x16xf32> to vector<16x16xf32>
      %308 = vector.broadcast %302 : f32 to vector<16x16xf32>
      %309 = arith.mulf %305, %308 : vector<16x16xf32>
      %310 = vector.broadcast %303 : f32 to vector<16x16xf32>
      %311 = arith.mulf %307, %310 : vector<16x16xf32>
      %312 = arith.addf %309, %311 : vector<16x16xf32>
      %313 = arith.addf %287, %312 : vector<16x16xf32>
      %c11_251 = arith.constant 11 : index
      %314 = memref.load %arg3[%c11_251] : memref<98xf32, #tpu.memory_space<smem>>
      %cst_252 = arith.constant 2.500000e-01 : f32
      %315 = arith.mulf %314, %cst_252 : f32
      %c60 = arith.constant 60 : index
      %316 = memref.load %arg3[%c60] : memref<98xf32, #tpu.memory_space<smem>>
      %c0_253 = arith.constant 0 : index
      %c1_254 = arith.constant 1 : index
      %c4_255 = arith.constant 4 : index
      %317 = vector.load %arg7[%c0_253, %c1_254, %c4_255] : memref<2x22x22xf32, #tpu.memory_space<vmem>>, vector<1x16x16xf32>
      %318 = vector.shape_cast %317 : vector<1x16x16xf32> to vector<16x16xf32>
      %c1_256 = arith.constant 1 : index
      %c1_257 = arith.constant 1 : index
      %c4_258 = arith.constant 4 : index
      %319 = vector.load %arg7[%c1_256, %c1_257, %c4_258] : memref<2x22x22xf32, #tpu.memory_space<vmem>>, vector<1x16x16xf32>
      %320 = vector.shape_cast %319 : vector<1x16x16xf32> to vector<16x16xf32>
      %321 = vector.broadcast %315 : f32 to vector<16x16xf32>
      %322 = arith.mulf %318, %321 : vector<16x16xf32>
      %323 = vector.broadcast %316 : f32 to vector<16x16xf32>
      %324 = arith.mulf %320, %323 : vector<16x16xf32>
      %325 = arith.addf %322, %324 : vector<16x16xf32>
      %326 = arith.addf %300, %325 : vector<16x16xf32>
      %c12_259 = arith.constant 12 : index
      %327 = memref.load %arg3[%c12_259] : memref<98xf32, #tpu.memory_space<smem>>
      %cst_260 = arith.constant 2.500000e-01 : f32
      %328 = arith.mulf %327, %cst_260 : f32
      %c61 = arith.constant 61 : index
      %329 = memref.load %arg3[%c61] : memref<98xf32, #tpu.memory_space<smem>>
      %c0_261 = arith.constant 0 : index
      %c1_262 = arith.constant 1 : index
      %c5_263 = arith.constant 5 : index
      %330 = vector.load %arg7[%c0_261, %c1_262, %c5_263] : memref<2x22x22xf32, #tpu.memory_space<vmem>>, vector<1x16x16xf32>
      %331 = vector.shape_cast %330 : vector<1x16x16xf32> to vector<16x16xf32>
      %c1_264 = arith.constant 1 : index
      %c1_265 = arith.constant 1 : index
      %c5_266 = arith.constant 5 : index
      %332 = vector.load %arg7[%c1_264, %c1_265, %c5_266] : memref<2x22x22xf32, #tpu.memory_space<vmem>>, vector<1x16x16xf32>
      %333 = vector.shape_cast %332 : vector<1x16x16xf32> to vector<16x16xf32>
      %334 = vector.broadcast %328 : f32 to vector<16x16xf32>
      %335 = arith.mulf %331, %334 : vector<16x16xf32>
      %336 = vector.broadcast %329 : f32 to vector<16x16xf32>
      %337 = arith.mulf %333, %336 : vector<16x16xf32>
      %338 = arith.addf %335, %337 : vector<16x16xf32>
      %339 = arith.addf %313, %338 : vector<16x16xf32>
      %c13_267 = arith.constant 13 : index
      %340 = memref.load %arg3[%c13_267] : memref<98xf32, #tpu.memory_space<smem>>
      %cst_268 = arith.constant 2.500000e-01 : f32
      %341 = arith.mulf %340, %cst_268 : f32
      %c62 = arith.constant 62 : index
      %342 = memref.load %arg3[%c62] : memref<98xf32, #tpu.memory_space<smem>>
      %c0_269 = arith.constant 0 : index
      %c1_270 = arith.constant 1 : index
      %c6_271 = arith.constant 6 : index
      %343 = vector.load %arg7[%c0_269, %c1_270, %c6_271] : memref<2x22x22xf32, #tpu.memory_space<vmem>>, vector<1x16x16xf32>
      %344 = vector.shape_cast %343 : vector<1x16x16xf32> to vector<16x16xf32>
      %c1_272 = arith.constant 1 : index
      %c1_273 = arith.constant 1 : index
      %c6_274 = arith.constant 6 : index
      %345 = vector.load %arg7[%c1_272, %c1_273, %c6_274] : memref<2x22x22xf32, #tpu.memory_space<vmem>>, vector<1x16x16xf32>
      %346 = vector.shape_cast %345 : vector<1x16x16xf32> to vector<16x16xf32>
      %347 = vector.broadcast %341 : f32 to vector<16x16xf32>
      %348 = arith.mulf %344, %347 : vector<16x16xf32>
      %349 = vector.broadcast %342 : f32 to vector<16x16xf32>
      %350 = arith.mulf %346, %349 : vector<16x16xf32>
      %351 = arith.addf %348, %350 : vector<16x16xf32>
      %352 = arith.addf %326, %351 : vector<16x16xf32>
      %c14_275 = arith.constant 14 : index
      %353 = memref.load %arg3[%c14_275] : memref<98xf32, #tpu.memory_space<smem>>
      %cst_276 = arith.constant 2.500000e-01 : f32
      %354 = arith.mulf %353, %cst_276 : f32
      %c63 = arith.constant 63 : index
      %355 = memref.load %arg3[%c63] : memref<98xf32, #tpu.memory_space<smem>>
      %c0_277 = arith.constant 0 : index
      %c2_278 = arith.constant 2 : index
      %c0_279 = arith.constant 0 : index
      %356 = vector.load %arg7[%c0_277, %c2_278, %c0_279] : memref<2x22x22xf32, #tpu.memory_space<vmem>>, vector<1x16x16xf32>
      %357 = vector.shape_cast %356 : vector<1x16x16xf32> to vector<16x16xf32>
      %c1_280 = arith.constant 1 : index
      %c2_281 = arith.constant 2 : index
      %c0_282 = arith.constant 0 : index
      %358 = vector.load %arg7[%c1_280, %c2_281, %c0_282] : memref<2x22x22xf32, #tpu.memory_space<vmem>>, vector<1x16x16xf32>
      %359 = vector.shape_cast %358 : vector<1x16x16xf32> to vector<16x16xf32>
      %360 = vector.broadcast %354 : f32 to vector<16x16xf32>
      %361 = arith.mulf %357, %360 : vector<16x16xf32>
      %362 = vector.broadcast %355 : f32 to vector<16x16xf32>
      %363 = arith.mulf %359, %362 : vector<16x16xf32>
      %364 = arith.addf %361, %363 : vector<16x16xf32>
      %365 = arith.addf %339, %364 : vector<16x16xf32>
      %c15_283 = arith.constant 15 : index
      %366 = memref.load %arg3[%c15_283] : memref<98xf32, #tpu.memory_space<smem>>
      %cst_284 = arith.constant 2.500000e-01 : f32
      %367 = arith.mulf %366, %cst_284 : f32
      %c64_285 = arith.constant 64 : index
      %368 = memref.load %arg3[%c64_285] : memref<98xf32, #tpu.memory_space<smem>>
      %c0_286 = arith.constant 0 : index
      %c2_287 = arith.constant 2 : index
      %c1_288 = arith.constant 1 : index
      %369 = vector.load %arg7[%c0_286, %c2_287, %c1_288] : memref<2x22x22xf32, #tpu.memory_space<vmem>>, vector<1x16x16xf32>
      %370 = vector.shape_cast %369 : vector<1x16x16xf32> to vector<16x16xf32>
      %c1_289 = arith.constant 1 : index
      %c2_290 = arith.constant 2 : index
      %c1_291 = arith.constant 1 : index
      %371 = vector.load %arg7[%c1_289, %c2_290, %c1_291] : memref<2x22x22xf32, #tpu.memory_space<vmem>>, vector<1x16x16xf32>
      %372 = vector.shape_cast %371 : vector<1x16x16xf32> to vector<16x16xf32>
      %373 = vector.broadcast %367 : f32 to vector<16x16xf32>
      %374 = arith.mulf %370, %373 : vector<16x16xf32>
      %375 = vector.broadcast %368 : f32 to vector<16x16xf32>
      %376 = arith.mulf %372, %375 : vector<16x16xf32>
      %377 = arith.addf %374, %376 : vector<16x16xf32>
      %378 = arith.addf %352, %377 : vector<16x16xf32>
      %c16_292 = arith.constant 16 : index
      %379 = memref.load %arg3[%c16_292] : memref<98xf32, #tpu.memory_space<smem>>
      %cst_293 = arith.constant 2.500000e-01 : f32
      %380 = arith.mulf %379, %cst_293 : f32
      %c65 = arith.constant 65 : index
      %381 = memref.load %arg3[%c65] : memref<98xf32, #tpu.memory_space<smem>>
      %c0_294 = arith.constant 0 : index
      %c2_295 = arith.constant 2 : index
      %c2_296 = arith.constant 2 : index
      %382 = vector.load %arg7[%c0_294, %c2_295, %c2_296] : memref<2x22x22xf32, #tpu.memory_space<vmem>>, vector<1x16x16xf32>
      %383 = vector.shape_cast %382 : vector<1x16x16xf32> to vector<16x16xf32>
      %c1_297 = arith.constant 1 : index
      %c2_298 = arith.constant 2 : index
      %c2_299 = arith.constant 2 : index
      %384 = vector.load %arg7[%c1_297, %c2_298, %c2_299] : memref<2x22x22xf32, #tpu.memory_space<vmem>>, vector<1x16x16xf32>
      %385 = vector.shape_cast %384 : vector<1x16x16xf32> to vector<16x16xf32>
      %386 = vector.broadcast %380 : f32 to vector<16x16xf32>
      %387 = arith.mulf %383, %386 : vector<16x16xf32>
      %388 = vector.broadcast %381 : f32 to vector<16x16xf32>
      %389 = arith.mulf %385, %388 : vector<16x16xf32>
      %390 = arith.addf %387, %389 : vector<16x16xf32>
      %391 = arith.addf %365, %390 : vector<16x16xf32>
      %c17_300 = arith.constant 17 : index
      %392 = memref.load %arg3[%c17_300] : memref<98xf32, #tpu.memory_space<smem>>
      %cst_301 = arith.constant 2.500000e-01 : f32
      %393 = arith.mulf %392, %cst_301 : f32
      %c66 = arith.constant 66 : index
      %394 = memref.load %arg3[%c66] : memref<98xf32, #tpu.memory_space<smem>>
      %c0_302 = arith.constant 0 : index
      %c2_303 = arith.constant 2 : index
      %c3_304 = arith.constant 3 : index
      %395 = vector.load %arg7[%c0_302, %c2_303, %c3_304] : memref<2x22x22xf32, #tpu.memory_space<vmem>>, vector<1x16x16xf32>
      %396 = vector.shape_cast %395 : vector<1x16x16xf32> to vector<16x16xf32>
      %c1_305 = arith.constant 1 : index
      %c2_306 = arith.constant 2 : index
      %c3_307 = arith.constant 3 : index
      %397 = vector.load %arg7[%c1_305, %c2_306, %c3_307] : memref<2x22x22xf32, #tpu.memory_space<vmem>>, vector<1x16x16xf32>
      %398 = vector.shape_cast %397 : vector<1x16x16xf32> to vector<16x16xf32>
      %399 = vector.broadcast %393 : f32 to vector<16x16xf32>
      %400 = arith.mulf %396, %399 : vector<16x16xf32>
      %401 = vector.broadcast %394 : f32 to vector<16x16xf32>
      %402 = arith.mulf %398, %401 : vector<16x16xf32>
      %403 = arith.addf %400, %402 : vector<16x16xf32>
      %404 = arith.addf %378, %403 : vector<16x16xf32>
      %c18_308 = arith.constant 18 : index
      %405 = memref.load %arg3[%c18_308] : memref<98xf32, #tpu.memory_space<smem>>
      %cst_309 = arith.constant 2.500000e-01 : f32
      %406 = arith.mulf %405, %cst_309 : f32
      %c67 = arith.constant 67 : index
      %407 = memref.load %arg3[%c67] : memref<98xf32, #tpu.memory_space<smem>>
      %c0_310 = arith.constant 0 : index
      %c2_311 = arith.constant 2 : index
      %c4_312 = arith.constant 4 : index
      %408 = vector.load %arg7[%c0_310, %c2_311, %c4_312] : memref<2x22x22xf32, #tpu.memory_space<vmem>>, vector<1x16x16xf32>
      %409 = vector.shape_cast %408 : vector<1x16x16xf32> to vector<16x16xf32>
      %c1_313 = arith.constant 1 : index
      %c2_314 = arith.constant 2 : index
      %c4_315 = arith.constant 4 : index
      %410 = vector.load %arg7[%c1_313, %c2_314, %c4_315] : memref<2x22x22xf32, #tpu.memory_space<vmem>>, vector<1x16x16xf32>
      %411 = vector.shape_cast %410 : vector<1x16x16xf32> to vector<16x16xf32>
      %412 = vector.broadcast %406 : f32 to vector<16x16xf32>
      %413 = arith.mulf %409, %412 : vector<16x16xf32>
      %414 = vector.broadcast %407 : f32 to vector<16x16xf32>
      %415 = arith.mulf %411, %414 : vector<16x16xf32>
      %416 = arith.addf %413, %415 : vector<16x16xf32>
      %417 = arith.addf %391, %416 : vector<16x16xf32>
      %c19_316 = arith.constant 19 : index
      %418 = memref.load %arg3[%c19_316] : memref<98xf32, #tpu.memory_space<smem>>
      %cst_317 = arith.constant 2.500000e-01 : f32
      %419 = arith.mulf %418, %cst_317 : f32
      %c68 = arith.constant 68 : index
      %420 = memref.load %arg3[%c68] : memref<98xf32, #tpu.memory_space<smem>>
      %c0_318 = arith.constant 0 : index
      %c2_319 = arith.constant 2 : index
      %c5_320 = arith.constant 5 : index
      %421 = vector.load %arg7[%c0_318, %c2_319, %c5_320] : memref<2x22x22xf32, #tpu.memory_space<vmem>>, vector<1x16x16xf32>
      %422 = vector.shape_cast %421 : vector<1x16x16xf32> to vector<16x16xf32>
      %c1_321 = arith.constant 1 : index
      %c2_322 = arith.constant 2 : index
      %c5_323 = arith.constant 5 : index
      %423 = vector.load %arg7[%c1_321, %c2_322, %c5_323] : memref<2x22x22xf32, #tpu.memory_space<vmem>>, vector<1x16x16xf32>
      %424 = vector.shape_cast %423 : vector<1x16x16xf32> to vector<16x16xf32>
      %425 = vector.broadcast %419 : f32 to vector<16x16xf32>
      %426 = arith.mulf %422, %425 : vector<16x16xf32>
      %427 = vector.broadcast %420 : f32 to vector<16x16xf32>
      %428 = arith.mulf %424, %427 : vector<16x16xf32>
      %429 = arith.addf %426, %428 : vector<16x16xf32>
      %430 = arith.addf %404, %429 : vector<16x16xf32>
      %c20 = arith.constant 20 : index
      %431 = memref.load %arg3[%c20] : memref<98xf32, #tpu.memory_space<smem>>
      %cst_324 = arith.constant 2.500000e-01 : f32
      %432 = arith.mulf %431, %cst_324 : f32
      %c69 = arith.constant 69 : index
      %433 = memref.load %arg3[%c69] : memref<98xf32, #tpu.memory_space<smem>>
      %c0_325 = arith.constant 0 : index
      %c2_326 = arith.constant 2 : index
      %c6_327 = arith.constant 6 : index
      %434 = vector.load %arg7[%c0_325, %c2_326, %c6_327] : memref<2x22x22xf32, #tpu.memory_space<vmem>>, vector<1x16x16xf32>
      %435 = vector.shape_cast %434 : vector<1x16x16xf32> to vector<16x16xf32>
      %c1_328 = arith.constant 1 : index
      %c2_329 = arith.constant 2 : index
      %c6_330 = arith.constant 6 : index
      %436 = vector.load %arg7[%c1_328, %c2_329, %c6_330] : memref<2x22x22xf32, #tpu.memory_space<vmem>>, vector<1x16x16xf32>
      %437 = vector.shape_cast %436 : vector<1x16x16xf32> to vector<16x16xf32>
      %438 = vector.broadcast %432 : f32 to vector<16x16xf32>
      %439 = arith.mulf %435, %438 : vector<16x16xf32>
      %440 = vector.broadcast %433 : f32 to vector<16x16xf32>
      %441 = arith.mulf %437, %440 : vector<16x16xf32>
      %442 = arith.addf %439, %441 : vector<16x16xf32>
      %443 = arith.addf %417, %442 : vector<16x16xf32>
      %c21 = arith.constant 21 : index
      %444 = memref.load %arg3[%c21] : memref<98xf32, #tpu.memory_space<smem>>
      %cst_331 = arith.constant 2.500000e-01 : f32
      %445 = arith.mulf %444, %cst_331 : f32
      %c70 = arith.constant 70 : index
      %446 = memref.load %arg3[%c70] : memref<98xf32, #tpu.memory_space<smem>>
      %c0_332 = arith.constant 0 : index
      %c3_333 = arith.constant 3 : index
      %c0_334 = arith.constant 0 : index
      %447 = vector.load %arg7[%c0_332, %c3_333, %c0_334] : memref<2x22x22xf32, #tpu.memory_space<vmem>>, vector<1x16x16xf32>
      %448 = vector.shape_cast %447 : vector<1x16x16xf32> to vector<16x16xf32>
      %c1_335 = arith.constant 1 : index
      %c3_336 = arith.constant 3 : index
      %c0_337 = arith.constant 0 : index
      %449 = vector.load %arg7[%c1_335, %c3_336, %c0_337] : memref<2x22x22xf32, #tpu.memory_space<vmem>>, vector<1x16x16xf32>
      %450 = vector.shape_cast %449 : vector<1x16x16xf32> to vector<16x16xf32>
      %451 = vector.broadcast %445 : f32 to vector<16x16xf32>
      %452 = arith.mulf %448, %451 : vector<16x16xf32>
      %453 = vector.broadcast %446 : f32 to vector<16x16xf32>
      %454 = arith.mulf %450, %453 : vector<16x16xf32>
      %455 = arith.addf %452, %454 : vector<16x16xf32>
      %456 = arith.addf %430, %455 : vector<16x16xf32>
      %c22 = arith.constant 22 : index
      %457 = memref.load %arg3[%c22] : memref<98xf32, #tpu.memory_space<smem>>
      %cst_338 = arith.constant 2.500000e-01 : f32
      %458 = arith.mulf %457, %cst_338 : f32
      %c71 = arith.constant 71 : index
      %459 = memref.load %arg3[%c71] : memref<98xf32, #tpu.memory_space<smem>>
      %c0_339 = arith.constant 0 : index
      %c3_340 = arith.constant 3 : index
      %c1_341 = arith.constant 1 : index
      %460 = vector.load %arg7[%c0_339, %c3_340, %c1_341] : memref<2x22x22xf32, #tpu.memory_space<vmem>>, vector<1x16x16xf32>
      %461 = vector.shape_cast %460 : vector<1x16x16xf32> to vector<16x16xf32>
      %c1_342 = arith.constant 1 : index
      %c3_343 = arith.constant 3 : index
      %c1_344 = arith.constant 1 : index
      %462 = vector.load %arg7[%c1_342, %c3_343, %c1_344] : memref<2x22x22xf32, #tpu.memory_space<vmem>>, vector<1x16x16xf32>
      %463 = vector.shape_cast %462 : vector<1x16x16xf32> to vector<16x16xf32>
      %464 = vector.broadcast %458 : f32 to vector<16x16xf32>
      %465 = arith.mulf %461, %464 : vector<16x16xf32>
      %466 = vector.broadcast %459 : f32 to vector<16x16xf32>
      %467 = arith.mulf %463, %466 : vector<16x16xf32>
      %468 = arith.addf %465, %467 : vector<16x16xf32>
      %469 = arith.addf %443, %468 : vector<16x16xf32>
      %c23 = arith.constant 23 : index
      %470 = memref.load %arg3[%c23] : memref<98xf32, #tpu.memory_space<smem>>
      %cst_345 = arith.constant 2.500000e-01 : f32
      %471 = arith.mulf %470, %cst_345 : f32
      %c72 = arith.constant 72 : index
      %472 = memref.load %arg3[%c72] : memref<98xf32, #tpu.memory_space<smem>>
      %c0_346 = arith.constant 0 : index
      %c3_347 = arith.constant 3 : index
      %c2_348 = arith.constant 2 : index
      %473 = vector.load %arg7[%c0_346, %c3_347, %c2_348] : memref<2x22x22xf32, #tpu.memory_space<vmem>>, vector<1x16x16xf32>
      %474 = vector.shape_cast %473 : vector<1x16x16xf32> to vector<16x16xf32>
      %c1_349 = arith.constant 1 : index
      %c3_350 = arith.constant 3 : index
      %c2_351 = arith.constant 2 : index
      %475 = vector.load %arg7[%c1_349, %c3_350, %c2_351] : memref<2x22x22xf32, #tpu.memory_space<vmem>>, vector<1x16x16xf32>
      %476 = vector.shape_cast %475 : vector<1x16x16xf32> to vector<16x16xf32>
      %477 = vector.broadcast %471 : f32 to vector<16x16xf32>
      %478 = arith.mulf %474, %477 : vector<16x16xf32>
      %479 = vector.broadcast %472 : f32 to vector<16x16xf32>
      %480 = arith.mulf %476, %479 : vector<16x16xf32>
      %481 = arith.addf %478, %480 : vector<16x16xf32>
      %482 = arith.addf %456, %481 : vector<16x16xf32>
      %c24 = arith.constant 24 : index
      %483 = memref.load %arg3[%c24] : memref<98xf32, #tpu.memory_space<smem>>
      %cst_352 = arith.constant 2.500000e-01 : f32
      %484 = arith.mulf %483, %cst_352 : f32
      %c73 = arith.constant 73 : index
      %485 = memref.load %arg3[%c73] : memref<98xf32, #tpu.memory_space<smem>>
      %c0_353 = arith.constant 0 : index
      %c3_354 = arith.constant 3 : index
      %c3_355 = arith.constant 3 : index
      %486 = vector.load %arg7[%c0_353, %c3_354, %c3_355] : memref<2x22x22xf32, #tpu.memory_space<vmem>>, vector<1x16x16xf32>
      %487 = vector.shape_cast %486 : vector<1x16x16xf32> to vector<16x16xf32>
      %c1_356 = arith.constant 1 : index
      %c3_357 = arith.constant 3 : index
      %c3_358 = arith.constant 3 : index
      %488 = vector.load %arg7[%c1_356, %c3_357, %c3_358] : memref<2x22x22xf32, #tpu.memory_space<vmem>>, vector<1x16x16xf32>
      %489 = vector.shape_cast %488 : vector<1x16x16xf32> to vector<16x16xf32>
      %490 = vector.broadcast %484 : f32 to vector<16x16xf32>
      %491 = arith.mulf %487, %490 : vector<16x16xf32>
      %492 = vector.broadcast %485 : f32 to vector<16x16xf32>
      %493 = arith.mulf %489, %492 : vector<16x16xf32>
      %494 = arith.addf %491, %493 : vector<16x16xf32>
      %495 = arith.addf %469, %494 : vector<16x16xf32>
      %c25 = arith.constant 25 : index
      %496 = memref.load %arg3[%c25] : memref<98xf32, #tpu.memory_space<smem>>
      %cst_359 = arith.constant 2.500000e-01 : f32
      %497 = arith.mulf %496, %cst_359 : f32
      %c74 = arith.constant 74 : index
      %498 = memref.load %arg3[%c74] : memref<98xf32, #tpu.memory_space<smem>>
      %c0_360 = arith.constant 0 : index
      %c3_361 = arith.constant 3 : index
      %c4_362 = arith.constant 4 : index
      %499 = vector.load %arg7[%c0_360, %c3_361, %c4_362] : memref<2x22x22xf32, #tpu.memory_space<vmem>>, vector<1x16x16xf32>
      %500 = vector.shape_cast %499 : vector<1x16x16xf32> to vector<16x16xf32>
      %c1_363 = arith.constant 1 : index
      %c3_364 = arith.constant 3 : index
      %c4_365 = arith.constant 4 : index
      %501 = vector.load %arg7[%c1_363, %c3_364, %c4_365] : memref<2x22x22xf32, #tpu.memory_space<vmem>>, vector<1x16x16xf32>
      %502 = vector.shape_cast %501 : vector<1x16x16xf32> to vector<16x16xf32>
      %503 = vector.broadcast %497 : f32 to vector<16x16xf32>
      %504 = arith.mulf %500, %503 : vector<16x16xf32>
      %505 = vector.broadcast %498 : f32 to vector<16x16xf32>
      %506 = arith.mulf %502, %505 : vector<16x16xf32>
      %507 = arith.addf %504, %506 : vector<16x16xf32>
      %508 = arith.addf %482, %507 : vector<16x16xf32>
      %c26 = arith.constant 26 : index
      %509 = memref.load %arg3[%c26] : memref<98xf32, #tpu.memory_space<smem>>
      %cst_366 = arith.constant 2.500000e-01 : f32
      %510 = arith.mulf %509, %cst_366 : f32
      %c75 = arith.constant 75 : index
      %511 = memref.load %arg3[%c75] : memref<98xf32, #tpu.memory_space<smem>>
      %c0_367 = arith.constant 0 : index
      %c3_368 = arith.constant 3 : index
      %c5_369 = arith.constant 5 : index
      %512 = vector.load %arg7[%c0_367, %c3_368, %c5_369] : memref<2x22x22xf32, #tpu.memory_space<vmem>>, vector<1x16x16xf32>
      %513 = vector.shape_cast %512 : vector<1x16x16xf32> to vector<16x16xf32>
      %c1_370 = arith.constant 1 : index
      %c3_371 = arith.constant 3 : index
      %c5_372 = arith.constant 5 : index
      %514 = vector.load %arg7[%c1_370, %c3_371, %c5_372] : memref<2x22x22xf32, #tpu.memory_space<vmem>>, vector<1x16x16xf32>
      %515 = vector.shape_cast %514 : vector<1x16x16xf32> to vector<16x16xf32>
      %516 = vector.broadcast %510 : f32 to vector<16x16xf32>
      %517 = arith.mulf %513, %516 : vector<16x16xf32>
      %518 = vector.broadcast %511 : f32 to vector<16x16xf32>
      %519 = arith.mulf %515, %518 : vector<16x16xf32>
      %520 = arith.addf %517, %519 : vector<16x16xf32>
      %521 = arith.addf %495, %520 : vector<16x16xf32>
      %c27 = arith.constant 27 : index
      %522 = memref.load %arg3[%c27] : memref<98xf32, #tpu.memory_space<smem>>
      %cst_373 = arith.constant 2.500000e-01 : f32
      %523 = arith.mulf %522, %cst_373 : f32
      %c76 = arith.constant 76 : index
      %524 = memref.load %arg3[%c76] : memref<98xf32, #tpu.memory_space<smem>>
      %c0_374 = arith.constant 0 : index
      %c3_375 = arith.constant 3 : index
      %c6_376 = arith.constant 6 : index
      %525 = vector.load %arg7[%c0_374, %c3_375, %c6_376] : memref<2x22x22xf32, #tpu.memory_space<vmem>>, vector<1x16x16xf32>
      %526 = vector.shape_cast %525 : vector<1x16x16xf32> to vector<16x16xf32>
      %c1_377 = arith.constant 1 : index
      %c3_378 = arith.constant 3 : index
      %c6_379 = arith.constant 6 : index
      %527 = vector.load %arg7[%c1_377, %c3_378, %c6_379] : memref<2x22x22xf32, #tpu.memory_space<vmem>>, vector<1x16x16xf32>
      %528 = vector.shape_cast %527 : vector<1x16x16xf32> to vector<16x16xf32>
      %529 = vector.broadcast %523 : f32 to vector<16x16xf32>
      %530 = arith.mulf %526, %529 : vector<16x16xf32>
      %531 = vector.broadcast %524 : f32 to vector<16x16xf32>
      %532 = arith.mulf %528, %531 : vector<16x16xf32>
      %533 = arith.addf %530, %532 : vector<16x16xf32>
      %534 = arith.addf %508, %533 : vector<16x16xf32>
      %c28 = arith.constant 28 : index
      %535 = memref.load %arg3[%c28] : memref<98xf32, #tpu.memory_space<smem>>
      %cst_380 = arith.constant 2.500000e-01 : f32
      %536 = arith.mulf %535, %cst_380 : f32
      %c77 = arith.constant 77 : index
      %537 = memref.load %arg3[%c77] : memref<98xf32, #tpu.memory_space<smem>>
      %c0_381 = arith.constant 0 : index
      %c4_382 = arith.constant 4 : index
      %c0_383 = arith.constant 0 : index
      %538 = vector.load %arg7[%c0_381, %c4_382, %c0_383] : memref<2x22x22xf32, #tpu.memory_space<vmem>>, vector<1x16x16xf32>
      %539 = vector.shape_cast %538 : vector<1x16x16xf32> to vector<16x16xf32>
      %c1_384 = arith.constant 1 : index
      %c4_385 = arith.constant 4 : index
      %c0_386 = arith.constant 0 : index
      %540 = vector.load %arg7[%c1_384, %c4_385, %c0_386] : memref<2x22x22xf32, #tpu.memory_space<vmem>>, vector<1x16x16xf32>
      %541 = vector.shape_cast %540 : vector<1x16x16xf32> to vector<16x16xf32>
      %542 = vector.broadcast %536 : f32 to vector<16x16xf32>
      %543 = arith.mulf %539, %542 : vector<16x16xf32>
      %544 = vector.broadcast %537 : f32 to vector<16x16xf32>
      %545 = arith.mulf %541, %544 : vector<16x16xf32>
      %546 = arith.addf %543, %545 : vector<16x16xf32>
      %547 = arith.addf %521, %546 : vector<16x16xf32>
      %c29 = arith.constant 29 : index
      %548 = memref.load %arg3[%c29] : memref<98xf32, #tpu.memory_space<smem>>
      %cst_387 = arith.constant 2.500000e-01 : f32
      %549 = arith.mulf %548, %cst_387 : f32
      %c78 = arith.constant 78 : index
      %550 = memref.load %arg3[%c78] : memref<98xf32, #tpu.memory_space<smem>>
      %c0_388 = arith.constant 0 : index
      %c4_389 = arith.constant 4 : index
      %c1_390 = arith.constant 1 : index
      %551 = vector.load %arg7[%c0_388, %c4_389, %c1_390] : memref<2x22x22xf32, #tpu.memory_space<vmem>>, vector<1x16x16xf32>
      %552 = vector.shape_cast %551 : vector<1x16x16xf32> to vector<16x16xf32>
      %c1_391 = arith.constant 1 : index
      %c4_392 = arith.constant 4 : index
      %c1_393 = arith.constant 1 : index
      %553 = vector.load %arg7[%c1_391, %c4_392, %c1_393] : memref<2x22x22xf32, #tpu.memory_space<vmem>>, vector<1x16x16xf32>
      %554 = vector.shape_cast %553 : vector<1x16x16xf32> to vector<16x16xf32>
      %555 = vector.broadcast %549 : f32 to vector<16x16xf32>
      %556 = arith.mulf %552, %555 : vector<16x16xf32>
      %557 = vector.broadcast %550 : f32 to vector<16x16xf32>
      %558 = arith.mulf %554, %557 : vector<16x16xf32>
      %559 = arith.addf %556, %558 : vector<16x16xf32>
      %560 = arith.addf %534, %559 : vector<16x16xf32>
      %c30 = arith.constant 30 : index
      %561 = memref.load %arg3[%c30] : memref<98xf32, #tpu.memory_space<smem>>
      %cst_394 = arith.constant 2.500000e-01 : f32
      %562 = arith.mulf %561, %cst_394 : f32
      %c79 = arith.constant 79 : index
      %563 = memref.load %arg3[%c79] : memref<98xf32, #tpu.memory_space<smem>>
      %c0_395 = arith.constant 0 : index
      %c4_396 = arith.constant 4 : index
      %c2_397 = arith.constant 2 : index
      %564 = vector.load %arg7[%c0_395, %c4_396, %c2_397] : memref<2x22x22xf32, #tpu.memory_space<vmem>>, vector<1x16x16xf32>
      %565 = vector.shape_cast %564 : vector<1x16x16xf32> to vector<16x16xf32>
      %c1_398 = arith.constant 1 : index
      %c4_399 = arith.constant 4 : index
      %c2_400 = arith.constant 2 : index
      %566 = vector.load %arg7[%c1_398, %c4_399, %c2_400] : memref<2x22x22xf32, #tpu.memory_space<vmem>>, vector<1x16x16xf32>
      %567 = vector.shape_cast %566 : vector<1x16x16xf32> to vector<16x16xf32>
      %568 = vector.broadcast %562 : f32 to vector<16x16xf32>
      %569 = arith.mulf %565, %568 : vector<16x16xf32>
      %570 = vector.broadcast %563 : f32 to vector<16x16xf32>
      %571 = arith.mulf %567, %570 : vector<16x16xf32>
      %572 = arith.addf %569, %571 : vector<16x16xf32>
      %573 = arith.addf %547, %572 : vector<16x16xf32>
      %c31 = arith.constant 31 : index
      %574 = memref.load %arg3[%c31] : memref<98xf32, #tpu.memory_space<smem>>
      %cst_401 = arith.constant 2.500000e-01 : f32
      %575 = arith.mulf %574, %cst_401 : f32
      %c80_402 = arith.constant 80 : index
      %576 = memref.load %arg3[%c80_402] : memref<98xf32, #tpu.memory_space<smem>>
      %c0_403 = arith.constant 0 : index
      %c4_404 = arith.constant 4 : index
      %c3_405 = arith.constant 3 : index
      %577 = vector.load %arg7[%c0_403, %c4_404, %c3_405] : memref<2x22x22xf32, #tpu.memory_space<vmem>>, vector<1x16x16xf32>
      %578 = vector.shape_cast %577 : vector<1x16x16xf32> to vector<16x16xf32>
      %c1_406 = arith.constant 1 : index
      %c4_407 = arith.constant 4 : index
      %c3_408 = arith.constant 3 : index
      %579 = vector.load %arg7[%c1_406, %c4_407, %c3_408] : memref<2x22x22xf32, #tpu.memory_space<vmem>>, vector<1x16x16xf32>
      %580 = vector.shape_cast %579 : vector<1x16x16xf32> to vector<16x16xf32>
      %581 = vector.broadcast %575 : f32 to vector<16x16xf32>
      %582 = arith.mulf %578, %581 : vector<16x16xf32>
      %583 = vector.broadcast %576 : f32 to vector<16x16xf32>
      %584 = arith.mulf %580, %583 : vector<16x16xf32>
      %585 = arith.addf %582, %584 : vector<16x16xf32>
      %586 = arith.addf %560, %585 : vector<16x16xf32>
      %c32_409 = arith.constant 32 : index
      %587 = memref.load %arg3[%c32_409] : memref<98xf32, #tpu.memory_space<smem>>
      %cst_410 = arith.constant 2.500000e-01 : f32
      %588 = arith.mulf %587, %cst_410 : f32
      %c81 = arith.constant 81 : index
      %589 = memref.load %arg3[%c81] : memref<98xf32, #tpu.memory_space<smem>>
      %c0_411 = arith.constant 0 : index
      %c4_412 = arith.constant 4 : index
      %c4_413 = arith.constant 4 : index
      %590 = vector.load %arg7[%c0_411, %c4_412, %c4_413] : memref<2x22x22xf32, #tpu.memory_space<vmem>>, vector<1x16x16xf32>
      %591 = vector.shape_cast %590 : vector<1x16x16xf32> to vector<16x16xf32>
      %c1_414 = arith.constant 1 : index
      %c4_415 = arith.constant 4 : index
      %c4_416 = arith.constant 4 : index
      %592 = vector.load %arg7[%c1_414, %c4_415, %c4_416] : memref<2x22x22xf32, #tpu.memory_space<vmem>>, vector<1x16x16xf32>
      %593 = vector.shape_cast %592 : vector<1x16x16xf32> to vector<16x16xf32>
      %594 = vector.broadcast %588 : f32 to vector<16x16xf32>
      %595 = arith.mulf %591, %594 : vector<16x16xf32>
      %596 = vector.broadcast %589 : f32 to vector<16x16xf32>
      %597 = arith.mulf %593, %596 : vector<16x16xf32>
      %598 = arith.addf %595, %597 : vector<16x16xf32>
      %599 = arith.addf %573, %598 : vector<16x16xf32>
      %c33 = arith.constant 33 : index
      %600 = memref.load %arg3[%c33] : memref<98xf32, #tpu.memory_space<smem>>
      %cst_417 = arith.constant 2.500000e-01 : f32
      %601 = arith.mulf %600, %cst_417 : f32
      %c82 = arith.constant 82 : index
      %602 = memref.load %arg3[%c82] : memref<98xf32, #tpu.memory_space<smem>>
      %c0_418 = arith.constant 0 : index
      %c4_419 = arith.constant 4 : index
      %c5_420 = arith.constant 5 : index
      %603 = vector.load %arg7[%c0_418, %c4_419, %c5_420] : memref<2x22x22xf32, #tpu.memory_space<vmem>>, vector<1x16x16xf32>
      %604 = vector.shape_cast %603 : vector<1x16x16xf32> to vector<16x16xf32>
      %c1_421 = arith.constant 1 : index
      %c4_422 = arith.constant 4 : index
      %c5_423 = arith.constant 5 : index
      %605 = vector.load %arg7[%c1_421, %c4_422, %c5_423] : memref<2x22x22xf32, #tpu.memory_space<vmem>>, vector<1x16x16xf32>
      %606 = vector.shape_cast %605 : vector<1x16x16xf32> to vector<16x16xf32>
      %607 = vector.broadcast %601 : f32 to vector<16x16xf32>
      %608 = arith.mulf %604, %607 : vector<16x16xf32>
      %609 = vector.broadcast %602 : f32 to vector<16x16xf32>
      %610 = arith.mulf %606, %609 : vector<16x16xf32>
      %611 = arith.addf %608, %610 : vector<16x16xf32>
      %612 = arith.addf %586, %611 : vector<16x16xf32>
      %c34 = arith.constant 34 : index
      %613 = memref.load %arg3[%c34] : memref<98xf32, #tpu.memory_space<smem>>
      %cst_424 = arith.constant 2.500000e-01 : f32
      %614 = arith.mulf %613, %cst_424 : f32
      %c83 = arith.constant 83 : index
      %615 = memref.load %arg3[%c83] : memref<98xf32, #tpu.memory_space<smem>>
      %c0_425 = arith.constant 0 : index
      %c4_426 = arith.constant 4 : index
      %c6_427 = arith.constant 6 : index
      %616 = vector.load %arg7[%c0_425, %c4_426, %c6_427] : memref<2x22x22xf32, #tpu.memory_space<vmem>>, vector<1x16x16xf32>
      %617 = vector.shape_cast %616 : vector<1x16x16xf32> to vector<16x16xf32>
      %c1_428 = arith.constant 1 : index
      %c4_429 = arith.constant 4 : index
      %c6_430 = arith.constant 6 : index
      %618 = vector.load %arg7[%c1_428, %c4_429, %c6_430] : memref<2x22x22xf32, #tpu.memory_space<vmem>>, vector<1x16x16xf32>
      %619 = vector.shape_cast %618 : vector<1x16x16xf32> to vector<16x16xf32>
      %620 = vector.broadcast %614 : f32 to vector<16x16xf32>
      %621 = arith.mulf %617, %620 : vector<16x16xf32>
      %622 = vector.broadcast %615 : f32 to vector<16x16xf32>
      %623 = arith.mulf %619, %622 : vector<16x16xf32>
      %624 = arith.addf %621, %623 : vector<16x16xf32>
      %625 = arith.addf %599, %624 : vector<16x16xf32>
      %c35 = arith.constant 35 : index
      %626 = memref.load %arg3[%c35] : memref<98xf32, #tpu.memory_space<smem>>
      %cst_431 = arith.constant 2.500000e-01 : f32
      %627 = arith.mulf %626, %cst_431 : f32
      %c84 = arith.constant 84 : index
      %628 = memref.load %arg3[%c84] : memref<98xf32, #tpu.memory_space<smem>>
      %c0_432 = arith.constant 0 : index
      %c5_433 = arith.constant 5 : index
      %c0_434 = arith.constant 0 : index
      %629 = vector.load %arg7[%c0_432, %c5_433, %c0_434] : memref<2x22x22xf32, #tpu.memory_space<vmem>>, vector<1x16x16xf32>
      %630 = vector.shape_cast %629 : vector<1x16x16xf32> to vector<16x16xf32>
      %c1_435 = arith.constant 1 : index
      %c5_436 = arith.constant 5 : index
      %c0_437 = arith.constant 0 : index
      %631 = vector.load %arg7[%c1_435, %c5_436, %c0_437] : memref<2x22x22xf32, #tpu.memory_space<vmem>>, vector<1x16x16xf32>
      %632 = vector.shape_cast %631 : vector<1x16x16xf32> to vector<16x16xf32>
      %633 = vector.broadcast %627 : f32 to vector<16x16xf32>
      %634 = arith.mulf %630, %633 : vector<16x16xf32>
      %635 = vector.broadcast %628 : f32 to vector<16x16xf32>
      %636 = arith.mulf %632, %635 : vector<16x16xf32>
      %637 = arith.addf %634, %636 : vector<16x16xf32>
      %638 = arith.addf %612, %637 : vector<16x16xf32>
      %c36 = arith.constant 36 : index
      %639 = memref.load %arg3[%c36] : memref<98xf32, #tpu.memory_space<smem>>
      %cst_438 = arith.constant 2.500000e-01 : f32
      %640 = arith.mulf %639, %cst_438 : f32
      %c85 = arith.constant 85 : index
      %641 = memref.load %arg3[%c85] : memref<98xf32, #tpu.memory_space<smem>>
      %c0_439 = arith.constant 0 : index
      %c5_440 = arith.constant 5 : index
      %c1_441 = arith.constant 1 : index
      %642 = vector.load %arg7[%c0_439, %c5_440, %c1_441] : memref<2x22x22xf32, #tpu.memory_space<vmem>>, vector<1x16x16xf32>
      %643 = vector.shape_cast %642 : vector<1x16x16xf32> to vector<16x16xf32>
      %c1_442 = arith.constant 1 : index
      %c5_443 = arith.constant 5 : index
      %c1_444 = arith.constant 1 : index
      %644 = vector.load %arg7[%c1_442, %c5_443, %c1_444] : memref<2x22x22xf32, #tpu.memory_space<vmem>>, vector<1x16x16xf32>
      %645 = vector.shape_cast %644 : vector<1x16x16xf32> to vector<16x16xf32>
      %646 = vector.broadcast %640 : f32 to vector<16x16xf32>
      %647 = arith.mulf %643, %646 : vector<16x16xf32>
      %648 = vector.broadcast %641 : f32 to vector<16x16xf32>
      %649 = arith.mulf %645, %648 : vector<16x16xf32>
      %650 = arith.addf %647, %649 : vector<16x16xf32>
      %651 = arith.addf %625, %650 : vector<16x16xf32>
      %c37 = arith.constant 37 : index
      %652 = memref.load %arg3[%c37] : memref<98xf32, #tpu.memory_space<smem>>
      %cst_445 = arith.constant 2.500000e-01 : f32
      %653 = arith.mulf %652, %cst_445 : f32
      %c86 = arith.constant 86 : index
      %654 = memref.load %arg3[%c86] : memref<98xf32, #tpu.memory_space<smem>>
      %c0_446 = arith.constant 0 : index
      %c5_447 = arith.constant 5 : index
      %c2_448 = arith.constant 2 : index
      %655 = vector.load %arg7[%c0_446, %c5_447, %c2_448] : memref<2x22x22xf32, #tpu.memory_space<vmem>>, vector<1x16x16xf32>
      %656 = vector.shape_cast %655 : vector<1x16x16xf32> to vector<16x16xf32>
      %c1_449 = arith.constant 1 : index
      %c5_450 = arith.constant 5 : index
      %c2_451 = arith.constant 2 : index
      %657 = vector.load %arg7[%c1_449, %c5_450, %c2_451] : memref<2x22x22xf32, #tpu.memory_space<vmem>>, vector<1x16x16xf32>
      %658 = vector.shape_cast %657 : vector<1x16x16xf32> to vector<16x16xf32>
      %659 = vector.broadcast %653 : f32 to vector<16x16xf32>
      %660 = arith.mulf %656, %659 : vector<16x16xf32>
      %661 = vector.broadcast %654 : f32 to vector<16x16xf32>
      %662 = arith.mulf %658, %661 : vector<16x16xf32>
      %663 = arith.addf %660, %662 : vector<16x16xf32>
      %664 = arith.addf %638, %663 : vector<16x16xf32>
      %c38 = arith.constant 38 : index
      %665 = memref.load %arg3[%c38] : memref<98xf32, #tpu.memory_space<smem>>
      %cst_452 = arith.constant 2.500000e-01 : f32
      %666 = arith.mulf %665, %cst_452 : f32
      %c87 = arith.constant 87 : index
      %667 = memref.load %arg3[%c87] : memref<98xf32, #tpu.memory_space<smem>>
      %c0_453 = arith.constant 0 : index
      %c5_454 = arith.constant 5 : index
      %c3_455 = arith.constant 3 : index
      %668 = vector.load %arg7[%c0_453, %c5_454, %c3_455] : memref<2x22x22xf32, #tpu.memory_space<vmem>>, vector<1x16x16xf32>
      %669 = vector.shape_cast %668 : vector<1x16x16xf32> to vector<16x16xf32>
      %c1_456 = arith.constant 1 : index
      %c5_457 = arith.constant 5 : index
      %c3_458 = arith.constant 3 : index
      %670 = vector.load %arg7[%c1_456, %c5_457, %c3_458] : memref<2x22x22xf32, #tpu.memory_space<vmem>>, vector<1x16x16xf32>
      %671 = vector.shape_cast %670 : vector<1x16x16xf32> to vector<16x16xf32>
      %672 = vector.broadcast %666 : f32 to vector<16x16xf32>
      %673 = arith.mulf %669, %672 : vector<16x16xf32>
      %674 = vector.broadcast %667 : f32 to vector<16x16xf32>
      %675 = arith.mulf %671, %674 : vector<16x16xf32>
      %676 = arith.addf %673, %675 : vector<16x16xf32>
      %677 = arith.addf %651, %676 : vector<16x16xf32>
      %c39 = arith.constant 39 : index
      %678 = memref.load %arg3[%c39] : memref<98xf32, #tpu.memory_space<smem>>
      %cst_459 = arith.constant 2.500000e-01 : f32
      %679 = arith.mulf %678, %cst_459 : f32
      %c88 = arith.constant 88 : index
      %680 = memref.load %arg3[%c88] : memref<98xf32, #tpu.memory_space<smem>>
      %c0_460 = arith.constant 0 : index
      %c5_461 = arith.constant 5 : index
      %c4_462 = arith.constant 4 : index
      %681 = vector.load %arg7[%c0_460, %c5_461, %c4_462] : memref<2x22x22xf32, #tpu.memory_space<vmem>>, vector<1x16x16xf32>
      %682 = vector.shape_cast %681 : vector<1x16x16xf32> to vector<16x16xf32>
      %c1_463 = arith.constant 1 : index
      %c5_464 = arith.constant 5 : index
      %c4_465 = arith.constant 4 : index
      %683 = vector.load %arg7[%c1_463, %c5_464, %c4_465] : memref<2x22x22xf32, #tpu.memory_space<vmem>>, vector<1x16x16xf32>
      %684 = vector.shape_cast %683 : vector<1x16x16xf32> to vector<16x16xf32>
      %685 = vector.broadcast %679 : f32 to vector<16x16xf32>
      %686 = arith.mulf %682, %685 : vector<16x16xf32>
      %687 = vector.broadcast %680 : f32 to vector<16x16xf32>
      %688 = arith.mulf %684, %687 : vector<16x16xf32>
      %689 = arith.addf %686, %688 : vector<16x16xf32>
      %690 = arith.addf %664, %689 : vector<16x16xf32>
      %c40 = arith.constant 40 : index
      %691 = memref.load %arg3[%c40] : memref<98xf32, #tpu.memory_space<smem>>
      %cst_466 = arith.constant 2.500000e-01 : f32
      %692 = arith.mulf %691, %cst_466 : f32
      %c89 = arith.constant 89 : index
      %693 = memref.load %arg3[%c89] : memref<98xf32, #tpu.memory_space<smem>>
      %c0_467 = arith.constant 0 : index
      %c5_468 = arith.constant 5 : index
      %c5_469 = arith.constant 5 : index
      %694 = vector.load %arg7[%c0_467, %c5_468, %c5_469] : memref<2x22x22xf32, #tpu.memory_space<vmem>>, vector<1x16x16xf32>
      %695 = vector.shape_cast %694 : vector<1x16x16xf32> to vector<16x16xf32>
      %c1_470 = arith.constant 1 : index
      %c5_471 = arith.constant 5 : index
      %c5_472 = arith.constant 5 : index
      %696 = vector.load %arg7[%c1_470, %c5_471, %c5_472] : memref<2x22x22xf32, #tpu.memory_space<vmem>>, vector<1x16x16xf32>
      %697 = vector.shape_cast %696 : vector<1x16x16xf32> to vector<16x16xf32>
      %698 = vector.broadcast %692 : f32 to vector<16x16xf32>
      %699 = arith.mulf %695, %698 : vector<16x16xf32>
      %700 = vector.broadcast %693 : f32 to vector<16x16xf32>
      %701 = arith.mulf %697, %700 : vector<16x16xf32>
      %702 = arith.addf %699, %701 : vector<16x16xf32>
      %703 = arith.addf %677, %702 : vector<16x16xf32>
      %c41 = arith.constant 41 : index
      %704 = memref.load %arg3[%c41] : memref<98xf32, #tpu.memory_space<smem>>
      %cst_473 = arith.constant 2.500000e-01 : f32
      %705 = arith.mulf %704, %cst_473 : f32
      %c90 = arith.constant 90 : index
      %706 = memref.load %arg3[%c90] : memref<98xf32, #tpu.memory_space<smem>>
      %c0_474 = arith.constant 0 : index
      %c5_475 = arith.constant 5 : index
      %c6_476 = arith.constant 6 : index
      %707 = vector.load %arg7[%c0_474, %c5_475, %c6_476] : memref<2x22x22xf32, #tpu.memory_space<vmem>>, vector<1x16x16xf32>
      %708 = vector.shape_cast %707 : vector<1x16x16xf32> to vector<16x16xf32>
      %c1_477 = arith.constant 1 : index
      %c5_478 = arith.constant 5 : index
      %c6_479 = arith.constant 6 : index
      %709 = vector.load %arg7[%c1_477, %c5_478, %c6_479] : memref<2x22x22xf32, #tpu.memory_space<vmem>>, vector<1x16x16xf32>
      %710 = vector.shape_cast %709 : vector<1x16x16xf32> to vector<16x16xf32>
      %711 = vector.broadcast %705 : f32 to vector<16x16xf32>
      %712 = arith.mulf %708, %711 : vector<16x16xf32>
      %713 = vector.broadcast %706 : f32 to vector<16x16xf32>
      %714 = arith.mulf %710, %713 : vector<16x16xf32>
      %715 = arith.addf %712, %714 : vector<16x16xf32>
      %716 = arith.addf %690, %715 : vector<16x16xf32>
      %c42 = arith.constant 42 : index
      %717 = memref.load %arg3[%c42] : memref<98xf32, #tpu.memory_space<smem>>
      %cst_480 = arith.constant 2.500000e-01 : f32
      %718 = arith.mulf %717, %cst_480 : f32
      %c91 = arith.constant 91 : index
      %719 = memref.load %arg3[%c91] : memref<98xf32, #tpu.memory_space<smem>>
      %c0_481 = arith.constant 0 : index
      %c6_482 = arith.constant 6 : index
      %c0_483 = arith.constant 0 : index
      %720 = vector.load %arg7[%c0_481, %c6_482, %c0_483] : memref<2x22x22xf32, #tpu.memory_space<vmem>>, vector<1x16x16xf32>
      %721 = vector.shape_cast %720 : vector<1x16x16xf32> to vector<16x16xf32>
      %c1_484 = arith.constant 1 : index
      %c6_485 = arith.constant 6 : index
      %c0_486 = arith.constant 0 : index
      %722 = vector.load %arg7[%c1_484, %c6_485, %c0_486] : memref<2x22x22xf32, #tpu.memory_space<vmem>>, vector<1x16x16xf32>
      %723 = vector.shape_cast %722 : vector<1x16x16xf32> to vector<16x16xf32>
      %724 = vector.broadcast %718 : f32 to vector<16x16xf32>
      %725 = arith.mulf %721, %724 : vector<16x16xf32>
      %726 = vector.broadcast %719 : f32 to vector<16x16xf32>
      %727 = arith.mulf %723, %726 : vector<16x16xf32>
      %728 = arith.addf %725, %727 : vector<16x16xf32>
      %729 = arith.addf %703, %728 : vector<16x16xf32>
      %c43 = arith.constant 43 : index
      %730 = memref.load %arg3[%c43] : memref<98xf32, #tpu.memory_space<smem>>
      %cst_487 = arith.constant 2.500000e-01 : f32
      %731 = arith.mulf %730, %cst_487 : f32
      %c92 = arith.constant 92 : index
      %732 = memref.load %arg3[%c92] : memref<98xf32, #tpu.memory_space<smem>>
      %c0_488 = arith.constant 0 : index
      %c6_489 = arith.constant 6 : index
      %c1_490 = arith.constant 1 : index
      %733 = vector.load %arg7[%c0_488, %c6_489, %c1_490] : memref<2x22x22xf32, #tpu.memory_space<vmem>>, vector<1x16x16xf32>
      %734 = vector.shape_cast %733 : vector<1x16x16xf32> to vector<16x16xf32>
      %c1_491 = arith.constant 1 : index
      %c6_492 = arith.constant 6 : index
      %c1_493 = arith.constant 1 : index
      %735 = vector.load %arg7[%c1_491, %c6_492, %c1_493] : memref<2x22x22xf32, #tpu.memory_space<vmem>>, vector<1x16x16xf32>
      %736 = vector.shape_cast %735 : vector<1x16x16xf32> to vector<16x16xf32>
      %737 = vector.broadcast %731 : f32 to vector<16x16xf32>
      %738 = arith.mulf %734, %737 : vector<16x16xf32>
      %739 = vector.broadcast %732 : f32 to vector<16x16xf32>
      %740 = arith.mulf %736, %739 : vector<16x16xf32>
      %741 = arith.addf %738, %740 : vector<16x16xf32>
      %742 = arith.addf %716, %741 : vector<16x16xf32>
      %c44 = arith.constant 44 : index
      %743 = memref.load %arg3[%c44] : memref<98xf32, #tpu.memory_space<smem>>
      %cst_494 = arith.constant 2.500000e-01 : f32
      %744 = arith.mulf %743, %cst_494 : f32
      %c93 = arith.constant 93 : index
      %745 = memref.load %arg3[%c93] : memref<98xf32, #tpu.memory_space<smem>>
      %c0_495 = arith.constant 0 : index
      %c6_496 = arith.constant 6 : index
      %c2_497 = arith.constant 2 : index
      %746 = vector.load %arg7[%c0_495, %c6_496, %c2_497] : memref<2x22x22xf32, #tpu.memory_space<vmem>>, vector<1x16x16xf32>
      %747 = vector.shape_cast %746 : vector<1x16x16xf32> to vector<16x16xf32>
      %c1_498 = arith.constant 1 : index
      %c6_499 = arith.constant 6 : index
      %c2_500 = arith.constant 2 : index
      %748 = vector.load %arg7[%c1_498, %c6_499, %c2_500] : memref<2x22x22xf32, #tpu.memory_space<vmem>>, vector<1x16x16xf32>
      %749 = vector.shape_cast %748 : vector<1x16x16xf32> to vector<16x16xf32>
      %750 = vector.broadcast %744 : f32 to vector<16x16xf32>
      %751 = arith.mulf %747, %750 : vector<16x16xf32>
      %752 = vector.broadcast %745 : f32 to vector<16x16xf32>
      %753 = arith.mulf %749, %752 : vector<16x16xf32>
      %754 = arith.addf %751, %753 : vector<16x16xf32>
      %755 = arith.addf %729, %754 : vector<16x16xf32>
      %c45 = arith.constant 45 : index
      %756 = memref.load %arg3[%c45] : memref<98xf32, #tpu.memory_space<smem>>
      %cst_501 = arith.constant 2.500000e-01 : f32
      %757 = arith.mulf %756, %cst_501 : f32
      %c94 = arith.constant 94 : index
      %758 = memref.load %arg3[%c94] : memref<98xf32, #tpu.memory_space<smem>>
      %c0_502 = arith.constant 0 : index
      %c6_503 = arith.constant 6 : index
      %c3_504 = arith.constant 3 : index
      %759 = vector.load %arg7[%c0_502, %c6_503, %c3_504] : memref<2x22x22xf32, #tpu.memory_space<vmem>>, vector<1x16x16xf32>
      %760 = vector.shape_cast %759 : vector<1x16x16xf32> to vector<16x16xf32>
      %c1_505 = arith.constant 1 : index
      %c6_506 = arith.constant 6 : index
      %c3_507 = arith.constant 3 : index
      %761 = vector.load %arg7[%c1_505, %c6_506, %c3_507] : memref<2x22x22xf32, #tpu.memory_space<vmem>>, vector<1x16x16xf32>
      %762 = vector.shape_cast %761 : vector<1x16x16xf32> to vector<16x16xf32>
      %763 = vector.broadcast %757 : f32 to vector<16x16xf32>
      %764 = arith.mulf %760, %763 : vector<16x16xf32>
      %765 = vector.broadcast %758 : f32 to vector<16x16xf32>
      %766 = arith.mulf %762, %765 : vector<16x16xf32>
      %767 = arith.addf %764, %766 : vector<16x16xf32>
      %768 = arith.addf %742, %767 : vector<16x16xf32>
      %c46 = arith.constant 46 : index
      %769 = memref.load %arg3[%c46] : memref<98xf32, #tpu.memory_space<smem>>
      %cst_508 = arith.constant 2.500000e-01 : f32
      %770 = arith.mulf %769, %cst_508 : f32
      %c95 = arith.constant 95 : index
      %771 = memref.load %arg3[%c95] : memref<98xf32, #tpu.memory_space<smem>>
      %c0_509 = arith.constant 0 : index
      %c6_510 = arith.constant 6 : index
      %c4_511 = arith.constant 4 : index
      %772 = vector.load %arg7[%c0_509, %c6_510, %c4_511] : memref<2x22x22xf32, #tpu.memory_space<vmem>>, vector<1x16x16xf32>
      %773 = vector.shape_cast %772 : vector<1x16x16xf32> to vector<16x16xf32>
      %c1_512 = arith.constant 1 : index
      %c6_513 = arith.constant 6 : index
      %c4_514 = arith.constant 4 : index
      %774 = vector.load %arg7[%c1_512, %c6_513, %c4_514] : memref<2x22x22xf32, #tpu.memory_space<vmem>>, vector<1x16x16xf32>
      %775 = vector.shape_cast %774 : vector<1x16x16xf32> to vector<16x16xf32>
      %776 = vector.broadcast %770 : f32 to vector<16x16xf32>
      %777 = arith.mulf %773, %776 : vector<16x16xf32>
      %778 = vector.broadcast %771 : f32 to vector<16x16xf32>
      %779 = arith.mulf %775, %778 : vector<16x16xf32>
      %780 = arith.addf %777, %779 : vector<16x16xf32>
      %781 = arith.addf %755, %780 : vector<16x16xf32>
      %c47 = arith.constant 47 : index
      %782 = memref.load %arg3[%c47] : memref<98xf32, #tpu.memory_space<smem>>
      %cst_515 = arith.constant 2.500000e-01 : f32
      %783 = arith.mulf %782, %cst_515 : f32
      %c96_516 = arith.constant 96 : index
      %784 = memref.load %arg3[%c96_516] : memref<98xf32, #tpu.memory_space<smem>>
      %c0_517 = arith.constant 0 : index
      %c6_518 = arith.constant 6 : index
      %c5_519 = arith.constant 5 : index
      %785 = vector.load %arg7[%c0_517, %c6_518, %c5_519] : memref<2x22x22xf32, #tpu.memory_space<vmem>>, vector<1x16x16xf32>
      %786 = vector.shape_cast %785 : vector<1x16x16xf32> to vector<16x16xf32>
      %c1_520 = arith.constant 1 : index
      %c6_521 = arith.constant 6 : index
      %c5_522 = arith.constant 5 : index
      %787 = vector.load %arg7[%c1_520, %c6_521, %c5_522] : memref<2x22x22xf32, #tpu.memory_space<vmem>>, vector<1x16x16xf32>
      %788 = vector.shape_cast %787 : vector<1x16x16xf32> to vector<16x16xf32>
      %789 = vector.broadcast %783 : f32 to vector<16x16xf32>
      %790 = arith.mulf %786, %789 : vector<16x16xf32>
      %791 = vector.broadcast %784 : f32 to vector<16x16xf32>
      %792 = arith.mulf %788, %791 : vector<16x16xf32>
      %793 = arith.addf %790, %792 : vector<16x16xf32>
      %794 = arith.addf %768, %793 : vector<16x16xf32>
      %c48_523 = arith.constant 48 : index
      %795 = memref.load %arg3[%c48_523] : memref<98xf32, #tpu.memory_space<smem>>
      %cst_524 = arith.constant 2.500000e-01 : f32
      %796 = arith.mulf %795, %cst_524 : f32
      %c97 = arith.constant 97 : index
      %797 = memref.load %arg3[%c97] : memref<98xf32, #tpu.memory_space<smem>>
      %c0_525 = arith.constant 0 : index
      %c6_526 = arith.constant 6 : index
      %c6_527 = arith.constant 6 : index
      %798 = vector.load %arg7[%c0_525, %c6_526, %c6_527] : memref<2x22x22xf32, #tpu.memory_space<vmem>>, vector<1x16x16xf32>
      %799 = vector.shape_cast %798 : vector<1x16x16xf32> to vector<16x16xf32>
      %c1_528 = arith.constant 1 : index
      %c6_529 = arith.constant 6 : index
      %c6_530 = arith.constant 6 : index
      %800 = vector.load %arg7[%c1_528, %c6_529, %c6_530] : memref<2x22x22xf32, #tpu.memory_space<vmem>>, vector<1x16x16xf32>
      %801 = vector.shape_cast %800 : vector<1x16x16xf32> to vector<16x16xf32>
      %802 = vector.broadcast %796 : f32 to vector<16x16xf32>
      %803 = arith.mulf %799, %802 : vector<16x16xf32>
      %804 = vector.broadcast %797 : f32 to vector<16x16xf32>
      %805 = arith.mulf %801, %804 : vector<16x16xf32>
      %806 = arith.addf %803, %805 : vector<16x16xf32>
      %807 = arith.addf %781, %806 : vector<16x16xf32>
      %808 = arith.addf %807, %794 : vector<16x16xf32>
      %809 = arith.negf %808 : vector<16x16xf32>
      %810 = math.exp %809 : vector<16x16xf32>
      %cst_531 = arith.constant 1.000000e+00 : f32
      %811 = vector.broadcast %cst_531 : f32 to vector<16x16xf32>
      %812 = arith.addf %811, %810 : vector<16x16xf32>
      %813 = arith.divf %811, %812 : vector<16x16xf32>
      %c0_532 = arith.constant 0 : index
      %c0_533 = arith.constant 0 : index
      %c0_534 = arith.constant 0 : index
      %c0_535 = arith.constant 0 : index
      %814 = vector.load %arg4[%c0_532, %c0_533, %c0_534, %c0_535] : memref<1x1x16x16xf32, #tpu.memory_space<vmem>>, vector<1x1x16x16xf32>
      %815 = vector.shape_cast %814 : vector<1x1x16x16xf32> to vector<16x16xf32>
      %816 = vector.shape_cast %813 : vector<16x16xf32> to vector<1x1x16x16xf32>
      tpu.vector_store %arg4[%c0_532, %c0_533, %c0_534, %c0_535], %816 {strides = array<i32>} : memref<1x1x16x16xf32, #tpu.memory_space<vmem>>, vector<1x1x16x16xf32>,
    } else {
    }
    return
  }
  func.func @transform_0(%arg0: i32, %arg1: i32) -> (i32, i32, i32) {
    %c0_i32 = arith.constant 0 : i32
    %c0_i32_0 = arith.constant 0 : i32
    return %arg0, %arg1, %c0_i32 : i32, i32, i32
  }
  func.func @transform_1(%arg0: i32, %arg1: i32) -> i32 {
    %c0_i32 = arith.constant 0 : i32
    %c0_i32_0 = arith.constant 0 : i32
    return %c0_i32 : i32
  }
  func.func @transform_2(%arg0: i32, %arg1: i32) -> (i32, i32, i32, i32) {
    %c0_i32 = arith.constant 0 : i32
    %c0_i32_0 = arith.constant 0 : i32
    %c0_i32_1 = arith.constant 0 : i32
    %c0_i32_2 = arith.constant 0 : i32
    return %arg0, %c0_i32, %c0_i32_0, %c0_i32_1 : i32, i32, i32, i32
  }
}

</mosaic_0001>

<llo_original>
// kernel: tpu_custom_call.1
$region0: #{tpu_custom_call.1}
  #allocation0 [shape = 'u32[]', space=smem, size = 0x4, offset = 0x4, fixed_abs, tag = 'smem constant byte address 0x4 - core index']
  #allocation1 [shape = 'u32[72,128]{1,0:T(1,128)}', space=vmem, size = 0x9000, scoped, tag = 'internal scratch']
  #allocation2 [shape = 'f32[1,256]{1,0:T(1,128)}', space=vmem, size = 0x400, scoped, tag = 'scratch operand']
  #allocation3 [shape = 'f32[1,256]{1,0:T(1,128)}', space=vmem, size = 0x400, scoped, tag = 'scratch operand']
  #allocation4 [shape = 'f32[2,22,22]{2,1,0:T(8,128)}', space=vmem, size = 0x6000, scoped, tag = 'scratch operand']
  %s0 = inlined_call_operand.hbm [shape: f32[2,4,256], index: 0, kind: input, shape index: {}]
  %s1 = inlined_call_operand.hbm [shape: f32[98], index: 1, kind: input, shape index: {}]
  %s2 = inlined_call_operand.hbm [shape: f32[2,1,16,16], index: 2, kind: output, shape index: {}]
  %s3 = sld [smem:[#allocation0]]
  $region61: #{tpu_custom_call.1} parent=0
    _
  %s5 = ssub.s32 1, %s3
  %s6 = scalar_select 0, %s5, %s3
  $region1: #{tpu_custom_call.1} parent=0
    #allocation5 [shape = 'u8[8192]{0}', space=vmem, size = 0x2000, scoped, tag = 'input window, operand 0']
    #allocation6 [shape = 's32[2]{0}', space=sflag, size = 0x8, scoped, tag = 'scoped memory for tpu_custom_call.1']
    #allocation7 [shape = 's32[2]{0}', space=sflag, size = 0x8, scoped, tag = 'scoped memory for tpu_custom_call.1']
    #allocation8 [shape = 's32[2]{0}', space=sflag, size = 0x8, scoped, tag = 'scoped memory for tpu_custom_call.1']
    #allocation9 [shape = 'u8[512]{0}', space=smem, size = 0x200, scoped, tag = 'input window, operand 1, single buffered']
    #allocation10 [shape = 'u8[16384]{0}', space=vmem, size = 0x4000, scoped, tag = 'output window, operand 0']
    %7 = vsyncpa [#allocation6], 0
    %s8 = scalar_lea.sflag [#allocation6], 1
    %9 = vsyncpa %s8, 0
    %10 = vsyncpa [#allocation8], 0
    %11 = vsyncpa [#allocation7], 0
    %s12 = scalar_lea.sflag [#allocation7], 1
    %13 = vsyncpa %s12, 0
    loop: start=0, step=1, limit=4
    $region2: #{tpu_custom_call.1} parent=1 // loop_pre_header
      _
    $region3: #{tpu_custom_call.1} parent=1 // loop_header
      %s15 = sphi 0, %s19
      %p16 = scmp.ge.s32.totalorder %s15, 4
      %s22 = sphi 0, %s34
      %s23 = sphi 0, %s30
      %s24 = sphi 0, %s22
      %s25 = sphi 0, %s23
      %s26 = sphi 0, %s24
      %s27 = sphi 0, %s25
      %s39 = sphi 0, %s41
      %s42 = sphi 0, %s39
      %s43 = sphi 0, %s42
      %s59 = sphi 0, %s43
      %s63 = sphi 0, %s63
      %s65 = sphi 0, %s63
      %s66 = sphi 0, %s65
      %s80 = sphi 0, %s66
      %s86 = sphi 0, %s88
      %s89 = sphi 0, %s86
      %s90 = sphi 0, %s89
      %s106 = sphi 0, %s90
    $region4: #{tpu_custom_call.1} parent=1 // loop_header_branch
      %18 = sbr.rel (%p16) target = $region8
    $region5: #{tpu_custom_call.1} parent=1 // loop_body
      %s20 = ssub.s32 %s15, 1
      %s21 = ssub.s32 %s15, 2
      %s28 = sadd.s32 1, %s23
      %p29 = scmp.ge.s32.totalorder %s28, 1
      %s30 = scalar_select %p29, 0, %s28
      %s31 = sadd.s32 1, %s22
      %s32 = scalar_select %p29, %s31, %s22
      %p33 = scmp.ge.s32.totalorder %s32, 2
      %s34 = scalar_select %p33, 0, %s32
      %s35 = ssub.s32 %s22, %s34
      %s36 = ssub.s32 %s23, %s30
      %s37 = sor.u32 %s35, %s36
      %p38 = scmp.eq.s32.totalorder %s37, 0
      %s40 = sadd.s32 %s39, 1
      %s41 = scalar_select %p38, %s39, %s40
      %p44 = pneg %p38
      %p45 = scmp.eq.s32.totalorder %s15, 1
      %p46 = por %p44, %p45
      %p47 = scmp.ne.s32.totalorder %s39, %s42
      %p48 = scmp.eq.s32.totalorder %s15, 0
      %p49 = por %p47, %p48
      %p50 = scmp.ne.s32.totalorder %s39, %s42
      %p51 = scmp.eq.s32.totalorder %s20, 1
      %p52 = por %p50, %p51
      %p53 = scmp.ne.s32.totalorder %s42, %s43
      %p54 = scmp.eq.s32.totalorder %s20, 0
      %p55 = por %p53, %p54
      %p56 = scmp.ne.s32.totalorder %s42, %s43
      %p57 = scmp.eq.s32.totalorder %s21, 1
      %p58 = por %p56, %p57
      %p60 = scmp.ne.s32.totalorder %s43, %s59
      %p61 = scmp.eq.s32.totalorder %s21, 0
      %p62 = por %p60, %p61
      %s64 = sadd.s32 %s63, 1
      %p67 = scmp.eq.s32.totalorder %s15, 1
      %p68 = scmp.ne.s32.totalorder %s63, %s65
      %p69 = scmp.eq.s32.totalorder %s15, 0
      %p70 = por %p68, %p69
      %p71 = scmp.ne.s32.totalorder %s63, %s65
      %p72 = scmp.eq.s32.totalorder %s20, 1
      %p73 = por %p71, %p72
      %p74 = scmp.ne.s32.totalorder %s65, %s66
      %p75 = scmp.eq.s32.totalorder %s20, 0
      %p76 = por %p74, %p75
      %p77 = scmp.ne.s32.totalorder %s65, %s66
      %p78 = scmp.eq.s32.totalorder %s21, 1
      %p79 = por %p77, %p78
      %p81 = scmp.ne.s32.totalorder %s66, %s80
      %p82 = scmp.eq.s32.totalorder %s21, 0
      %p83 = por %p81, %p82
      %s84 = ssub.s32 %s22, %s34
      %p85 = scmp.eq.s32.totalorder %s84, 0
      %s87 = sadd.s32 %s86, 1
      %s88 = scalar_select %p85, %s86, %s87
      %p91 = pneg %p85
      %p92 = scmp.eq.s32.totalorder %s15, 1
      %p93 = por %p91, %p92
      %p94 = scmp.ne.s32.totalorder %s86, %s89
      %p95 = scmp.eq.s32.totalorder %s15, 0
      %p96 = por %p94, %p95
      %p97 = scmp.ne.s32.totalorder %s86, %s89
      %p98 = scmp.eq.s32.totalorder %s20, 1
      %p99 = por %p97, %p98
      %p100 = scmp.ne.s32.totalorder %s89, %s90
      %p101 = scmp.eq.s32.totalorder %s20, 0
      %p102 = por %p100, %p101
      %p103 = scmp.ne.s32.totalorder %s89, %s90
      %p104 = scmp.eq.s32.totalorder %s21, 1
      %p105 = por %p103, %p104
      %p107 = scmp.ne.s32.totalorder %s90, %s106
      %p108 = scmp.eq.s32.totalorder %s21, 0
      %p109 = por %p107, %p108
      %p110 = scmp.le.s32.totalorder 1, %s15
      %p111 = scmp.lt.s32.totalorder %s15, 3
      %p112 = pnand %p110, %p111
      %p113 = pneg %p112
      // Predicated region
      $region9: #{tpu_custom_call.1} parent=5 // pred_check
        _
      $region10: #{tpu_custom_call.1} parent=5 // pred_check_branch
        %115 = sbr.rel (%p112) target = $region12
      $region11: #{tpu_custom_call.1} parent=5 // pred_region
        %s116 = ssub.s32 %s15, 1
        // Predicated region
        $region13: #{tpu_custom_call.1} parent=11 // pred_check
          %p117 = pneg %p76
        $region14: #{tpu_custom_call.1} parent=11 // pred_check_branch
          %119 = sbr.rel (%p117) target = $region16
        $region15: #{tpu_custom_call.1} parent=11 // pred_region
          %121 = vsyncadd [#allocation8], 0
          %s123 = sshll.u32 %s1, 4
          %s124 = int_to_ptr.hbm [resolvable:$true] %s123
          %126 = dma.hbm_to_smem %s124, 16, [#allocation9], [#allocation8]
        $region16: #{tpu_custom_call.1} parent=11 // pred_fallthru
          _
      $region12: #{tpu_custom_call.1} parent=5 // pred_fallthru
        _
      %p127 = scmp.lt.s32.totalorder %s15, 2
      // Predicated region
      $region17: #{tpu_custom_call.1} parent=5 // pred_check
        %p128 = pneg %p127
      $region18: #{tpu_custom_call.1} parent=5 // pred_check_branch
        %130 = sbr.rel (%p128) target = $region20
      $region19: #{tpu_custom_call.1} parent=5 // pred_region
        // Predicated region
        $region21: #{tpu_custom_call.1} parent=19 // pred_check
          %p131 = pneg %p49
        $region22: #{tpu_custom_call.1} parent=19 // pred_check_branch
          %133 = sbr.rel (%p131) target = $region24
        $region23: #{tpu_custom_call.1} parent=19 // pred_region
          %s134 = sand.u32 %s39, 1
          %s135 = scalar_lea.sflag [#allocation6], %s134
          %s136 = sand.u32 %s39, 1
          %s137 = smul.addr %s136, 8
          %s138 = scalar_lea.vmem [#allocation5], %s137
          %140 = vsyncadd %s135, 0
          %s141 = smul.addr %s23, 2
          %s142 = smul.addr %s22, 2
          %s143 = sadd.s32 %s141, %s142
          %s144 = smul.addr %s143, 4
          %s145 = scalar_lea.hbm %s0, %s144
          %s147 = sshll.u32 %s145, 4
          %s148 = int_to_ptr.hbm [resolvable:$true] %s147
          %s149 = sshll.u32 %s138, 4
          %s150 = int_to_ptr.vmem [resolvable:$true] %s149
          %152 = dma.hbm_to_vmem [thread:$0]  %s148, 128, %s150, %s135
        $region24: #{tpu_custom_call.1} parent=19 // pred_fallthru
          _
      $region20: #{tpu_custom_call.1} parent=5 // pred_fallthru
        _
      %p153 = scmp.le.s32.totalorder 1, %s15
      %p154 = scmp.lt.s32.totalorder %s15, 3
      %p155 = pnand %p153, %p154
      %p156 = pneg %p155
      // Predicated region
      $region25: #{tpu_custom_call.1} parent=5 // pred_check
        _
      $region26: #{tpu_custom_call.1} parent=5 // pred_check_branch
        %158 = sbr.rel (%p155) target = $region28
      $region27: #{tpu_custom_call.1} parent=5 // pred_region
        %s159 = ssub.s32 %s15, 1
        %s160 = sand.u32 %s42, 1
        %s161 = scalar_lea.sflag [#allocation6], %s160
        %s162 = sand.u32 %s42, 1
        %s163 = smul.addr %s162, 8
        %s164 = scalar_lea.vmem [#allocation5], %s163
        // Predicated region
        $region29: #{tpu_custom_call.1} parent=27 // pred_check
          %p165 = pneg %p55
        $region30: #{tpu_custom_call.1} parent=27 // pred_check_branch
          %167 = sbr.rel (%p165) target = $region32
        $region31: #{tpu_custom_call.1} parent=27 // pred_region
          %169 = dma.done %s161, 128
        $region32: #{tpu_custom_call.1} parent=27 // pred_fallthru
          _
        // Predicated region
        $region33: #{tpu_custom_call.1} parent=27 // pred_check
          %p170 = pneg %p76
        $region34: #{tpu_custom_call.1} parent=27 // pred_check_branch
          %172 = sbr.rel (%p170) target = $region36
        $region35: #{tpu_custom_call.1} parent=27 // pred_region
          %174 = dma.done [#allocation8], 16
        $region36: #{tpu_custom_call.1} parent=27 // pred_fallthru
          _
        %175 = sfence
        %s176 = sand.u32 %s42, 1
        %s177 = scalar_lea.sflag [#allocation6], %s176
        %s178 = sand.u32 %s42, 1
        %s179 = smul.addr %s178, 8
        %s180 = scalar_lea.vmem [#allocation5], %s179
        %p181 = pneg %p55
        %p182 = pneg %p52
        %p183 = pneg %p76
        %p184 = pneg %p73
        %p185 = pneg %p102
        %p186 = pneg %p99
        %s187 = sand.u32 %s89, 1
        %s188 = scalar_lea.sflag [#allocation7], %s187
        %s189 = sand.u32 %s89, 1
        %s190 = smul.addr %s189, 16
        %s191 = scalar_lea.vmem [#allocation10], %s190
        %v192 = vld [vmem:[%s164] sm:$0xff]
        %194 = vst [vmem:[#allocation1] ss:$2 sm:$0xff] %v192
        %v195 = vld.sshfl [vmem:[#allocation1] sm:$0xff pattern:$0x75316420]
        %v196 = vld.sshfl [vmem:[#allocation1 + $0x8] sm:$0xff pattern:$0x75316420]
        %vm199 = vcmask 1043456
        %v200 = vsel %vm199, %v195, 0.0
        %v201 = vrot.slane %v200, 4
        %v202 = vadd.f32 %v200, %v201
        %v203 = vrot.slane %v202, 2
        %v204 = vadd.f32 %v202, %v203
        %v205 = vrot.slane %v204, 1
        %v206 = vadd.f32 %v204, %v205
        %v207 = vsel %vm199, %v196, 0.0
        %v208 = vrot.slane %v207, 4
        %v209 = vadd.f32 %v207, %v208
        %v210 = vrot.slane %v209, 2
        %v211 = vadd.f32 %v209, %v210
        %v212 = vrot.slane %v211, 1
        %v213 = vadd.f32 %v211, %v212
        %214 = vst [vmem:[#allocation1] ss:$2 sm:$0xff] %v192
        %v215 = vld.sshfl [vmem:[#allocation1] sm:$0xff pattern:$0x75316420]
        %v216 = vld.sshfl [vmem:[#allocation1 + $0x8] sm:$0xff pattern:$0x75316420]
        %v219 = vsel %vm199, %v215, -inf
        %v220 = vrot.slane %v219, 4
        %v221 = vmax.f32 %v219, %v220
        %v222 = vrot.slane %v221, 2
        %v223 = vmax.f32 %v221, %v222
        %v224 = vrot.slane %v223, 1
        %v225 = vmax.f32 %v223, %v224
        %v226 = vsel %vm199, %v216, -inf
        %v227 = vrot.slane %v226, 4
        %v228 = vmax.f32 %v226, %v227
        %v229 = vrot.slane %v228, 2
        %v230 = vmax.f32 %v228, %v229
        %v231 = vrot.slane %v230, 1
        %v232 = vmax.f32 %v230, %v231
        %p233 = scmp.eq.s32.totalorder %s25, 0
        // Predicated region
        $region37: #{tpu_custom_call.1} parent=27 // pred_check
          %p234 = pneg %p233
        $region38: #{tpu_custom_call.1} parent=27 // pred_check_branch
          %236 = sbr.rel (%p234) target = $region40
        $region39: #{tpu_custom_call.1} parent=27 // pred_region
          %v239 = vrot.slane %v213, 7
          %vm240 = vcmask 1040384
          %v241 = vsel %vm240, %v206, %v239
          %v243 = vlaneseq
          %vm244 = vcmp.ge.s32.totalorder %v243, 0
          %vm245 = vcmp.lt.s32.totalorder %v243, 256
          %vm246 = vmand %vm244, %vm245
          %247 = vst.msk [vmem:[#allocation2] sm:$0x3] %vm246, %v241
          %v250 = vrot.slane %v232, 7
          %v251 = vsel %vm240, %v225, %v250
          %253 = vst.msk [vmem:[#allocation3] sm:$0x3] %vm246, %v251
        $region40: #{tpu_custom_call.1} parent=27 // pred_fallthru
          _
        %p254 = scmp.gt.s32.totalorder %s25, 0
        // Predicated region
        $region41: #{tpu_custom_call.1} parent=27 // pred_check
          %p255 = pneg %p254
        $region42: #{tpu_custom_call.1} parent=27 // pred_check_branch
          %257 = sbr.rel (%p255) target = $region44
        $region43: #{tpu_custom_call.1} parent=27 // pred_region
          %v258 = vld [vmem:[#allocation2] sm:$0x3]
          %v261 = vrot.slane %v213, 7
          %vm262 = vcmask 1040384
          %v263 = vsel %vm262, %v206, %v261
          %v265 = vadd.f32 %v258, %v263
          %v266 = vlaneseq
          %vm267 = vcmp.ge.s32.totalorder %v266, 0
          %vm268 = vcmp.lt.s32.totalorder %v266, 256
          %vm269 = vmand %vm267, %vm268
          %270 = vst.msk [vmem:[#allocation2] sm:$0x3] %vm269, %v265
          %v271 = vld [vmem:[#allocation3] sm:$0x3]
          %v274 = vrot.slane %v232, 7
          %v275 = vsel %vm262, %v225, %v274
          %v277 = vmax.f32 %v271, %v275
          %278 = vst.msk [vmem:[#allocation3] sm:$0x3] %vm269, %v277
        $region44: #{tpu_custom_call.1} parent=27 // pred_fallthru
          _
        // Predicated region
        $region45: #{tpu_custom_call.1} parent=27 // pred_check
          %p279 = pneg %p233
        $region46: #{tpu_custom_call.1} parent=27 // pred_check_branch
          %281 = sbr.rel (%p279) target = $region48
        $region47: #{tpu_custom_call.1} parent=27 // pred_region
          %vm282 = vcmask 174080
          %283 = vst.msk [vmem:[#allocation4] sm:$0x7] %vm282, 0.0
          %284 = vst.msk [vmem:[#allocation4 + $0x13] sm:$0x7] %vm282, 0.0
          %vm285 = vcmask 23552
          %286 = vst.msk [vmem:[#allocation4] sm:$0xff] %vm285, 0.0
          %287 = vst.msk [vmem:[#allocation4 + $0x8] sm:$0xff] %vm285, 0.0
          %vm288 = vcmask 21504
          %289 = vst.msk [vmem:[#allocation4 + $0x10] sm:$0x3f] %vm288, 0.0
          %vm290 = vcmask 179352
          %291 = vst.msk [vmem:[#allocation4] sm:$0xff] %vm290, 0.0
          %292 = vst.msk [vmem:[#allocation4 + $0x8] sm:$0xff] %vm290, 0.0
          %vm293 = vcmask 177304
          %294 = vst.msk [vmem:[#allocation4 + $0x10] sm:$0x3f] %vm293, 0.0
          %s295 = scalar_lea.vmem [#allocation4], 24
          %296 = vst.msk [vmem:[%s295] sm:$0x7] %vm282, 0.0
          %297 = vst.msk [vmem:[%s295 + $0x13] sm:$0x7] %vm282, 0.0
          %298 = vst.msk [vmem:[%s295] sm:$0xff] %vm285, 0.0
          %299 = vst.msk [vmem:[%s295 + $0x8] sm:$0xff] %vm285, 0.0
          %300 = vst.msk [vmem:[%s295 + $0x10] sm:$0x3f] %vm288, 0.0
          %301 = vst.msk [vmem:[%s295] sm:$0xff] %vm290, 0.0
          %302 = vst.msk [vmem:[%s295 + $0x8] sm:$0xff] %vm290, 0.0
          %303 = vst.msk [vmem:[%s295 + $0x10] sm:$0x3f] %vm293, 0.0
          %v304 = vld [vmem:[#allocation2] sm:$0x1]
          %v306 = vperm.slane %v304, 0
          %307 = vrot.lane.b32.xlu0 %v306, 3
          %v308 = vpop.permute.xlu0 %307
          %vm310 = vcmask 147480
          %311 = vst.msk [vmem:[#allocation4 + $0x3] sm:$0x1] %vm310, %v308
          %v312 = vld [vmem:[#allocation3] sm:$0x1]
          %v314 = vperm.slane %v312, 0
          %315 = vrot.lane.b32.xlu0 %v314, 3
          %v316 = vpop.permute.xlu0 %315
          %318 = vst.msk [vmem:[%s295 + $0x3] sm:$0x1] %vm310, %v316
          %v319 = vld [vmem:[#allocation2] sm:$0x1]
          %v321 = vperm.slane %v319, 0
          %322 = vrot.lane.b32.xlu0 %v321, 115
          %v323 = vpop.permute.xlu0 %322
          %325 = vst.msk [vmem:[#allocation4 + $0x4] sm:$0x1] %vm310, %v323
          %v326 = vld [vmem:[#allocation3] sm:$0x1]
          %v328 = vperm.slane %v326, 0
          %329 = vrot.lane.b32.xlu0 %v328, 115
          %v330 = vpop.permute.xlu0 %329
          %332 = vst.msk [vmem:[%s295 + $0x4] sm:$0x1] %vm310, %v330
          %v333 = vld [vmem:[#allocation2] sm:$0x1]
          %v335 = vperm.slane %v333, 0
          %336 = vrot.lane.b32.xlu0 %v335, 99
          %v337 = vpop.permute.xlu0 %336
          %339 = vst.msk [vmem:[#allocation4 + $0x5] sm:$0x1] %vm310, %v337
          %v340 = vld [vmem:[#allocation3] sm:$0x1]
          %v342 = vperm.slane %v340, 0
          %343 = vrot.lane.b32.xlu0 %v342, 99
          %v344 = vpop.permute.xlu0 %343
          %346 = vst.msk [vmem:[%s295 + $0x5] sm:$0x1] %vm310, %v344
          %v347 = vld [vmem:[#allocation2] sm:$0x1]
          %v349 = vperm.slane %v347, 0
          %350 = vrot.lane.b32.xlu0 %v349, 83
          %v351 = vpop.permute.xlu0 %350
          %353 = vst.msk [vmem:[#allocation4 + $0x6] sm:$0x1] %vm310, %v351
          %v354 = vld [vmem:[#allocation3] sm:$0x1]
          %v356 = vperm.slane %v354, 0
          %357 = vrot.lane.b32.xlu0 %v356, 83
          %v358 = vpop.permute.xlu0 %357
          %360 = vst.msk [vmem:[%s295 + $0x6] sm:$0x1] %vm310, %v358
          %v361 = vld [vmem:[#allocation2] sm:$0x1]
          %v363 = vperm.slane %v361, 0
          %364 = vrot.lane.b32.xlu0 %v363, 67
          %v365 = vpop.permute.xlu0 %364
          %367 = vst.msk [vmem:[#allocation4 + $0x7] sm:$0x1] %vm310, %v365
          %v368 = vld [vmem:[#allocation3] sm:$0x1]
          %v370 = vperm.slane %v368, 0
          %371 = vrot.lane.b32.xlu0 %v370, 67
          %v372 = vpop.permute.xlu0 %371
          %374 = vst.msk [vmem:[%s295 + $0x7] sm:$0x1] %vm310, %v372
          %v375 = vld [vmem:[#allocation2] sm:$0x1]
          %v377 = vperm.slane %v375, 0
          %378 = vrot.lane.b32.xlu0 %v377, 51
          %v379 = vpop.permute.xlu0 %378
          %381 = vst.msk [vmem:[#allocation4 + $0x8] sm:$0x1] %vm310, %v379
          %v382 = vld [vmem:[#allocation3] sm:$0x1]
          %v384 = vperm.slane %v382, 0
          %385 = vrot.lane.b32.xlu0 %v384, 51
          %v386 = vpop.permute.xlu0 %385
          %388 = vst.msk [vmem:[%s295 + $0x8] sm:$0x1] %vm310, %v386
          %v389 = vld [vmem:[#allocation2] sm:$0x1]
          %v391 = vperm.slane %v389, 0
          %392 = vrot.lane.b32.xlu0 %v391, 35
          %v393 = vpop.permute.xlu0 %392
          %395 = vst.msk [vmem:[#allocation4 + $0x9] sm:$0x1] %vm310, %v393
          %v396 = vld [vmem:[#allocation3] sm:$0x1]
          %v398 = vperm.slane %v396, 0
          %399 = vrot.lane.b32.xlu0 %v398, 35
          %v400 = vpop.permute.xlu0 %399
          %402 = vst.msk [vmem:[%s295 + $0x9] sm:$0x1] %vm310, %v400
          %v403 = vld [vmem:[#allocation2] sm:$0x1]
          %v405 = vperm.slane %v403, 0
          %406 = vrot.lane.b32.xlu0 %v405, 19
          %v407 = vpop.permute.xlu0 %406
          %409 = vst.msk [vmem:[#allocation4 + $0xa] sm:$0x1] %vm310, %v407
          %v410 = vld [vmem:[#allocation3] sm:$0x1]
          %v412 = vperm.slane %v410, 0
          %413 = vrot.lane.b32.xlu0 %v412, 19
          %v414 = vpop.permute.xlu0 %413
          %416 = vst.msk [vmem:[%s295 + $0xa] sm:$0x1] %vm310, %v414
          %v417 = vld [vmem:[#allocation2 + $0x1] sm:$0x1]
          %v419 = vperm.slane %v417, 0
          %420 = vrot.lane.b32.xlu0 %v419, 3
          %v421 = vpop.permute.xlu0 %420
          %423 = vst.msk [vmem:[#allocation4 + $0xb] sm:$0x1] %vm310, %v421
          %v424 = vld [vmem:[#allocation3 + $0x1] sm:$0x1]
          %v426 = vperm.slane %v424, 0
          %427 = vrot.lane.b32.xlu0 %v426, 3
          %v428 = vpop.permute.xlu0 %427
          %430 = vst.msk [vmem:[%s295 + $0xb] sm:$0x1] %vm310, %v428
          %v431 = vld [vmem:[#allocation2 + $0x1] sm:$0x1]
          %v433 = vperm.slane %v431, 0
          %434 = vrot.lane.b32.xlu0 %v433, 115
          %v435 = vpop.permute.xlu0 %434
          %437 = vst.msk [vmem:[#allocation4 + $0xc] sm:$0x1] %vm310, %v435
          %v438 = vld [vmem:[#allocation3 + $0x1] sm:$0x1]
          %v440 = vperm.slane %v438, 0
          %441 = vrot.lane.b32.xlu0 %v440, 115
          %v442 = vpop.permute.xlu0 %441
          %444 = vst.msk [vmem:[%s295 + $0xc] sm:$0x1] %vm310, %v442
          %v445 = vld [vmem:[#allocation2 + $0x1] sm:$0x1]
          %v447 = vperm.slane %v445, 0
          %448 = vrot.lane.b32.xlu0 %v447, 99
          %v449 = vpop.permute.xlu0 %448
          %451 = vst.msk [vmem:[#allocation4 + $0xd] sm:$0x1] %vm310, %v449
          %v452 = vld [vmem:[#allocation3 + $0x1] sm:$0x1]
          %v454 = vperm.slane %v452, 0
          %455 = vrot.lane.b32.xlu0 %v454, 99
          %v456 = vpop.permute.xlu0 %455
          %458 = vst.msk [vmem:[%s295 + $0xd] sm:$0x1] %vm310, %v456
          %v459 = vld [vmem:[#allocation2 + $0x1] sm:$0x1]
          %v461 = vperm.slane %v459, 0
          %462 = vrot.lane.b32.xlu0 %v461, 83
          %v463 = vpop.permute.xlu0 %462
          %465 = vst.msk [vmem:[#allocation4 + $0xe] sm:$0x1] %vm310, %v463
          %v466 = vld [vmem:[#allocation3 + $0x1] sm:$0x1]
          %v468 = vperm.slane %v466, 0
          %469 = vrot.lane.b32.xlu0 %v468, 83
          %v470 = vpop.permute.xlu0 %469
          %472 = vst.msk [vmem:[%s295 + $0xe] sm:$0x1] %vm310, %v470
          %v473 = vld [vmem:[#allocation2 + $0x1] sm:$0x1]
          %v475 = vperm.slane %v473, 0
          %476 = vrot.lane.b32.xlu0 %v475, 67
          %v477 = vpop.permute.xlu0 %476
          %479 = vst.msk [vmem:[#allocation4 + $0xf] sm:$0x1] %vm310, %v477
          %v480 = vld [vmem:[#allocation3 + $0x1] sm:$0x1]
          %v482 = vperm.slane %v480, 0
          %483 = vrot.lane.b32.xlu0 %v482, 67
          %v484 = vpop.permute.xlu0 %483
          %486 = vst.msk [vmem:[%s295 + $0xf] sm:$0x1] %vm310, %v484
          %v487 = vld [vmem:[#allocation2 + $0x1] sm:$0x1]
          %v489 = vperm.slane %v487, 0
          %490 = vrot.lane.b32.xlu0 %v489, 51
          %v491 = vpop.permute.xlu0 %490
          %493 = vst.msk [vmem:[#allocation4 + $0x10] sm:$0x1] %vm310, %v491
          %v494 = vld [vmem:[#allocation3 + $0x1] sm:$0x1]
          %v496 = vperm.slane %v494, 0
          %497 = vrot.lane.b32.xlu0 %v496, 51
          %v498 = vpop.permute.xlu0 %497
          %500 = vst.msk [vmem:[%s295 + $0x10] sm:$0x1] %vm310, %v498
          %v501 = vld [vmem:[#allocation2 + $0x1] sm:$0x1]
          %v503 = vperm.slane %v501, 0
          %504 = vrot.lane.b32.xlu0 %v503, 35
          %v505 = vpop.permute.xlu0 %504
          %507 = vst.msk [vmem:[#allocation4 + $0x11] sm:$0x1] %vm310, %v505
          %v508 = vld [vmem:[#allocation3 + $0x1] sm:$0x1]
          %v510 = vperm.slane %v508, 0
          %511 = vrot.lane.b32.xlu0 %v510, 35
          %v512 = vpop.permute.xlu0 %511
          %514 = vst.msk [vmem:[%s295 + $0x11] sm:$0x1] %vm310, %v512
          %v515 = vld [vmem:[#allocation2 + $0x1] sm:$0x1]
          %v517 = vperm.slane %v515, 0
          %518 = vrot.lane.b32.xlu0 %v517, 19
          %v519 = vpop.permute.xlu0 %518
          %521 = vst.msk [vmem:[#allocation4 + $0x12] sm:$0x1] %vm310, %v519
          %v522 = vld [vmem:[#allocation3 + $0x1] sm:$0x1]
          %v524 = vperm.slane %v522, 0
          %525 = vrot.lane.b32.xlu0 %v524, 19
          %v526 = vpop.permute.xlu0 %525
          %528 = vst.msk [vmem:[%s295 + $0x12] sm:$0x1] %vm310, %v526
          %s529 = sld [smem:[#allocation9]]
          %s530 = smul.f32 %s529, 0.25
          %s531 = sld [smem:[#allocation9 + $0x31]]
          %v532 = vld [vmem:[#allocation4] sm:$0xff]
          %v533 = vld [vmem:[#allocation4 + $0x8] sm:$0xff]
          %v534 = vld [vmem:[%s295] sm:$0xff]
          %v535 = vld [vmem:[%s295 + $0x8] sm:$0xff]
          %v536 = vstv %s530
          %v537 = vmul.f32 %v532, %v536
          %v538 = vmul.f32 %v533, %v536
          %v539 = vstv %s531
          %v540 = vmul.f32 %v534, %v539
          %v541 = vmul.f32 %v535, %v539
          %v542 = vadd.f32 %v537, %v540
          %v543 = vadd.f32 %v538, %v541
          %v544 = vadd.f32 %v542, 0.0
          %v545 = vadd.f32 %v543, 0.0
          %s546 = sld [smem:[#allocation9 + $0x1]]
          %s547 = smul.f32 %s546, 0.25
          %s548 = sld [smem:[#allocation9 + $0x32]]
          %v549 = vstv %s547
          %v550 = vmul.f32 %v532, %v549
          %v551 = vmul.f32 %v533, %v549
          %v552 = vstv %s548
          %v553 = vmul.f32 %v534, %v552
          %v554 = vmul.f32 %v535, %v552
          %v555 = vadd.f32 %v550, %v553
          %v556 = vadd.f32 %v551, %v554
          %v557 = vadd.f32 %v555, 0.0
          %v558 = vadd.f32 %v556, 0.0
          %s559 = sld [smem:[#allocation9 + $0x2]]
          %s560 = smul.f32 %s559, 0.25
          %s561 = sld [smem:[#allocation9 + $0x33]]
          %v562 = vstv %s560
          %v563 = vmul.f32 %v532, %v562
          %v564 = vmul.f32 %v533, %v562
          %v565 = vstv %s561
          %v566 = vmul.f32 %v534, %v565
          %v567 = vmul.f32 %v535, %v565
          %v568 = vadd.f32 %v563, %v566
          %v569 = vadd.f32 %v564, %v567
          %572 = vrot.lane.b32.xlu0 %v568, 126
          %v573 = vpop.permute.xlu0 %572
          %574 = vrot.lane.b32.xlu0 %v569, 126
          %v575 = vpop.permute.xlu0 %574
          %v578 = vadd.f32 %v544, %v573
          %v579 = vadd.f32 %v545, %v575
          %s580 = sld [smem:[#allocation9 + $0x3]]
          %s581 = smul.f32 %s580, 0.25
          %s582 = sld [smem:[#allocation9 + $0x34]]
          %v583 = vstv %s581
          %v584 = vmul.f32 %v532, %v583
          %v585 = vmul.f32 %v533, %v583
          %v586 = vstv %s582
          %v587 = vmul.f32 %v534, %v586
          %v588 = vmul.f32 %v535, %v586
          %v589 = vadd.f32 %v584, %v587
          %v590 = vadd.f32 %v585, %v588
          %593 = vrot.lane.b32.xlu0 %v589, 126
          %v594 = vpop.permute.xlu0 %593
          %595 = vrot.lane.b32.xlu0 %v590, 126
          %v596 = vpop.permute.xlu0 %595
          %v599 = vadd.f32 %v557, %v594
          %v600 = vadd.f32 %v558, %v596
          %s601 = sld [smem:[#allocation9 + $0x4]]
          %s602 = smul.f32 %s601, 0.25
          %s603 = sld [smem:[#allocation9 + $0x35]]
          %v604 = vstv %s602
          %v605 = vmul.f32 %v532, %v604
          %v606 = vmul.f32 %v533, %v604
          %v607 = vstv %s603
          %v608 = vmul.f32 %v534, %v607
          %v609 = vmul.f32 %v535, %v607
          %v610 = vadd.f32 %v605, %v608
          %v611 = vadd.f32 %v606, %v609
          %614 = vrot.lane.b32.xlu0 %v610, 124
          %v615 = vpop.permute.xlu0 %614
          %616 = vrot.lane.b32.xlu0 %v611, 124
          %v617 = vpop.permute.xlu0 %616
          %v620 = vadd.f32 %v578, %v615
          %v621 = vadd.f32 %v579, %v617
          %s622 = sld [smem:[#allocation9 + $0x5]]
          %s623 = smul.f32 %s622, 0.25
          %s624 = sld [smem:[#allocation9 + $0x36]]
          %v625 = vstv %s623
          %v626 = vmul.f32 %v532, %v625
          %v627 = vmul.f32 %v533, %v625
          %v628 = vstv %s624
          %v629 = vmul.f32 %v534, %v628
          %v630 = vmul.f32 %v535, %v628
          %v631 = vadd.f32 %v626, %v629
          %v632 = vadd.f32 %v627, %v630
          %635 = vrot.lane.b32.xlu0 %v631, 124
          %v636 = vpop.permute.xlu0 %635
          %637 = vrot.lane.b32.xlu0 %v632, 124
          %v638 = vpop.permute.xlu0 %637
          %v641 = vadd.f32 %v599, %v636
          %v642 = vadd.f32 %v600, %v638
          %s643 = sld [smem:[#allocation9 + $0x6]]
          %s644 = smul.f32 %s643, 0.25
          %s645 = sld [smem:[#allocation9 + $0x37]]
          %v646 = vstv %s644
          %v647 = vmul.f32 %v532, %v646
          %v648 = vmul.f32 %v533, %v646
          %v649 = vstv %s645
          %v650 = vmul.f32 %v534, %v649
          %v651 = vmul.f32 %v535, %v649
          %v652 = vadd.f32 %v647, %v650
          %v653 = vadd.f32 %v648, %v651
          %656 = vrot.lane.b32.xlu0 %v652, 122
          %v657 = vpop.permute.xlu0 %656
          %658 = vrot.lane.b32.xlu0 %v653, 122
          %v659 = vpop.permute.xlu0 %658
          %v662 = vadd.f32 %v620, %v657
          %v663 = vadd.f32 %v621, %v659
          %s664 = sld [smem:[#allocation9 + $0x7]]
          %s665 = smul.f32 %s664, 0.25
          %s666 = sld [smem:[#allocation9 + $0x38]]
          %v667 = vld [vmem:[#allocation4 + $0x1] sm:$0xff]
          %v668 = vld [vmem:[#allocation4 + $0x9] sm:$0xff]
          %v669 = vld [vmem:[%s295 + $0x1] sm:$0xff]
          %v670 = vld [vmem:[%s295 + $0x9] sm:$0xff]
          %v671 = vstv %s665
          %v672 = vmul.f32 %v667, %v671
          %v673 = vmul.f32 %v668, %v671
          %v674 = vstv %s666
          %v675 = vmul.f32 %v669, %v674
          %v676 = vmul.f32 %v670, %v674
          %v677 = vadd.f32 %v672, %v675
          %v678 = vadd.f32 %v673, %v676
          %681 = vrot.lane.b32.xlu0 %v677, 1
          %v682 = vpop.permute.xlu0 %681
          %683 = vrot.lane.b32.xlu0 %v678, 1
          %v684 = vpop.permute.xlu0 %683
          %v687 = vadd.f32 %v641, %v682
          %v688 = vadd.f32 %v642, %v684
          %s689 = sld [smem:[#allocation9 + $0x8]]
          %s690 = smul.f32 %s689, 0.25
          %s691 = sld [smem:[#allocation9 + $0x39]]
          %v692 = vstv %s690
          %v693 = vmul.f32 %v667, %v692
          %v694 = vmul.f32 %v668, %v692
          %v695 = vstv %s691
          %v696 = vmul.f32 %v669, %v695
          %v697 = vmul.f32 %v670, %v695
          %v698 = vadd.f32 %v693, %v696
          %v699 = vadd.f32 %v694, %v697
          %702 = vrot.lane.b32.xlu0 %v698, 127
          %v703 = vpop.permute.xlu0 %702
          %704 = vrot.lane.b32.xlu0 %v699, 127
          %v705 = vpop.permute.xlu0 %704
          %v708 = vadd.f32 %v662, %v703
          %v709 = vadd.f32 %v663, %v705
          %s710 = sld [smem:[#allocation9 + $0x9]]
          %s711 = smul.f32 %s710, 0.25
          %s712 = sld [smem:[#allocation9 + $0x3a]]
          %v713 = vstv %s711
          %v714 = vmul.f32 %v667, %v713
          %v715 = vmul.f32 %v668, %v713
          %v716 = vstv %s712
          %v717 = vmul.f32 %v669, %v716
          %v718 = vmul.f32 %v670, %v716
          %v719 = vadd.f32 %v714, %v717
          %v720 = vadd.f32 %v715, %v718
          %723 = vrot.lane.b32.xlu0 %v719, 127
          %v724 = vpop.permute.xlu0 %723
          %725 = vrot.lane.b32.xlu0 %v720, 127
          %v726 = vpop.permute.xlu0 %725
          %v729 = vadd.f32 %v687, %v724
          %v730 = vadd.f32 %v688, %v726
          %s731 = sld [smem:[#allocation9 + $0xa]]
          %s732 = smul.f32 %s731, 0.25
          %s733 = sld [smem:[#allocation9 + $0x3b]]
          %v734 = vstv %s732
          %v735 = vmul.f32 %v667, %v734
          %v736 = vmul.f32 %v668, %v734
          %v737 = vstv %s733
          %v738 = vmul.f32 %v669, %v737
          %v739 = vmul.f32 %v670, %v737
          %v740 = vadd.f32 %v735, %v738
          %v741 = vadd.f32 %v736, %v739
          %744 = vrot.lane.b32.xlu0 %v740, 125
          %v745 = vpop.permute.xlu0 %744
          %746 = vrot.lane.b32.xlu0 %v741, 125
          %v747 = vpop.permute.xlu0 %746
          %v750 = vadd.f32 %v708, %v745
          %v751 = vadd.f32 %v709, %v747
          %s752 = sld [smem:[#allocation9 + $0xb]]
          %s753 = smul.f32 %s752, 0.25
          %s754 = sld [smem:[#allocation9 + $0x3c]]
          %v755 = vstv %s753
          %v756 = vmul.f32 %v667, %v755
          %v757 = vmul.f32 %v668, %v755
          %v758 = vstv %s754
          %v759 = vmul.f32 %v669, %v758
          %v760 = vmul.f32 %v670, %v758
          %v761 = vadd.f32 %v756, %v759
          %v762 = vadd.f32 %v757, %v760
          %765 = vrot.lane.b32.xlu0 %v761, 125
          %v766 = vpop.permute.xlu0 %765
          %767 = vrot.lane.b32.xlu0 %v762, 125
          %v768 = vpop.permute.xlu0 %767
          %v771 = vadd.f32 %v729, %v766
          %v772 = vadd.f32 %v730, %v768
          %s773 = sld [smem:[#allocation9 + $0xc]]
          %s774 = smul.f32 %s773, 0.25
          %s775 = sld [smem:[#allocation9 + $0x3d]]
          %v776 = vstv %s774
          %v777 = vmul.f32 %v667, %v776
          %v778 = vmul.f32 %v668, %v776
          %v779 = vstv %s775
          %v780 = vmul.f32 %v669, %v779
          %v781 = vmul.f32 %v670, %v779
          %v782 = vadd.f32 %v777, %v780
          %v783 = vadd.f32 %v778, %v781
          %786 = vrot.lane.b32.xlu0 %v782, 123
          %v787 = vpop.permute.xlu0 %786
          %788 = vrot.lane.b32.xlu0 %v783, 123
          %v789 = vpop.permute.xlu0 %788
          %v792 = vadd.f32 %v750, %v787
          %v793 = vadd.f32 %v751, %v789
          %s794 = sld [smem:[#allocation9 + $0xd]]
          %s795 = smul.f32 %s794, 0.25
          %s796 = sld [smem:[#allocation9 + $0x3e]]
          %v797 = vstv %s795
          %v798 = vmul.f32 %v667, %v797
          %v799 = vmul.f32 %v668, %v797
          %v800 = vstv %s796
          %v801 = vmul.f32 %v669, %v800
          %v802 = vmul.f32 %v670, %v800
          %v803 = vadd.f32 %v798, %v801
          %v804 = vadd.f32 %v799, %v802
          %807 = vrot.lane.b32.xlu0 %v803, 123
          %v808 = vpop.permute.xlu0 %807
          %809 = vrot.lane.b32.xlu0 %v804, 123
          %v810 = vpop.permute.xlu0 %809
          %v813 = vadd.f32 %v771, %v808
          %v814 = vadd.f32 %v772, %v810
          %s815 = sld [smem:[#allocation9 + $0xe]]
          %s816 = smul.f32 %s815, 0.25
          %s817 = sld [smem:[#allocation9 + $0x3f]]
          %v818 = vld [vmem:[#allocation4 + $0x2] sm:$0xff]
          %v819 = vld [vmem:[#allocation4 + $0xa] sm:$0xff]
          %v820 = vld [vmem:[%s295 + $0x2] sm:$0xff]
          %v821 = vld [vmem:[%s295 + $0xa] sm:$0xff]
          %v822 = vstv %s816
          %v823 = vmul.f32 %v818, %v822
          %v824 = vmul.f32 %v819, %v822
          %v825 = vstv %s817
          %v826 = vmul.f32 %v820, %v825
          %v827 = vmul.f32 %v821, %v825
          %v828 = vadd.f32 %v823, %v826
          %v829 = vadd.f32 %v824, %v827
          %v830 = vadd.f32 %v792, %v828
          %v831 = vadd.f32 %v793, %v829
          %s832 = sld [smem:[#allocation9 + $0xf]]
          %s833 = smul.f32 %s832, 0.25
          %s834 = sld [smem:[#allocation9 + $0x40]]
          %v835 = vstv %s833
          %v836 = vmul.f32 %v818, %v835
          %v837 = vmul.f32 %v819, %v835
          %v838 = vstv %s834
          %v839 = vmul.f32 %v820, %v838
          %v840 = vmul.f32 %v821, %v838
          %v841 = vadd.f32 %v836, %v839
          %v842 = vadd.f32 %v837, %v840
          %v843 = vadd.f32 %v813, %v841
          %v844 = vadd.f32 %v814, %v842
          %s845 = sld [smem:[#allocation9 + $0x10]]
          %s846 = smul.f32 %s845, 0.25
          %s847 = sld [smem:[#allocation9 + $0x41]]
          %v848 = vstv %s846
          %v849 = vmul.f32 %v818, %v848
          %v850 = vmul.f32 %v819, %v848
          %v851 = vstv %s847
          %v852 = vmul.f32 %v820, %v851
          %v853 = vmul.f32 %v821, %v851
          %v854 = vadd.f32 %v849, %v852
          %v855 = vadd.f32 %v850, %v853
          %858 = vrot.lane.b32.xlu0 %v854, 126
          %v859 = vpop.permute.xlu0 %858
          %860 = vrot.lane.b32.xlu0 %v855, 126
          %v861 = vpop.permute.xlu0 %860
          %v864 = vadd.f32 %v830, %v859
          %v865 = vadd.f32 %v831, %v861
          %s866 = sld [smem:[#allocation9 + $0x11]]
          %s867 = smul.f32 %s866, 0.25
          %s868 = sld [smem:[#allocation9 + $0x42]]
          %v869 = vstv %s867
          %v870 = vmul.f32 %v818, %v869
          %v871 = vmul.f32 %v819, %v869
          %v872 = vstv %s868
          %v873 = vmul.f32 %v820, %v872
          %v874 = vmul.f32 %v821, %v872
          %v875 = vadd.f32 %v870, %v873
          %v876 = vadd.f32 %v871, %v874
          %879 = vrot.lane.b32.xlu0 %v875, 126
          %v880 = vpop.permute.xlu0 %879
          %881 = vrot.lane.b32.xlu0 %v876, 126
          %v882 = vpop.permute.xlu0 %881
          %v885 = vadd.f32 %v843, %v880
          %v886 = vadd.f32 %v844, %v882
          %s887 = sld [smem:[#allocation9 + $0x12]]
          %s888 = smul.f32 %s887, 0.25
          %s889 = sld [smem:[#allocation9 + $0x43]]
          %v890 = vstv %s888
          %v891 = vmul.f32 %v818, %v890
          %v892 = vmul.f32 %v819, %v890
          %v893 = vstv %s889
          %v894 = vmul.f32 %v820, %v893
          %v895 = vmul.f32 %v821, %v893
          %v896 = vadd.f32 %v891, %v894
          %v897 = vadd.f32 %v892, %v895
          %900 = vrot.lane.b32.xlu0 %v896, 124
          %v901 = vpop.permute.xlu0 %900
          %902 = vrot.lane.b32.xlu0 %v897, 124
          %v903 = vpop.permute.xlu0 %902
          %v906 = vadd.f32 %v864, %v901
          %v907 = vadd.f32 %v865, %v903
          %s908 = sld [smem:[#allocation9 + $0x13]]
          %s909 = smul.f32 %s908, 0.25
          %s910 = sld [smem:[#allocation9 + $0x44]]
          %v911 = vstv %s909
          %v912 = vmul.f32 %v818, %v911
          %v913 = vmul.f32 %v819, %v911
          %v914 = vstv %s910
          %v915 = vmul.f32 %v820, %v914
          %v916 = vmul.f32 %v821, %v914
          %v917 = vadd.f32 %v912, %v915
          %v918 = vadd.f32 %v913, %v916
          %921 = vrot.lane.b32.xlu0 %v917, 124
          %v922 = vpop.permute.xlu0 %921
          %923 = vrot.lane.b32.xlu0 %v918, 124
          %v924 = vpop.permute.xlu0 %923
          %v927 = vadd.f32 %v885, %v922
          %v928 = vadd.f32 %v886, %v924
          %s929 = sld [smem:[#allocation9 + $0x14]]
          %s930 = smul.f32 %s929, 0.25
          %s931 = sld [smem:[#allocation9 + $0x45]]
          %v932 = vstv %s930
          %v933 = vmul.f32 %v818, %v932
          %v934 = vmul.f32 %v819, %v932
          %v935 = vstv %s931
          %v936 = vmul.f32 %v820, %v935
          %v937 = vmul.f32 %v821, %v935
          %v938 = vadd.f32 %v933, %v936
          %v939 = vadd.f32 %v934, %v937
          %942 = vrot.lane.b32.xlu0 %v938, 122
          %v943 = vpop.permute.xlu0 %942
          %944 = vrot.lane.b32.xlu0 %v939, 122
          %v945 = vpop.permute.xlu0 %944
          %v948 = vadd.f32 %v906, %v943
          %v949 = vadd.f32 %v907, %v945
          %s950 = sld [smem:[#allocation9 + $0x15]]
          %s951 = smul.f32 %s950, 0.25
          %s952 = sld [smem:[#allocation9 + $0x46]]
          %v953 = vld [vmem:[#allocation4 + $0x3] sm:$0xff]
          %v954 = vld [vmem:[#allocation4 + $0xb] sm:$0xff]
          %v955 = vld [vmem:[%s295 + $0x3] sm:$0xff]
          %v956 = vld [vmem:[%s295 + $0xb] sm:$0xff]
          %v957 = vstv %s951
          %v958 = vmul.f32 %v953, %v957
          %v959 = vmul.f32 %v954, %v957
          %v960 = vstv %s952
          %v961 = vmul.f32 %v955, %v960
          %v962 = vmul.f32 %v956, %v960
          %v963 = vadd.f32 %v958, %v961
          %v964 = vadd.f32 %v959, %v962
          %967 = vrot.lane.b32.xlu0 %v963, 1
          %v968 = vpop.permute.xlu0 %967
          %969 = vrot.lane.b32.xlu0 %v964, 1
          %v970 = vpop.permute.xlu0 %969
          %v973 = vadd.f32 %v927, %v968
          %v974 = vadd.f32 %v928, %v970
          %s975 = sld [smem:[#allocation9 + $0x16]]
          %s976 = smul.f32 %s975, 0.25
          %s977 = sld [smem:[#allocation9 + $0x47]]
          %v978 = vstv %s976
          %v979 = vmul.f32 %v953, %v978
          %v980 = vmul.f32 %v954, %v978
          %v981 = vstv %s977
          %v982 = vmul.f32 %v955, %v981
          %v983 = vmul.f32 %v956, %v981
          %v984 = vadd.f32 %v979, %v982
          %v985 = vadd.f32 %v980, %v983
          %988 = vrot.lane.b32.xlu0 %v984, 127
          %v989 = vpop.permute.xlu0 %988
          %990 = vrot.lane.b32.xlu0 %v985, 127
          %v991 = vpop.permute.xlu0 %990
          %v994 = vadd.f32 %v948, %v989
          %v995 = vadd.f32 %v949, %v991
          %s996 = sld [smem:[#allocation9 + $0x17]]
          %s997 = smul.f32 %s996, 0.25
          %s998 = sld [smem:[#allocation9 + $0x48]]
          %v999 = vstv %s997
          %v1000 = vmul.f32 %v953, %v999
          %v1001 = vmul.f32 %v954, %v999
          %v1002 = vstv %s998
          %v1003 = vmul.f32 %v955, %v1002
          %v1004 = vmul.f32 %v956, %v1002
          %v1005 = vadd.f32 %v1000, %v1003
          %v1006 = vadd.f32 %v1001, %v1004
          %1009 = vrot.lane.b32.xlu0 %v1005, 127
          %v1010 = vpop.permute.xlu0 %1009
          %1011 = vrot.lane.b32.xlu0 %v1006, 127
          %v1012 = vpop.permute.xlu0 %1011
          %v1015 = vadd.f32 %v973, %v1010
          %v1016 = vadd.f32 %v974, %v1012
          %s1017 = sld [smem:[#allocation9 + $0x18]]
          %s1018 = smul.f32 %s1017, 0.25
          %s1019 = sld [smem:[#allocation9 + $0x49]]
          %v1020 = vstv %s1018
          %v1021 = vmul.f32 %v953, %v1020
          %v1022 = vmul.f32 %v954, %v1020
          %v1023 = vstv %s1019
          %v1024 = vmul.f32 %v955, %v1023
          %v1025 = vmul.f32 %v956, %v1023
          %v1026 = vadd.f32 %v1021, %v1024
          %v1027 = vadd.f32 %v1022, %v1025
          %1030 = vrot.lane.b32.xlu0 %v1026, 125
          %v1031 = vpop.permute.xlu0 %1030
          %1032 = vrot.lane.b32.xlu0 %v1027, 125
          %v1033 = vpop.permute.xlu0 %1032
          %v1036 = vadd.f32 %v994, %v1031
          %v1037 = vadd.f32 %v995, %v1033
          %s1038 = sld [smem:[#allocation9 + $0x19]]
          %s1039 = smul.f32 %s1038, 0.25
          %s1040 = sld [smem:[#allocation9 + $0x4a]]
          %v1041 = vstv %s1039
          %v1042 = vmul.f32 %v953, %v1041
          %v1043 = vmul.f32 %v954, %v1041
          %v1044 = vstv %s1040
          %v1045 = vmul.f32 %v955, %v1044
          %v1046 = vmul.f32 %v956, %v1044
          %v1047 = vadd.f32 %v1042, %v1045
          %v1048 = vadd.f32 %v1043, %v1046
          %1051 = vrot.lane.b32.xlu0 %v1047, 125
          %v1052 = vpop.permute.xlu0 %1051
          %1053 = vrot.lane.b32.xlu0 %v1048, 125
          %v1054 = vpop.permute.xlu0 %1053
          %v1057 = vadd.f32 %v1015, %v1052
          %v1058 = vadd.f32 %v1016, %v1054
          %s1059 = sld [smem:[#allocation9 + $0x1a]]
          %s1060 = smul.f32 %s1059, 0.25
          %s1061 = sld [smem:[#allocation9 + $0x4b]]
          %v1062 = vstv %s1060
          %v1063 = vmul.f32 %v953, %v1062
          %v1064 = vmul.f32 %v954, %v1062
          %v1065 = vstv %s1061
          %v1066 = vmul.f32 %v955, %v1065
          %v1067 = vmul.f32 %v956, %v1065
          %v1068 = vadd.f32 %v1063, %v1066
          %v1069 = vadd.f32 %v1064, %v1067
          %1072 = vrot.lane.b32.xlu0 %v1068, 123
          %v1073 = vpop.permute.xlu0 %1072
          %1074 = vrot.lane.b32.xlu0 %v1069, 123
          %v1075 = vpop.permute.xlu0 %1074
          %v1078 = vadd.f32 %v1036, %v1073
          %v1079 = vadd.f32 %v1037, %v1075
          %s1080 = sld [smem:[#allocation9 + $0x1b]]
          %s1081 = smul.f32 %s1080, 0.25
          %s1082 = sld [smem:[#allocation9 + $0x4c]]
          %v1083 = vstv %s1081
          %v1084 = vmul.f32 %v953, %v1083
          %v1085 = vmul.f32 %v954, %v1083
          %v1086 = vstv %s1082
          %v1087 = vmul.f32 %v955, %v1086
          %v1088 = vmul.f32 %v956, %v1086
          %v1089 = vadd.f32 %v1084, %v1087
          %v1090 = vadd.f32 %v1085, %v1088
          %1093 = vrot.lane.b32.xlu0 %v1089, 123
          %v1094 = vpop.permute.xlu0 %1093
          %1095 = vrot.lane.b32.xlu0 %v1090, 123
          %v1096 = vpop.permute.xlu0 %1095
          %v1099 = vadd.f32 %v1057, %v1094
          %v1100 = vadd.f32 %v1058, %v1096
          %s1101 = sld [smem:[#allocation9 + $0x1c]]
          %s1102 = smul.f32 %s1101, 0.25
          %s1103 = sld [smem:[#allocation9 + $0x4d]]
          %v1104 = vld [vmem:[#allocation4 + $0x4] sm:$0xff]
          %v1105 = vld [vmem:[#allocation4 + $0xc] sm:$0xff]
          %v1106 = vld [vmem:[%s295 + $0x4] sm:$0xff]
          %v1107 = vld [vmem:[%s295 + $0xc] sm:$0xff]
          %v1108 = vstv %s1102
          %v1109 = vmul.f32 %v1104, %v1108
          %v1110 = vmul.f32 %v1105, %v1108
          %v1111 = vstv %s1103
          %v1112 = vmul.f32 %v1106, %v1111
          %v1113 = vmul.f32 %v1107, %v1111
          %v1114 = vadd.f32 %v1109, %v1112
          %v1115 = vadd.f32 %v1110, %v1113
          %v1116 = vadd.f32 %v1078, %v1114
          %v1117 = vadd.f32 %v1079, %v1115
          %s1118 = sld [smem:[#allocation9 + $0x1d]]
          %s1119 = smul.f32 %s1118, 0.25
          %s1120 = sld [smem:[#allocation9 + $0x4e]]
          %v1121 = vstv %s1119
          %v1122 = vmul.f32 %v1104, %v1121
          %v1123 = vmul.f32 %v1105, %v1121
          %v1124 = vstv %s1120
          %v1125 = vmul.f32 %v1106, %v1124
          %v1126 = vmul.f32 %v1107, %v1124
          %v1127 = vadd.f32 %v1122, %v1125
          %v1128 = vadd.f32 %v1123, %v1126
          %v1129 = vadd.f32 %v1099, %v1127
          %v1130 = vadd.f32 %v1100, %v1128
          %s1131 = sld [smem:[#allocation9 + $0x1e]]
          %s1132 = smul.f32 %s1131, 0.25
          %s1133 = sld [smem:[#allocation9 + $0x4f]]
          %v1134 = vstv %s1132
          %v1135 = vmul.f32 %v1104, %v1134
          %v1136 = vmul.f32 %v1105, %v1134
          %v1137 = vstv %s1133
          %v1138 = vmul.f32 %v1106, %v1137
          %v1139 = vmul.f32 %v1107, %v1137
          %v1140 = vadd.f32 %v1135, %v1138
          %v1141 = vadd.f32 %v1136, %v1139
          %1144 = vrot.lane.b32.xlu0 %v1140, 126
          %v1145 = vpop.permute.xlu0 %1144
          %1146 = vrot.lane.b32.xlu0 %v1141, 126
          %v1147 = vpop.permute.xlu0 %1146
          %v1150 = vadd.f32 %v1116, %v1145
          %v1151 = vadd.f32 %v1117, %v1147
          %s1152 = sld [smem:[#allocation9 + $0x1f]]
          %s1153 = smul.f32 %s1152, 0.25
          %s1154 = sld [smem:[#allocation9 + $0x50]]
          %v1155 = vstv %s1153
          %v1156 = vmul.f32 %v1104, %v1155
          %v1157 = vmul.f32 %v1105, %v1155
          %v1158 = vstv %s1154
          %v1159 = vmul.f32 %v1106, %v1158
          %v1160 = vmul.f32 %v1107, %v1158
          %v1161 = vadd.f32 %v1156, %v1159
          %v1162 = vadd.f32 %v1157, %v1160
          %1165 = vrot.lane.b32.xlu0 %v1161, 126
          %v1166 = vpop.permute.xlu0 %1165
          %1167 = vrot.lane.b32.xlu0 %v1162, 126
          %v1168 = vpop.permute.xlu0 %1167
          %v1171 = vadd.f32 %v1129, %v1166
          %v1172 = vadd.f32 %v1130, %v1168
          %s1173 = sld [smem:[#allocation9 + $0x20]]
          %s1174 = smul.f32 %s1173, 0.25
          %s1175 = sld [smem:[#allocation9 + $0x51]]
          %v1176 = vstv %s1174
          %v1177 = vmul.f32 %v1104, %v1176
          %v1178 = vmul.f32 %v1105, %v1176
          %v1179 = vstv %s1175
          %v1180 = vmul.f32 %v1106, %v1179
          %v1181 = vmul.f32 %v1107, %v1179
          %v1182 = vadd.f32 %v1177, %v1180
          %v1183 = vadd.f32 %v1178, %v1181
          %1186 = vrot.lane.b32.xlu0 %v1182, 124
          %v1187 = vpop.permute.xlu0 %1186
          %1188 = vrot.lane.b32.xlu0 %v1183, 124
          %v1189 = vpop.permute.xlu0 %1188
          %v1192 = vadd.f32 %v1150, %v1187
          %v1193 = vadd.f32 %v1151, %v1189
          %s1194 = sld [smem:[#allocation9 + $0x21]]
          %s1195 = smul.f32 %s1194, 0.25
          %s1196 = sld [smem:[#allocation9 + $0x52]]
          %v1197 = vstv %s1195
          %v1198 = vmul.f32 %v1104, %v1197
          %v1199 = vmul.f32 %v1105, %v1197
          %v1200 = vstv %s1196
          %v1201 = vmul.f32 %v1106, %v1200
          %v1202 = vmul.f32 %v1107, %v1200
          %v1203 = vadd.f32 %v1198, %v1201
          %v1204 = vadd.f32 %v1199, %v1202
          %1207 = vrot.lane.b32.xlu0 %v1203, 124
          %v1208 = vpop.permute.xlu0 %1207
          %1209 = vrot.lane.b32.xlu0 %v1204, 124
          %v1210 = vpop.permute.xlu0 %1209
          %v1213 = vadd.f32 %v1171, %v1208
          %v1214 = vadd.f32 %v1172, %v1210
          %s1215 = sld [smem:[#allocation9 + $0x22]]
          %s1216 = smul.f32 %s1215, 0.25
          %s1217 = sld [smem:[#allocation9 + $0x53]]
          %v1218 = vstv %s1216
          %v1219 = vmul.f32 %v1104, %v1218
          %v1220 = vmul.f32 %v1105, %v1218
          %v1221 = vstv %s1217
          %v1222 = vmul.f32 %v1106, %v1221
          %v1223 = vmul.f32 %v1107, %v1221
          %v1224 = vadd.f32 %v1219, %v1222
          %v1225 = vadd.f32 %v1220, %v1223
          %1228 = vrot.lane.b32.xlu0 %v1224, 122
          %v1229 = vpop.permute.xlu0 %1228
          %1230 = vrot.lane.b32.xlu0 %v1225, 122
          %v1231 = vpop.permute.xlu0 %1230
          %v1234 = vadd.f32 %v1192, %v1229
          %v1235 = vadd.f32 %v1193, %v1231
          %s1236 = sld [smem:[#allocation9 + $0x23]]
          %s1237 = smul.f32 %s1236, 0.25
          %s1238 = sld [smem:[#allocation9 + $0x54]]
          %v1239 = vld [vmem:[#allocation4 + $0x5] sm:$0xff]
          %v1240 = vld [vmem:[#allocation4 + $0xd] sm:$0xff]
          %v1241 = vld [vmem:[%s295 + $0x5] sm:$0xff]
          %v1242 = vld [vmem:[%s295 + $0xd] sm:$0xff]
          %v1243 = vstv %s1237
          %v1244 = vmul.f32 %v1239, %v1243
          %v1245 = vmul.f32 %v1240, %v1243
          %v1246 = vstv %s1238
          %v1247 = vmul.f32 %v1241, %v1246
          %v1248 = vmul.f32 %v1242, %v1246
          %v1249 = vadd.f32 %v1244, %v1247
          %v1250 = vadd.f32 %v1245, %v1248
          %1253 = vrot.lane.b32.xlu0 %v1249, 1
          %v1254 = vpop.permute.xlu0 %1253
          %1255 = vrot.lane.b32.xlu0 %v1250, 1
          %v1256 = vpop.permute.xlu0 %1255
          %v1259 = vadd.f32 %v1213, %v1254
          %v1260 = vadd.f32 %v1214, %v1256
          %s1261 = sld [smem:[#allocation9 + $0x24]]
          %s1262 = smul.f32 %s1261, 0.25
          %s1263 = sld [smem:[#allocation9 + $0x55]]
          %v1264 = vstv %s1262
          %v1265 = vmul.f32 %v1239, %v1264
          %v1266 = vmul.f32 %v1240, %v1264
          %v1267 = vstv %s1263
          %v1268 = vmul.f32 %v1241, %v1267
          %v1269 = vmul.f32 %v1242, %v1267
          %v1270 = vadd.f32 %v1265, %v1268
          %v1271 = vadd.f32 %v1266, %v1269
          %1274 = vrot.lane.b32.xlu0 %v1270, 127
          %v1275 = vpop.permute.xlu0 %1274
          %1276 = vrot.lane.b32.xlu0 %v1271, 127
          %v1277 = vpop.permute.xlu0 %1276
          %v1280 = vadd.f32 %v1234, %v1275
          %v1281 = vadd.f32 %v1235, %v1277
          %s1282 = sld [smem:[#allocation9 + $0x25]]
          %s1283 = smul.f32 %s1282, 0.25
          %s1284 = sld [smem:[#allocation9 + $0x56]]
          %v1285 = vstv %s1283
          %v1286 = vmul.f32 %v1239, %v1285
          %v1287 = vmul.f32 %v1240, %v1285
          %v1288 = vstv %s1284
          %v1289 = vmul.f32 %v1241, %v1288
          %v1290 = vmul.f32 %v1242, %v1288
          %v1291 = vadd.f32 %v1286, %v1289
          %v1292 = vadd.f32 %v1287, %v1290
          %1295 = vrot.lane.b32.xlu0 %v1291, 127
          %v1296 = vpop.permute.xlu0 %1295
          %1297 = vrot.lane.b32.xlu0 %v1292, 127
          %v1298 = vpop.permute.xlu0 %1297
          %v1301 = vadd.f32 %v1259, %v1296
          %v1302 = vadd.f32 %v1260, %v1298
          %s1303 = sld [smem:[#allocation9 + $0x26]]
          %s1304 = smul.f32 %s1303, 0.25
          %s1305 = sld [smem:[#allocation9 + $0x57]]
          %v1306 = vstv %s1304
          %v1307 = vmul.f32 %v1239, %v1306
          %v1308 = vmul.f32 %v1240, %v1306
          %v1309 = vstv %s1305
          %v1310 = vmul.f32 %v1241, %v1309
          %v1311 = vmul.f32 %v1242, %v1309
          %v1312 = vadd.f32 %v1307, %v1310
          %v1313 = vadd.f32 %v1308, %v1311
          %1316 = vrot.lane.b32.xlu0 %v1312, 125
          %v1317 = vpop.permute.xlu0 %1316
          %1318 = vrot.lane.b32.xlu0 %v1313, 125
          %v1319 = vpop.permute.xlu0 %1318
          %v1322 = vadd.f32 %v1280, %v1317
          %v1323 = vadd.f32 %v1281, %v1319
          %s1324 = sld [smem:[#allocation9 + $0x27]]
          %s1325 = smul.f32 %s1324, 0.25
          %s1326 = sld [smem:[#allocation9 + $0x58]]
          %v1327 = vstv %s1325
          %v1328 = vmul.f32 %v1239, %v1327
          %v1329 = vmul.f32 %v1240, %v1327
          %v1330 = vstv %s1326
          %v1331 = vmul.f32 %v1241, %v1330
          %v1332 = vmul.f32 %v1242, %v1330
          %v1333 = vadd.f32 %v1328, %v1331
          %v1334 = vadd.f32 %v1329, %v1332
          %1337 = vrot.lane.b32.xlu0 %v1333, 125
          %v1338 = vpop.permute.xlu0 %1337
          %1339 = vrot.lane.b32.xlu0 %v1334, 125
          %v1340 = vpop.permute.xlu0 %1339
          %v1343 = vadd.f32 %v1301, %v1338
          %v1344 = vadd.f32 %v1302, %v1340
          %s1345 = sld [smem:[#allocation9 + $0x28]]
          %s1346 = smul.f32 %s1345, 0.25
          %s1347 = sld [smem:[#allocation9 + $0x59]]
          %v1348 = vstv %s1346
          %v1349 = vmul.f32 %v1239, %v1348
          %v1350 = vmul.f32 %v1240, %v1348
          %v1351 = vstv %s1347
          %v1352 = vmul.f32 %v1241, %v1351
          %v1353 = vmul.f32 %v1242, %v1351
          %v1354 = vadd.f32 %v1349, %v1352
          %v1355 = vadd.f32 %v1350, %v1353
          %1358 = vrot.lane.b32.xlu0 %v1354, 123
          %v1359 = vpop.permute.xlu0 %1358
          %1360 = vrot.lane.b32.xlu0 %v1355, 123
          %v1361 = vpop.permute.xlu0 %1360
          %v1364 = vadd.f32 %v1322, %v1359
          %v1365 = vadd.f32 %v1323, %v1361
          %s1366 = sld [smem:[#allocation9 + $0x29]]
          %s1367 = smul.f32 %s1366, 0.25
          %s1368 = sld [smem:[#allocation9 + $0x5a]]
          %v1369 = vstv %s1367
          %v1370 = vmul.f32 %v1239, %v1369
          %v1371 = vmul.f32 %v1240, %v1369
          %v1372 = vstv %s1368
          %v1373 = vmul.f32 %v1241, %v1372
          %v1374 = vmul.f32 %v1242, %v1372
          %v1375 = vadd.f32 %v1370, %v1373
          %v1376 = vadd.f32 %v1371, %v1374
          %1379 = vrot.lane.b32.xlu0 %v1375, 123
          %v1380 = vpop.permute.xlu0 %1379
          %1381 = vrot.lane.b32.xlu0 %v1376, 123
          %v1382 = vpop.permute.xlu0 %1381
          %v1385 = vadd.f32 %v1343, %v1380
          %v1386 = vadd.f32 %v1344, %v1382
          %s1387 = sld [smem:[#allocation9 + $0x2a]]
          %s1388 = smul.f32 %s1387, 0.25
          %s1389 = sld [smem:[#allocation9 + $0x5b]]
          %v1390 = vld [vmem:[#allocation4 + $0x6] sm:$0xff]
          %v1391 = vld [vmem:[#allocation4 + $0xe] sm:$0xff]
          %v1392 = vld [vmem:[%s295 + $0x6] sm:$0xff]
          %v1393 = vld [vmem:[%s295 + $0xe] sm:$0xff]
          %v1394 = vstv %s1388
          %v1395 = vmul.f32 %v1390, %v1394
          %v1396 = vmul.f32 %v1391, %v1394
          %v1397 = vstv %s1389
          %v1398 = vmul.f32 %v1392, %v1397
          %v1399 = vmul.f32 %v1393, %v1397
          %v1400 = vadd.f32 %v1395, %v1398
          %v1401 = vadd.f32 %v1396, %v1399
          %v1402 = vadd.f32 %v1364, %v1400
          %v1403 = vadd.f32 %v1365, %v1401
          %s1404 = sld [smem:[#allocation9 + $0x2b]]
          %s1405 = smul.f32 %s1404, 0.25
          %s1406 = sld [smem:[#allocation9 + $0x5c]]
          %v1407 = vstv %s1405
          %v1408 = vmul.f32 %v1390, %v1407
          %v1409 = vmul.f32 %v1391, %v1407
          %v1410 = vstv %s1406
          %v1411 = vmul.f32 %v1392, %v1410
          %v1412 = vmul.f32 %v1393, %v1410
          %v1413 = vadd.f32 %v1408, %v1411
          %v1414 = vadd.f32 %v1409, %v1412
          %v1415 = vadd.f32 %v1385, %v1413
          %v1416 = vadd.f32 %v1386, %v1414
          %s1417 = sld [smem:[#allocation9 + $0x2c]]
          %s1418 = smul.f32 %s1417, 0.25
          %s1419 = sld [smem:[#allocation9 + $0x5d]]
          %v1420 = vstv %s1418
          %v1421 = vmul.f32 %v1390, %v1420
          %v1422 = vmul.f32 %v1391, %v1420
          %v1423 = vstv %s1419
          %v1424 = vmul.f32 %v1392, %v1423
          %v1425 = vmul.f32 %v1393, %v1423
          %v1426 = vadd.f32 %v1421, %v1424
          %v1427 = vadd.f32 %v1422, %v1425
          %1430 = vrot.lane.b32.xlu0 %v1426, 126
          %v1431 = vpop.permute.xlu0 %1430
          %1432 = vrot.lane.b32.xlu0 %v1427, 126
          %v1433 = vpop.permute.xlu0 %1432
          %v1436 = vadd.f32 %v1402, %v1431
          %v1437 = vadd.f32 %v1403, %v1433
          %s1438 = sld [smem:[#allocation9 + $0x2d]]
          %s1439 = smul.f32 %s1438, 0.25
          %s1440 = sld [smem:[#allocation9 + $0x5e]]
          %v1441 = vstv %s1439
          %v1442 = vmul.f32 %v1390, %v1441
          %v1443 = vmul.f32 %v1391, %v1441
          %v1444 = vstv %s1440
          %v1445 = vmul.f32 %v1392, %v1444
          %v1446 = vmul.f32 %v1393, %v1444
          %v1447 = vadd.f32 %v1442, %v1445
          %v1448 = vadd.f32 %v1443, %v1446
          %1451 = vrot.lane.b32.xlu0 %v1447, 126
          %v1452 = vpop.permute.xlu0 %1451
          %1453 = vrot.lane.b32.xlu0 %v1448, 126
          %v1454 = vpop.permute.xlu0 %1453
          %v1457 = vadd.f32 %v1415, %v1452
          %v1458 = vadd.f32 %v1416, %v1454
          %s1459 = sld [smem:[#allocation9 + $0x2e]]
          %s1460 = smul.f32 %s1459, 0.25
          %s1461 = sld [smem:[#allocation9 + $0x5f]]
          %v1462 = vstv %s1460
          %v1463 = vmul.f32 %v1390, %v1462
          %v1464 = vmul.f32 %v1391, %v1462
          %v1465 = vstv %s1461
          %v1466 = vmul.f32 %v1392, %v1465
          %v1467 = vmul.f32 %v1393, %v1465
          %v1468 = vadd.f32 %v1463, %v1466
          %v1469 = vadd.f32 %v1464, %v1467
          %1472 = vrot.lane.b32.xlu0 %v1468, 124
          %v1473 = vpop.permute.xlu0 %1472
          %1474 = vrot.lane.b32.xlu0 %v1469, 124
          %v1475 = vpop.permute.xlu0 %1474
          %v1478 = vadd.f32 %v1436, %v1473
          %v1479 = vadd.f32 %v1437, %v1475
          %s1480 = sld [smem:[#allocation9 + $0x2f]]
          %s1481 = smul.f32 %s1480, 0.25
          %s1482 = sld [smem:[#allocation9 + $0x60]]
          %v1483 = vstv %s1481
          %v1484 = vmul.f32 %v1390, %v1483
          %v1485 = vmul.f32 %v1391, %v1483
          %v1486 = vstv %s1482
          %v1487 = vmul.f32 %v1392, %v1486
          %v1488 = vmul.f32 %v1393, %v1486
          %v1489 = vadd.f32 %v1484, %v1487
          %v1490 = vadd.f32 %v1485, %v1488
          %1493 = vrot.lane.b32.xlu0 %v1489, 124
          %v1494 = vpop.permute.xlu0 %1493
          %1495 = vrot.lane.b32.xlu0 %v1490, 124
          %v1496 = vpop.permute.xlu0 %1495
          %v1499 = vadd.f32 %v1457, %v1494
          %v1500 = vadd.f32 %v1458, %v1496
          %s1501 = sld [smem:[#allocation9 + $0x30]]
          %s1502 = smul.f32 %s1501, 0.25
          %s1503 = sld [smem:[#allocation9 + $0x61]]
          %v1504 = vstv %s1502
          %v1505 = vmul.f32 %v1390, %v1504
          %v1506 = vmul.f32 %v1391, %v1504
          %v1507 = vstv %s1503
          %v1508 = vmul.f32 %v1392, %v1507
          %v1509 = vmul.f32 %v1393, %v1507
          %v1510 = vadd.f32 %v1505, %v1508
          %v1511 = vadd.f32 %v1506, %v1509
          %1514 = vrot.lane.b32.xlu0 %v1510, 122
          %v1515 = vpop.permute.xlu0 %1514
          %1516 = vrot.lane.b32.xlu0 %v1511, 122
          %v1517 = vpop.permute.xlu0 %1516
          %v1520 = vadd.f32 %v1478, %v1515
          %v1521 = vadd.f32 %v1479, %v1517
          %1524 = vrot.lane.b32.xlu0 %v1499, 127
          %v1525 = vpop.permute.xlu0 %1524
          %1526 = vrot.lane.b32.xlu0 %v1500, 127
          %v1527 = vpop.permute.xlu0 %1526
          %v1530 = vadd.f32 %v1520, %v1525
          %v1531 = vadd.f32 %v1521, %v1527
          %v1532 = vxor.u32 %v1530, 2147483648
          %v1533 = vxor.u32 %v1531, 2147483648
          %v1534 = vmul.f32 %v1532, 1.442695
          %v1535 = vpow.pop %v1534
          %v1536 = vmul.f32 %v1533, 1.442695
          %v1537 = vpow.pop %v1536
          %v1538 = vadd.f32 %v1535, 1.0
          %v1539 = vadd.f32 %v1537, 1.0
          %v1540 = vrcp.pop %v1538
          %v1541 = vmul.f32 %v1538, %v1540
          %v1542 = vsub.f32 1.0, %v1541
          %v1543 = vmul.f32 %v1540, %v1542
          %v1544 = vadd.f32 %v1540, %v1543
          %vm1545 = vweird.f32 %v1538
          %vm1546 = vweird.f32 %v1540
          %vm1547 = vmor %vm1545, %vm1546
          %v1548 = vsel %vm1547, %v1540, %v1544
          %v1549 = vand.u32 2147483647, %v1538
          %vm1550 = vcmp.eq.f32.partialorder %v1549, 8.507059e+37
          %v1551 = vand.u32 %v1538, 2147483648
          %v1552 = vor.u32 1.1754944e-38, %v1551
          %v1553 = vsel %vm1550, %v1552, %v1548
          %v1554 = vmul.f32 1.0, %v1553
          %v1555 = vrcp.pop %v1539
          %v1556 = vmul.f32 %v1539, %v1555
          %v1557 = vsub.f32 1.0, %v1556
          %v1558 = vmul.f32 %v1555, %v1557
          %v1559 = vadd.f32 %v1555, %v1558
          %vm1560 = vweird.f32 %v1539
          %vm1561 = vweird.f32 %v1555
          %vm1562 = vmor %vm1560, %vm1561
          %v1563 = vsel %vm1562, %v1555, %v1559
          %v1564 = vand.u32 2147483647, %v1539
          %vm1565 = vcmp.eq.f32.partialorder %v1564, 8.507059e+37
          %v1566 = vand.u32 %v1539, 2147483648
          %v1567 = vor.u32 1.1754944e-38, %v1566
          %v1568 = vsel %vm1565, %v1567, %v1563
          %v1569 = vmul.f32 1.0, %v1568
          %vm1570 = vcmask 130048
          %1571 = vst.msk [vmem:[%s191] sm:$0xff] %vm1570, %v1554
          %1572 = vst.msk [vmem:[%s191 + $0x8] sm:$0xff] %vm1570, %v1569
        $region48: #{tpu_custom_call.1} parent=27 // pred_fallthru
          _
        %s1573 = sand.u32 %s89, 1
        %s1574 = scalar_lea.sflag [#allocation7], %s1573
        %s1575 = sand.u32 %s89, 1
        %s1576 = smul.addr %s1575, 16
        %s1577 = scalar_lea.vmem [#allocation10], %s1576
        // Predicated region
        $region49: #{tpu_custom_call.1} parent=27 // pred_check
          %p1578 = pneg %p99
        $region50: #{tpu_custom_call.1} parent=27 // pred_check_branch
          %1580 = sbr.rel (%p1578) target = $region52
        $region51: #{tpu_custom_call.1} parent=27 // pred_region
          %1582 = vsyncadd %s1574, 0
          %s1583 = smul.addr %s24, 2
          %s1584 = smul.addr %s1583, 8
          %s1585 = scalar_lea.hbm %s2, %s1584
          %s1586 = sshll.u32 %s1577, 4
          %s1587 = int_to_ptr.vmem [resolvable:$true] %s1586
          %s1588 = sshll.u32 %s1585, 4
          %s1589 = int_to_ptr.hbm [resolvable:$true] %s1588
          %1594 = dma.vmem_to_hbm [thread:$0]  %s1587, 256, %s1589, %s1574, 128, 128, 8
        $region52: #{tpu_custom_call.1} parent=27 // pred_fallthru
          _
      $region28: #{tpu_custom_call.1} parent=5 // pred_fallthru
        _
      %p1595 = scmp.le.s32.totalorder 2, %s15
      // Predicated region
      $region53: #{tpu_custom_call.1} parent=5 // pred_check
        %p1596 = pneg %p1595
      $region54: #{tpu_custom_call.1} parent=5 // pred_check_branch
        %1598 = sbr.rel (%p1596) target = $region56
      $region55: #{tpu_custom_call.1} parent=5 // pred_region
        %s1599 = ssub.s32 %s15, 2
        // Predicated region
        $region57: #{tpu_custom_call.1} parent=55 // pred_check
          %p1600 = pneg %p105
        $region58: #{tpu_custom_call.1} parent=55 // pred_check_branch
          %1602 = sbr.rel (%p1600) target = $region60
        $region59: #{tpu_custom_call.1} parent=55 // pred_region
          %s1603 = sand.u32 %s90, 1
          %s1604 = scalar_lea.sflag [#allocation7], %s1603
          %s1605 = sand.u32 %s90, 1
          %s1606 = smul.addr %s1605, 16
          %s1607 = scalar_lea.vmem [#allocation10], %s1606
          %1609 = dma.done %s1604, 256
        $region60: #{tpu_custom_call.1} parent=55 // pred_fallthru
          _
      $region56: #{tpu_custom_call.1} parent=5 // pred_fallthru
        _
    $region6: #{tpu_custom_call.1} parent=1 // loop_footer
      %s19 = sadd.s32 1, %s15
    $region7: #{tpu_custom_call.1} parent=1 // loop_footer_branch
      %14 = sbr.rel target = $region3
    $region8: #{tpu_custom_call.1} parent=1 // loop_exit
      _
    %1610 = vsyncpa [#allocation6], 1
    %s1611 = scalar_lea.sflag [#allocation6], 1
    %1612 = vsyncpa %s1611, 1
    %1613 = vsyncpa [#allocation7], 1
    %s1614 = scalar_lea.sflag [#allocation7], 1
    %1615 = vsyncpa %s1614, 1
    %1616 = vsyncpa [#allocation8], 1
    %s1617 = scalar_lea.sflag [#allocation8], 1
    %1618 = vsyncpa %s1617, 1

</llo_original>
